<compile_context>
chip_gen: v7x
topology: tpu7x:2x2x1
jax: 0.10.0
libtpu: 0.0.40
codegen_flags: <defaults>
</compile_context>

<pallas_src>
import numpy as np
import jax
import jax.numpy as jnp
from jax.experimental import pallas as pl
from jax.experimental.pallas import tpu as pltpu


_POOLS = (16, 8, 4, 2)   # AvgPool2d kernel/stride of branch1..branch4
_C_IN = 64
_C_OUT = 32              # output channels per branch


def _bilinear_1d(n_out, n_in):
    """1-D bilinear interpolation matrix, matches F.interpolate(align_corners=False)."""
    M = np.zeros((n_out, n_in), dtype=np.float32)
    ratio = n_in / n_out
    for o in range(n_out):
        src = max((o + 0.5) * ratio - 0.5, 0.0)
        i0 = min(int(np.floor(src)), n_in - 1)
        i1 = min(i0 + 1, n_in - 1)
        frac = src - i0
        M[o, i0] += 1.0 - frac
        M[o, i1] += frac
    return M


def _pool_w_matrix(wp, W, K, wp_pad):
    """(wp_pad, W): row q averages columns q*K .. q*K+K-1; padded rows are zero."""
    P = np.zeros((wp_pad, W), dtype=np.float32)
    for q in range(wp):
        P[q, q * K:(q + 1) * K] = 1.0 / K
    return P


def _upsample_w_matrix(W, wp, wp_pad):
    """(W, wp_pad): bilinear upsample along width; padded columns are zero.

    NOTE: padded pooled rows hold relu(bias) junk; the zero columns here are
    what keep that junk out of the output -- preserve this invariant.
    """
    U = np.zeros((W, wp_pad), dtype=np.float32)
    U[:, :wp] = _bilinear_1d(W, wp)
    return U


def _make_kernel(H, W):
    C_all = 4 * _C_OUT

    def kernel(x_ref, wt_ref, bias_ref,
               pw1, ww1, pw2, ww2, pw3, ww3, pw4, ww4, o_ref):
        pw_refs = (pw1, pw2, pw3, pw4)
        ww_refs = (ww1, ww2, ww3, ww4)

        # Fused 1x1 conv for all 4 branches (BN scale folded): lane-dense N=128.
        X = x_ref[0]                                            # (HW, 64) bf16
        Z = jnp.dot(X, wt_ref[...],
                    preferred_element_type=jnp.float32)         # (HW, 128) f32
        Z = Z.reshape(H, W, C_all)                              # leading-dim split

        outs = []
        for br, K in enumerate(_POOLS):                         # static unroll
            hp = H // K
            wp_pad = pw_refs[br].shape[0]

            Zb = Z[:, :, br * _C_OUT:(br + 1) * _C_OUT]         # (H, W, 32)

            # ---- average pool (structured, O(HW*C)) ----
            # height: split leading dim + mean (no dense matrix).
            th = jnp.mean(Zb.reshape(hp, K, W, _C_OUT), axis=1)  # (hp, W, 32)
            # width: tiny (wp_pad, W) averaging matrix, batched matmul.
            PW = pw_refs[br][...]                                # (wp_pad, W) f32
            PWb = jnp.broadcast_to(PW[None], (hp, wp_pad, W))
            pooled = jnp.einsum('bij,bjk->bik', PWb, th,
                                preferred_element_type=jnp.float32)  # (hp, wp_pad, 32)

            # ---- folded BatchNorm bias + ReLU ----
            b = bias_ref[0:1, br * _C_OUT:(br + 1) * _C_OUT]     # (1, 32)
            y = jnp.maximum(pooled + b[None], 0.0)

            # ---- bilinear upsample (separable, align_corners=False) ----
            # width: tiny (W, wp_pad) interpolation matrix, batched matmul.
            WW = ww_refs[br][...]                                # (W, wp_pad)
            WWb = jnp.broadcast_to(WW[None], (hp, W, wp_pad))
            tw = jnp.einsum('bij,bjk->bik', WWb, y,
                            preferred_element_type=jnp.float32)  # (hp, W, 32)
            # height: K static shifted blends along the leading dim.
            if hp > 1:
                t_nxt = jnp.concatenate([tw[1:], tw[-1:]], axis=0)
                t_prv = jnp.concatenate([tw[:1], tw[:-1]], axis=0)
            else:
                t_nxt = tw
                t_prv = tw
            rows = []
            for r in range(K):
                f = (r + 0.5) / K - 0.5
                if f >= 0.0:
                    rows.append((1.0 - f) * tw + f * t_nxt)
                else:
                    rows.append((-f) * t_prv + (1.0 + f) * tw)
            up = jnp.stack(rows, axis=1).reshape(H, W, _C_OUT)   # (H, W, 32)
            outs.append(up)

        # Single unmasked, lane-dense (128-wide) store of all 4 branches.
        o_ref[0] = jnp.concatenate(outs, axis=-1)                # (H, W, 128)

    return kernel


def spp_backbone_forward(x_nchw, conv_w, bn_gamma, bn_beta, bn_mean, bn_var, eps=1e-5):
    """Eval-mode SppBackbone forward.

    x_nchw: (B, 64, H, W) f32; conv_w: (4, 32, 64); bn_*: (4, 32).
    Returns (B, 192, H, W) f32 NCHW with channels [branch1..branch4, x].
    """
    B, C_in, H, W = x_nchw.shape
    assert C_in == _C_IN and H % 16 == 0 and W % 16 == 0
    HW = H * W
    C_all = 4 * _C_OUT

    # Per-branch width pooling / upsampling matrices (tiny, per-branch sized).
    pw_ww = []
    for K in _POOLS:
        wp = W // K
        wp_pad = ((wp + 7) // 8) * 8
        pw_ww.append(jnp.asarray(_pool_w_matrix(wp, W, K, wp_pad)))
        pw_ww.append(jnp.asarray(_upsample_w_matrix(W, wp, wp_pad)))

    # Fold eval-mode BatchNorm into the 1x1 conv and fuse the 4 branches into
    # one (64, 128) weight so the conv matmul is lane-dense.
    scale = bn_gamma / jnp.sqrt(bn_var + eps)                       # (4, 32)
    bias = bn_beta - bn_mean * scale                                # (4, 32)
    wt = jnp.transpose(conv_w, (0, 2, 1)) * scale[:, None, :]       # (4, 64, 32)
    wt_all = jnp.transpose(wt, (1, 0, 2)).reshape(C_in, C_all)      # (64, 128)
    bias_all = bias.reshape(1, C_all)                               # (1, 128)

    # NCHW -> pixel-major (B, HW, Cin); bf16 operands for the MXU (f32 accum).
    x_pix = jnp.transpose(x_nchw, (0, 2, 3, 1)).reshape(B, HW, C_in)
    x_pix = x_pix.astype(jnp.bfloat16)
    wt_bf16 = wt_all.astype(jnp.bfloat16)

    in_specs = [
        pl.BlockSpec((1, HW, C_in), lambda b: (b, 0, 0)),
        pl.BlockSpec((C_in, C_all), lambda b: (0, 0)),
        pl.BlockSpec((1, C_all), lambda b: (0, 0)),
    ]
    for m in pw_ww:
        in_specs.append(pl.BlockSpec(m.shape, lambda b: (0, 0)))

    # Only raise the scoped-VMEM limit when the per-step working set needs it.
    step_bytes = (2 * HW * C_in * 2          # x block (bf16, double-buffered)
                  + 2 * HW * C_all * 4       # output block (f32, double-buffered)
                  + 8 * HW * C_all * 4)      # Z + per-branch temporaries (estimate)
    vmem_limit = None
    if step_bytes > 24 * 2 ** 20:
        vmem_limit = int(min(step_bytes * 1.5, 100 * 2 ** 20))

    out = pl.pallas_call(
        _make_kernel(H, W),
        out_shape=jax.ShapeDtypeStruct((B, H, W, C_all), jnp.float32),
        grid=(B,),
        in_specs=in_specs,
        out_specs=pl.BlockSpec((1, H, W, C_all), lambda b: (b, 0, 0, 0)),
        compiler_params=pltpu.CompilerParams(
            dimension_semantics=("parallel",),
            vmem_limit_bytes=vmem_limit),
    )(x_pix, wt_bf16, bias_all, *pw_ww)

    # Back to NCHW and append x, matching torch.cat([spp1..4, x], dim=1).
    # TODO(synk): if the consumer accepts NHWC, skip this transpose + concat
    #   (two extra HBM passes over the result).
    spp = jnp.transpose(out, (0, 3, 1, 2))                          # (B, 128, H, W)
    return jnp.concatenate([spp, x_nchw], axis=1)                   # (B, 192, H, W)


if __name__ == "__main__":
    key = jax.random.PRNGKey(0)
    k1, k2, k3, k4, k5, k6 = jax.random.split(key, 6)

    B, C_in, H, W = 2, 64, 16, 16
    x = jax.random.normal(k1, (B, C_in, H, W), jnp.float32)

    # Deterministic synthetic parameters (4 branches of Conv2d(64->32, 1x1) + BN(32)).
    conv_w = 0.1 * jax.random.normal(k2, (4, 32, 64), jnp.float32)   # (branch, Cout, Cin)
    bn_gamma = 1.0 + 0.1 * jax.random.normal(k3, (4, 32), jnp.float32)
    bn_beta = 0.1 * jax.random.normal(k4, (4, 32), jnp.float32)
    bn_mean = 0.1 * jax.random.normal(k5, (4, 32), jnp.float32)
    bn_var = jnp.abs(jax.random.normal(k6, (4, 32), jnp.float32)) + 0.5

    out = spp_backbone_forward(x, conv_w, bn_gamma, bn_beta, bn_mean, bn_var)
    out = jax.block_until_ready(out)
    assert out.shape == (B, 4 * 32 + C_in, H, W)
    assert bool(jnp.all(jnp.isfinite(out)))
    print("KERNEL_OK")
</pallas_src>

<mosaic_0001>
module attributes {stable_mosaic.version = 11 : i64} {
  func.func @kernel(%arg0: i32, %arg1: memref<1x256x64xbf16, #tpu.memory_space<vmem>>, %arg2: memref<64x128xbf16, #tpu.memory_space<vmem>>, %arg3: memref<1x128xf32, #tpu.memory_space<vmem>>, %arg4: memref<8x16xf32, #tpu.memory_space<vmem>>, %arg5: memref<16x8xf32, #tpu.memory_space<vmem>>, %arg6: memref<8x16xf32, #tpu.memory_space<vmem>>, %arg7: memref<16x8xf32, #tpu.memory_space<vmem>>, %arg8: memref<8x16xf32, #tpu.memory_space<vmem>>, %arg9: memref<16x8xf32, #tpu.memory_space<vmem>>, %arg10: memref<8x16xf32, #tpu.memory_space<vmem>>, %arg11: memref<16x8xf32, #tpu.memory_space<vmem>>, %arg12: memref<1x16x16x128xf32, #tpu.memory_space<vmem>>) attributes {dimension_semantics = [#tpu.dimension_semantics<parallel>], iteration_bounds = array<i64: 2>, scalar_prefetch = 0 : i64, scratch_operands = 0 : i64, tpu.core_type = #tpu.core_type<tc>, window_params = [{transform_indices = @transform_0, window_bounds = array<i64: 1, 256, 64>}, {pipeline_mode = #tpu.pipeline_mode<synchronous>, transform_indices = @transform_1, window_bounds = array<i64: 64, 128>}, {pipeline_mode = #tpu.pipeline_mode<synchronous>, transform_indices = @transform_2, window_bounds = array<i64: 1, 128>}, {pipeline_mode = #tpu.pipeline_mode<synchronous>, transform_indices = @transform_3, window_bounds = array<i64: 8, 16>}, {pipeline_mode = #tpu.pipeline_mode<synchronous>, transform_indices = @transform_4, window_bounds = array<i64: 16, 8>}, {pipeline_mode = #tpu.pipeline_mode<synchronous>, transform_indices = @transform_5, window_bounds = array<i64: 8, 16>}, {pipeline_mode = #tpu.pipeline_mode<synchronous>, transform_indices = @transform_6, window_bounds = array<i64: 16, 8>}, {pipeline_mode = #tpu.pipeline_mode<synchronous>, transform_indices = @transform_7, window_bounds = array<i64: 8, 16>}, {pipeline_mode = #tpu.pipeline_mode<synchronous>, transform_indices = @transform_8, window_bounds = array<i64: 16, 8>}, {pipeline_mode = #tpu.pipeline_mode<synchronous>, transform_indices = @transform_9, window_bounds = array<i64: 8, 16>}, {pipeline_mode = #tpu.pipeline_mode<synchronous>, transform_indices = @transform_10, window_bounds = array<i64: 16, 8>}, {transform_indices = @transform_11, window_bounds = array<i64: 1, 16, 16, 128>}]} {
    %c0 = arith.constant 0 : index
    %c0_0 = arith.constant 0 : index
    %c0_1 = arith.constant 0 : index
    %0 = vector.load %arg1[%c0, %c0_0, %c0_1] : memref<1x256x64xbf16, #tpu.memory_space<vmem>>, vector<1x256x64xbf16>
    %1 = vector.shape_cast %0 : vector<1x256x64xbf16> to vector<256x64xbf16>
    %c0_2 = arith.constant 0 : index
    %c0_3 = arith.constant 0 : index
    %2 = vector.load %arg2[%c0_2, %c0_3] : memref<64x128xbf16, #tpu.memory_space<vmem>>, vector<64x128xbf16>
    %cst = arith.constant dense<0.000000e+00> : vector<256x128xf32>
    %3 = tpu.matmul %1, %2, %cst {dimension_numbers = #tpu.dot_dimension_numbers<[1], [0], [0], [1], [0, 0, 1, 1], [], []>} : vector<256x64xbf16>, vector<64x128xbf16>, vector<256x128xf32> -> vector<256x128xf32>
    %4 = vector.shape_cast %3 : vector<256x128xf32> to vector<16x16x128xf32>
    %5 = vector.extract_strided_slice %4 {offsets = [0, 0, 0], sizes = [16, 16, 32], strides = [1, 1, 1]} : vector<16x16x128xf32> to vector<16x16x32xf32>
    %6 = vector.shape_cast %5 : vector<16x16x32xf32> to vector<1x16x16x32xf32>
    %cst_4 = arith.constant dense<0.000000e+00> : vector<1x16x32xf32>
    %7 = vector.multi_reduction <add>, %6, %cst_4 [1] : vector<1x16x16x32xf32> to vector<1x16x32xf32>
    %cst_5 = arith.constant 1.600000e+01 : f32
    %8 = vector.broadcast %cst_5 : f32 to vector<1x16x32xf32>
    %9 = arith.divf %7, %8 : vector<1x16x32xf32>
    %c0_6 = arith.constant 0 : index
    %c0_7 = arith.constant 0 : index
    %10 = vector.load %arg4[%c0_6, %c0_7] : memref<8x16xf32, #tpu.memory_space<vmem>>, vector<8x16xf32>
    %11 = vector.shape_cast %10 : vector<8x16xf32> to vector<1x8x16xf32>
    "tpu.trace_start"() <{level = 10 : i32, message = "bij,bjk->bik"}> : () -> ()
    %cst_8 = arith.constant dense<0.000000e+00> : vector<1x8x32xf32>
    %12 = tpu.matmul %11, %9, %cst_8 {dimension_numbers = #tpu.dot_dimension_numbers<[2], [1], [1], [2], [0, 0, 0, 1, 1, 2], [0], [0]>} : vector<1x8x16xf32>, vector<1x16x32xf32>, vector<1x8x32xf32> -> vector<1x8x32xf32>
    "tpu.trace_stop"() : () -> ()
    %c0_9 = arith.constant 0 : index
    %c0_10 = arith.constant 0 : index
    %13 = vector.load %arg3[%c0_9, %c0_10] : memref<1x128xf32, #tpu.memory_space<vmem>>, vector<1x32xf32>
    %14 = vector.shape_cast %13 : vector<1x32xf32> to vector<1x1x32xf32>
    %15 = vector.broadcast %14 : vector<1x1x32xf32> to vector<1x8x32xf32>
    %16 = arith.addf %12, %15 : vector<1x8x32xf32>
    %cst_11 = arith.constant 0.000000e+00 : f32
    %17 = vector.broadcast %cst_11 : f32 to vector<1x8x32xf32>
    %18 = arith.maximumf %16, %17 : vector<1x8x32xf32>
    %c0_12 = arith.constant 0 : index
    %c0_13 = arith.constant 0 : index
    %19 = vector.load %arg5[%c0_12, %c0_13] : memref<16x8xf32, #tpu.memory_space<vmem>>, vector<16x8xf32>
    %20 = vector.shape_cast %19 : vector<16x8xf32> to vector<1x16x8xf32>
    "tpu.trace_start"() <{level = 10 : i32, message = "bij,bjk->bik"}> : () -> ()
    %cst_14 = arith.constant dense<0.000000e+00> : vector<1x16x32xf32>
    %21 = tpu.matmul %20, %18, %cst_14 {dimension_numbers = #tpu.dot_dimension_numbers<[2], [1], [1], [2], [0, 0, 0, 1, 1, 2], [0], [0]>} : vector<1x16x8xf32>, vector<1x8x32xf32>, vector<1x16x32xf32> -> vector<1x16x32xf32>
    "tpu.trace_stop"() : () -> ()
    %cst_15 = arith.constant 4.687500e-01 : f32
    %22 = vector.broadcast %cst_15 : f32 to vector<1x16x32xf32>
    %23 = arith.mulf %22, %21 : vector<1x16x32xf32>
    %cst_16 = arith.constant 5.312500e-01 : f32
    %24 = vector.broadcast %cst_16 : f32 to vector<1x16x32xf32>
    %25 = arith.mulf %24, %21 : vector<1x16x32xf32>
    %26 = arith.addf %23, %25 : vector<1x16x32xf32>
    %cst_17 = arith.constant 4.062500e-01 : f32
    %27 = vector.broadcast %cst_17 : f32 to vector<1x16x32xf32>
    %28 = arith.mulf %27, %21 : vector<1x16x32xf32>
    %cst_18 = arith.constant 5.937500e-01 : f32
    %29 = vector.broadcast %cst_18 : f32 to vector<1x16x32xf32>
    %30 = arith.mulf %29, %21 : vector<1x16x32xf32>
    %31 = arith.addf %28, %30 : vector<1x16x32xf32>
    %cst_19 = arith.constant 3.437500e-01 : f32
    %32 = vector.broadcast %cst_19 : f32 to vector<1x16x32xf32>
    %33 = arith.mulf %32, %21 : vector<1x16x32xf32>
    %cst_20 = arith.constant 6.562500e-01 : f32
    %34 = vector.broadcast %cst_20 : f32 to vector<1x16x32xf32>
    %35 = arith.mulf %34, %21 : vector<1x16x32xf32>
    %36 = arith.addf %33, %35 : vector<1x16x32xf32>
    %cst_21 = arith.constant 2.812500e-01 : f32
    %37 = vector.broadcast %cst_21 : f32 to vector<1x16x32xf32>
    %38 = arith.mulf %37, %21 : vector<1x16x32xf32>
    %cst_22 = arith.constant 7.187500e-01 : f32
    %39 = vector.broadcast %cst_22 : f32 to vector<1x16x32xf32>
    %40 = arith.mulf %39, %21 : vector<1x16x32xf32>
    %41 = arith.addf %38, %40 : vector<1x16x32xf32>
    %cst_23 = arith.constant 2.187500e-01 : f32
    %42 = vector.broadcast %cst_23 : f32 to vector<1x16x32xf32>
    %43 = arith.mulf %42, %21 : vector<1x16x32xf32>
    %cst_24 = arith.constant 7.812500e-01 : f32
    %44 = vector.broadcast %cst_24 : f32 to vector<1x16x32xf32>
    %45 = arith.mulf %44, %21 : vector<1x16x32xf32>
    %46 = arith.addf %43, %45 : vector<1x16x32xf32>
    %cst_25 = arith.constant 1.562500e-01 : f32
    %47 = vector.broadcast %cst_25 : f32 to vector<1x16x32xf32>
    %48 = arith.mulf %47, %21 : vector<1x16x32xf32>
    %cst_26 = arith.constant 8.437500e-01 : f32
    %49 = vector.broadcast %cst_26 : f32 to vector<1x16x32xf32>
    %50 = arith.mulf %49, %21 : vector<1x16x32xf32>
    %51 = arith.addf %48, %50 : vector<1x16x32xf32>
    %cst_27 = arith.constant 9.375000e-02 : f32
    %52 = vector.broadcast %cst_27 : f32 to vector<1x16x32xf32>
    %53 = arith.mulf %52, %21 : vector<1x16x32xf32>
    %cst_28 = arith.constant 9.062500e-01 : f32
    %54 = vector.broadcast %cst_28 : f32 to vector<1x16x32xf32>
    %55 = arith.mulf %54, %21 : vector<1x16x32xf32>
    %56 = arith.addf %53, %55 : vector<1x16x32xf32>
    %cst_29 = arith.constant 3.125000e-02 : f32
    %57 = vector.broadcast %cst_29 : f32 to vector<1x16x32xf32>
    %58 = arith.mulf %57, %21 : vector<1x16x32xf32>
    %cst_30 = arith.constant 9.687500e-01 : f32
    %59 = vector.broadcast %cst_30 : f32 to vector<1x16x32xf32>
    %60 = arith.mulf %59, %21 : vector<1x16x32xf32>
    %61 = arith.addf %58, %60 : vector<1x16x32xf32>
    %cst_31 = arith.constant 9.687500e-01 : f32
    %62 = vector.broadcast %cst_31 : f32 to vector<1x16x32xf32>
    %63 = arith.mulf %62, %21 : vector<1x16x32xf32>
    %cst_32 = arith.constant 3.125000e-02 : f32
    %64 = vector.broadcast %cst_32 : f32 to vector<1x16x32xf32>
    %65 = arith.mulf %64, %21 : vector<1x16x32xf32>
    %66 = arith.addf %63, %65 : vector<1x16x32xf32>
    %cst_33 = arith.constant 9.062500e-01 : f32
    %67 = vector.broadcast %cst_33 : f32 to vector<1x16x32xf32>
    %68 = arith.mulf %67, %21 : vector<1x16x32xf32>
    %cst_34 = arith.constant 9.375000e-02 : f32
    %69 = vector.broadcast %cst_34 : f32 to vector<1x16x32xf32>
    %70 = arith.mulf %69, %21 : vector<1x16x32xf32>
    %71 = arith.addf %68, %70 : vector<1x16x32xf32>
    %cst_35 = arith.constant 8.437500e-01 : f32
    %72 = vector.broadcast %cst_35 : f32 to vector<1x16x32xf32>
    %73 = arith.mulf %72, %21 : vector<1x16x32xf32>
    %cst_36 = arith.constant 1.562500e-01 : f32
    %74 = vector.broadcast %cst_36 : f32 to vector<1x16x32xf32>
    %75 = arith.mulf %74, %21 : vector<1x16x32xf32>
    %76 = arith.addf %73, %75 : vector<1x16x32xf32>
    %cst_37 = arith.constant 7.812500e-01 : f32
    %77 = vector.broadcast %cst_37 : f32 to vector<1x16x32xf32>
    %78 = arith.mulf %77, %21 : vector<1x16x32xf32>
    %cst_38 = arith.constant 2.187500e-01 : f32
    %79 = vector.broadcast %cst_38 : f32 to vector<1x16x32xf32>
    %80 = arith.mulf %79, %21 : vector<1x16x32xf32>
    %81 = arith.addf %78, %80 : vector<1x16x32xf32>
    %cst_39 = arith.constant 7.187500e-01 : f32
    %82 = vector.broadcast %cst_39 : f32 to vector<1x16x32xf32>
    %83 = arith.mulf %82, %21 : vector<1x16x32xf32>
    %cst_40 = arith.constant 2.812500e-01 : f32
    %84 = vector.broadcast %cst_40 : f32 to vector<1x16x32xf32>
    %85 = arith.mulf %84, %21 : vector<1x16x32xf32>
    %86 = arith.addf %83, %85 : vector<1x16x32xf32>
    %cst_41 = arith.constant 6.562500e-01 : f32
    %87 = vector.broadcast %cst_41 : f32 to vector<1x16x32xf32>
    %88 = arith.mulf %87, %21 : vector<1x16x32xf32>
    %cst_42 = arith.constant 3.437500e-01 : f32
    %89 = vector.broadcast %cst_42 : f32 to vector<1x16x32xf32>
    %90 = arith.mulf %89, %21 : vector<1x16x32xf32>
    %91 = arith.addf %88, %90 : vector<1x16x32xf32>
    %cst_43 = arith.constant 5.937500e-01 : f32
    %92 = vector.broadcast %cst_43 : f32 to vector<1x16x32xf32>
    %93 = arith.mulf %92, %21 : vector<1x16x32xf32>
    %cst_44 = arith.constant 4.062500e-01 : f32
    %94 = vector.broadcast %cst_44 : f32 to vector<1x16x32xf32>
    %95 = arith.mulf %94, %21 : vector<1x16x32xf32>
    %96 = arith.addf %93, %95 : vector<1x16x32xf32>
    %cst_45 = arith.constant 5.312500e-01 : f32
    %97 = vector.broadcast %cst_45 : f32 to vector<1x16x32xf32>
    %98 = arith.mulf %97, %21 : vector<1x16x32xf32>
    %cst_46 = arith.constant 4.687500e-01 : f32
    %99 = vector.broadcast %cst_46 : f32 to vector<1x16x32xf32>
    %100 = arith.mulf %99, %21 : vector<1x16x32xf32>
    %101 = arith.addf %98, %100 : vector<1x16x32xf32>
    %102 = vector.shape_cast %26 : vector<1x16x32xf32> to vector<1x1x16x32xf32>
    %103 = vector.shape_cast %31 : vector<1x16x32xf32> to vector<1x1x16x32xf32>
    %104 = vector.shape_cast %36 : vector<1x16x32xf32> to vector<1x1x16x32xf32>
    %105 = vector.shape_cast %41 : vector<1x16x32xf32> to vector<1x1x16x32xf32>
    %106 = vector.shape_cast %46 : vector<1x16x32xf32> to vector<1x1x16x32xf32>
    %107 = vector.shape_cast %51 : vector<1x16x32xf32> to vector<1x1x16x32xf32>
    %108 = vector.shape_cast %56 : vector<1x16x32xf32> to vector<1x1x16x32xf32>
    %109 = vector.shape_cast %61 : vector<1x16x32xf32> to vector<1x1x16x32xf32>
    %110 = vector.shape_cast %66 : vector<1x16x32xf32> to vector<1x1x16x32xf32>
    %111 = vector.shape_cast %71 : vector<1x16x32xf32> to vector<1x1x16x32xf32>
    %112 = vector.shape_cast %76 : vector<1x16x32xf32> to vector<1x1x16x32xf32>
    %113 = vector.shape_cast %81 : vector<1x16x32xf32> to vector<1x1x16x32xf32>
    %114 = vector.shape_cast %86 : vector<1x16x32xf32> to vector<1x1x16x32xf32>
    %115 = vector.shape_cast %91 : vector<1x16x32xf32> to vector<1x1x16x32xf32>
    %116 = vector.shape_cast %96 : vector<1x16x32xf32> to vector<1x1x16x32xf32>
    %117 = vector.shape_cast %101 : vector<1x16x32xf32> to vector<1x1x16x32xf32>
    %118 = tpu.concatenate %102, %103, %104, %105, %106, %107, %108, %109, %110, %111, %112, %113, %114, %115, %116, %117 in 1 : vector<1x1x16x32xf32>, vector<1x1x16x32xf32>, vector<1x1x16x32xf32>, vector<1x1x16x32xf32>, vector<1x1x16x32xf32>, vector<1x1x16x32xf32>, vector<1x1x16x32xf32>, vector<1x1x16x32xf32>, vector<1x1x16x32xf32>, vector<1x1x16x32xf32>, vector<1x1x16x32xf32>, vector<1x1x16x32xf32>, vector<1x1x16x32xf32>, vector<1x1x16x32xf32>, vector<1x1x16x32xf32>, vector<1x1x16x32xf32> -> vector<1x16x16x32xf32>
    %119 = vector.shape_cast %118 : vector<1x16x16x32xf32> to vector<16x16x32xf32>
    %120 = vector.extract_strided_slice %4 {offsets = [0, 0, 32], sizes = [16, 16, 32], strides = [1, 1, 1]} : vector<16x16x128xf32> to vector<16x16x32xf32>
    %121 = vector.shape_cast %120 : vector<16x16x32xf32> to vector<2x8x16x32xf32>
    %cst_47 = arith.constant dense<0.000000e+00> : vector<2x16x32xf32>
    %122 = vector.multi_reduction <add>, %121, %cst_47 [1] : vector<2x8x16x32xf32> to vector<2x16x32xf32>
    %cst_48 = arith.constant 8.000000e+00 : f32
    %123 = vector.broadcast %cst_48 : f32 to vector<2x16x32xf32>
    %124 = arith.divf %122, %123 : vector<2x16x32xf32>
    %c0_49 = arith.constant 0 : index
    %c0_50 = arith.constant 0 : index
    %125 = vector.load %arg6[%c0_49, %c0_50] : memref<8x16xf32, #tpu.memory_space<vmem>>, vector<8x16xf32>
    %126 = vector.shape_cast %125 : vector<8x16xf32> to vector<1x8x16xf32>
    %127 = vector.shape_cast %126 : vector<1x8x16xf32> to vector<1x8x16xf32>
    %128 = vector.broadcast %127 : vector<1x8x16xf32> to vector<2x8x16xf32>
    "tpu.trace_start"() <{level = 10 : i32, message = "bij,bjk->bik"}> : () -> ()
    %cst_51 = arith.constant dense<0.000000e+00> : vector<2x8x32xf32>
    %129 = tpu.matmul %128, %124, %cst_51 {dimension_numbers = #tpu.dot_dimension_numbers<[2], [1], [1], [2], [0, 0, 0, 1, 1, 2], [0], [0]>} : vector<2x8x16xf32>, vector<2x16x32xf32>, vector<2x8x32xf32> -> vector<2x8x32xf32>
    "tpu.trace_stop"() : () -> ()
    %c0_52 = arith.constant 0 : index
    %c32 = arith.constant 32 : index
    %130 = vector.load %arg3[%c0_52, %c32] : memref<1x128xf32, #tpu.memory_space<vmem>>, vector<1x32xf32>
    %131 = vector.shape_cast %130 : vector<1x32xf32> to vector<1x1x32xf32>
    %132 = vector.broadcast %131 : vector<1x1x32xf32> to vector<2x8x32xf32>
    %133 = arith.addf %129, %132 : vector<2x8x32xf32>
    %cst_53 = arith.constant 0.000000e+00 : f32
    %134 = vector.broadcast %cst_53 : f32 to vector<2x8x32xf32>
    %135 = arith.maximumf %133, %134 : vector<2x8x32xf32>
    %c0_54 = arith.constant 0 : index
    %c0_55 = arith.constant 0 : index
    %136 = vector.load %arg7[%c0_54, %c0_55] : memref<16x8xf32, #tpu.memory_space<vmem>>, vector<16x8xf32>
    %137 = vector.shape_cast %136 : vector<16x8xf32> to vector<1x16x8xf32>
    %138 = vector.shape_cast %137 : vector<1x16x8xf32> to vector<1x16x8xf32>
    %139 = vector.broadcast %138 : vector<1x16x8xf32> to vector<2x16x8xf32>
    "tpu.trace_start"() <{level = 10 : i32, message = "bij,bjk->bik"}> : () -> ()
    %cst_56 = arith.constant dense<0.000000e+00> : vector<2x16x32xf32>
    %140 = tpu.matmul %139, %135, %cst_56 {dimension_numbers = #tpu.dot_dimension_numbers<[2], [1], [1], [2], [0, 0, 0, 1, 1, 2], [0], [0]>} : vector<2x16x8xf32>, vector<2x8x32xf32>, vector<2x16x32xf32> -> vector<2x16x32xf32>
    "tpu.trace_stop"() : () -> ()
    %141 = vector.extract_strided_slice %140 {offsets = [1, 0, 0], sizes = [1, 16, 32], strides = [1, 1, 1]} : vector<2x16x32xf32> to vector<1x16x32xf32>
    %142 = vector.extract_strided_slice %140 {offsets = [1, 0, 0], sizes = [1, 16, 32], strides = [1, 1, 1]} : vector<2x16x32xf32> to vector<1x16x32xf32>
    %143 = tpu.concatenate %141, %142 in 0 : vector<1x16x32xf32>, vector<1x16x32xf32> -> vector<2x16x32xf32>
    %144 = vector.extract_strided_slice %140 {offsets = [0, 0, 0], sizes = [1, 16, 32], strides = [1, 1, 1]} : vector<2x16x32xf32> to vector<1x16x32xf32>
    %145 = vector.extract_strided_slice %140 {offsets = [0, 0, 0], sizes = [1, 16, 32], strides = [1, 1, 1]} : vector<2x16x32xf32> to vector<1x16x32xf32>
    %146 = tpu.concatenate %144, %145 in 0 : vector<1x16x32xf32>, vector<1x16x32xf32> -> vector<2x16x32xf32>
    %cst_57 = arith.constant 4.375000e-01 : f32
    %147 = vector.broadcast %cst_57 : f32 to vector<2x16x32xf32>
    %148 = arith.mulf %147, %146 : vector<2x16x32xf32>
    %cst_58 = arith.constant 5.625000e-01 : f32
    %149 = vector.broadcast %cst_58 : f32 to vector<2x16x32xf32>
    %150 = arith.mulf %149, %140 : vector<2x16x32xf32>
    %151 = arith.addf %148, %150 : vector<2x16x32xf32>
    %cst_59 = arith.constant 3.125000e-01 : f32
    %152 = vector.broadcast %cst_59 : f32 to vector<2x16x32xf32>
    %153 = arith.mulf %152, %146 : vector<2x16x32xf32>
    %cst_60 = arith.constant 6.875000e-01 : f32
    %154 = vector.broadcast %cst_60 : f32 to vector<2x16x32xf32>
    %155 = arith.mulf %154, %140 : vector<2x16x32xf32>
    %156 = arith.addf %153, %155 : vector<2x16x32xf32>
    %cst_61 = arith.constant 1.875000e-01 : f32
    %157 = vector.broadcast %cst_61 : f32 to vector<2x16x32xf32>
    %158 = arith.mulf %157, %146 : vector<2x16x32xf32>
    %cst_62 = arith.constant 8.125000e-01 : f32
    %159 = vector.broadcast %cst_62 : f32 to vector<2x16x32xf32>
    %160 = arith.mulf %159, %140 : vector<2x16x32xf32>
    %161 = arith.addf %158, %160 : vector<2x16x32xf32>
    %cst_63 = arith.constant 6.250000e-02 : f32
    %162 = vector.broadcast %cst_63 : f32 to vector<2x16x32xf32>
    %163 = arith.mulf %162, %146 : vector<2x16x32xf32>
    %cst_64 = arith.constant 9.375000e-01 : f32
    %164 = vector.broadcast %cst_64 : f32 to vector<2x16x32xf32>
    %165 = arith.mulf %164, %140 : vector<2x16x32xf32>
    %166 = arith.addf %163, %165 : vector<2x16x32xf32>
    %cst_65 = arith.constant 9.375000e-01 : f32
    %167 = vector.broadcast %cst_65 : f32 to vector<2x16x32xf32>
    %168 = arith.mulf %167, %140 : vector<2x16x32xf32>
    %cst_66 = arith.constant 6.250000e-02 : f32
    %169 = vector.broadcast %cst_66 : f32 to vector<2x16x32xf32>
    %170 = arith.mulf %169, %143 : vector<2x16x32xf32>
    %171 = arith.addf %168, %170 : vector<2x16x32xf32>
    %cst_67 = arith.constant 8.125000e-01 : f32
    %172 = vector.broadcast %cst_67 : f32 to vector<2x16x32xf32>
    %173 = arith.mulf %172, %140 : vector<2x16x32xf32>
    %cst_68 = arith.constant 1.875000e-01 : f32
    %174 = vector.broadcast %cst_68 : f32 to vector<2x16x32xf32>
    %175 = arith.mulf %174, %143 : vector<2x16x32xf32>
    %176 = arith.addf %173, %175 : vector<2x16x32xf32>
    %cst_69 = arith.constant 6.875000e-01 : f32
    %177 = vector.broadcast %cst_69 : f32 to vector<2x16x32xf32>
    %178 = arith.mulf %177, %140 : vector<2x16x32xf32>
    %cst_70 = arith.constant 3.125000e-01 : f32
    %179 = vector.broadcast %cst_70 : f32 to vector<2x16x32xf32>
    %180 = arith.mulf %179, %143 : vector<2x16x32xf32>
    %181 = arith.addf %178, %180 : vector<2x16x32xf32>
    %cst_71 = arith.constant 5.625000e-01 : f32
    %182 = vector.broadcast %cst_71 : f32 to vector<2x16x32xf32>
    %183 = arith.mulf %182, %140 : vector<2x16x32xf32>
    %cst_72 = arith.constant 4.375000e-01 : f32
    %184 = vector.broadcast %cst_72 : f32 to vector<2x16x32xf32>
    %185 = arith.mulf %184, %143 : vector<2x16x32xf32>
    %186 = arith.addf %183, %185 : vector<2x16x32xf32>
    %187 = vector.shape_cast %151 : vector<2x16x32xf32> to vector<2x1x16x32xf32>
    %188 = vector.shape_cast %156 : vector<2x16x32xf32> to vector<2x1x16x32xf32>
    %189 = vector.shape_cast %161 : vector<2x16x32xf32> to vector<2x1x16x32xf32>
    %190 = vector.shape_cast %166 : vector<2x16x32xf32> to vector<2x1x16x32xf32>
    %191 = vector.shape_cast %171 : vector<2x16x32xf32> to vector<2x1x16x32xf32>
    %192 = vector.shape_cast %176 : vector<2x16x32xf32> to vector<2x1x16x32xf32>
    %193 = vector.shape_cast %181 : vector<2x16x32xf32> to vector<2x1x16x32xf32>
    %194 = vector.shape_cast %186 : vector<2x16x32xf32> to vector<2x1x16x32xf32>
    %195 = tpu.concatenate %187, %188, %189, %190, %191, %192, %193, %194 in 1 : vector<2x1x16x32xf32>, vector<2x1x16x32xf32>, vector<2x1x16x32xf32>, vector<2x1x16x32xf32>, vector<2x1x16x32xf32>, vector<2x1x16x32xf32>, vector<2x1x16x32xf32>, vector<2x1x16x32xf32> -> vector<2x8x16x32xf32>
    %196 = vector.shape_cast %195 : vector<2x8x16x32xf32> to vector<16x16x32xf32>
    %197 = vector.extract_strided_slice %4 {offsets = [0, 0, 64], sizes = [16, 16, 32], strides = [1, 1, 1]} : vector<16x16x128xf32> to vector<16x16x32xf32>
    %198 = vector.shape_cast %197 : vector<16x16x32xf32> to vector<4x4x16x32xf32>
    %cst_73 = arith.constant dense<0.000000e+00> : vector<4x16x32xf32>
    %199 = vector.multi_reduction <add>, %198, %cst_73 [1] : vector<4x4x16x32xf32> to vector<4x16x32xf32>
    %cst_74 = arith.constant 4.000000e+00 : f32
    %200 = vector.broadcast %cst_74 : f32 to vector<4x16x32xf32>
    %201 = arith.divf %199, %200 : vector<4x16x32xf32>
    %c0_75 = arith.constant 0 : index
    %c0_76 = arith.constant 0 : index
    %202 = vector.load %arg8[%c0_75, %c0_76] : memref<8x16xf32, #tpu.memory_space<vmem>>, vector<8x16xf32>
    %203 = vector.shape_cast %202 : vector<8x16xf32> to vector<1x8x16xf32>
    %204 = vector.shape_cast %203 : vector<1x8x16xf32> to vector<1x8x16xf32>
    %205 = vector.broadcast %204 : vector<1x8x16xf32> to vector<4x8x16xf32>
    "tpu.trace_start"() <{level = 10 : i32, message = "bij,bjk->bik"}> : () -> ()
    %cst_77 = arith.constant dense<0.000000e+00> : vector<4x8x32xf32>
    %206 = tpu.matmul %205, %201, %cst_77 {dimension_numbers = #tpu.dot_dimension_numbers<[2], [1], [1], [2], [0, 0, 0, 1, 1, 2], [0], [0]>} : vector<4x8x16xf32>, vector<4x16x32xf32>, vector<4x8x32xf32> -> vector<4x8x32xf32>
    "tpu.trace_stop"() : () -> ()
    %c0_78 = arith.constant 0 : index
    %c64 = arith.constant 64 : index
    %207 = vector.load %arg3[%c0_78, %c64] : memref<1x128xf32, #tpu.memory_space<vmem>>, vector<1x32xf32>
    %208 = vector.shape_cast %207 : vector<1x32xf32> to vector<1x1x32xf32>
    %209 = vector.broadcast %208 : vector<1x1x32xf32> to vector<4x8x32xf32>
    %210 = arith.addf %206, %209 : vector<4x8x32xf32>
    %cst_79 = arith.constant 0.000000e+00 : f32
    %211 = vector.broadcast %cst_79 : f32 to vector<4x8x32xf32>
    %212 = arith.maximumf %210, %211 : vector<4x8x32xf32>
    %c0_80 = arith.constant 0 : index
    %c0_81 = arith.constant 0 : index
    %213 = vector.load %arg9[%c0_80, %c0_81] : memref<16x8xf32, #tpu.memory_space<vmem>>, vector<16x8xf32>
    %214 = vector.shape_cast %213 : vector<16x8xf32> to vector<1x16x8xf32>
    %215 = vector.shape_cast %214 : vector<1x16x8xf32> to vector<1x16x8xf32>
    %216 = vector.broadcast %215 : vector<1x16x8xf32> to vector<4x16x8xf32>
    "tpu.trace_start"() <{level = 10 : i32, message = "bij,bjk->bik"}> : () -> ()
    %cst_82 = arith.constant dense<0.000000e+00> : vector<4x16x32xf32>
    %217 = tpu.matmul %216, %212, %cst_82 {dimension_numbers = #tpu.dot_dimension_numbers<[2], [1], [1], [2], [0, 0, 0, 1, 1, 2], [0], [0]>} : vector<4x16x8xf32>, vector<4x8x32xf32>, vector<4x16x32xf32> -> vector<4x16x32xf32>
    "tpu.trace_stop"() : () -> ()
    %218 = vector.extract_strided_slice %217 {offsets = [1, 0, 0], sizes = [3, 16, 32], strides = [1, 1, 1]} : vector<4x16x32xf32> to vector<3x16x32xf32>
    %219 = vector.extract_strided_slice %217 {offsets = [3, 0, 0], sizes = [1, 16, 32], strides = [1, 1, 1]} : vector<4x16x32xf32> to vector<1x16x32xf32>
    %220 = tpu.concatenate %218, %219 in 0 : vector<3x16x32xf32>, vector<1x16x32xf32> -> vector<4x16x32xf32>
    %221 = vector.extract_strided_slice %217 {offsets = [0, 0, 0], sizes = [1, 16, 32], strides = [1, 1, 1]} : vector<4x16x32xf32> to vector<1x16x32xf32>
    %222 = vector.extract_strided_slice %217 {offsets = [0, 0, 0], sizes = [3, 16, 32], strides = [1, 1, 1]} : vector<4x16x32xf32> to vector<3x16x32xf32>
    %223 = tpu.concatenate %221, %222 in 0 : vector<1x16x32xf32>, vector<3x16x32xf32> -> vector<4x16x32xf32>
    %cst_83 = arith.constant 3.750000e-01 : f32
    %224 = vector.broadcast %cst_83 : f32 to vector<4x16x32xf32>
    %225 = arith.mulf %224, %223 : vector<4x16x32xf32>
    %cst_84 = arith.constant 6.250000e-01 : f32
    %226 = vector.broadcast %cst_84 : f32 to vector<4x16x32xf32>
    %227 = arith.mulf %226, %217 : vector<4x16x32xf32>
    %228 = arith.addf %225, %227 : vector<4x16x32xf32>
    %cst_85 = arith.constant 1.250000e-01 : f32
    %229 = vector.broadcast %cst_85 : f32 to vector<4x16x32xf32>
    %230 = arith.mulf %229, %223 : vector<4x16x32xf32>
    %cst_86 = arith.constant 8.750000e-01 : f32
    %231 = vector.broadcast %cst_86 : f32 to vector<4x16x32xf32>
    %232 = arith.mulf %231, %217 : vector<4x16x32xf32>
    %233 = arith.addf %230, %232 : vector<4x16x32xf32>
    %cst_87 = arith.constant 8.750000e-01 : f32
    %234 = vector.broadcast %cst_87 : f32 to vector<4x16x32xf32>
    %235 = arith.mulf %234, %217 : vector<4x16x32xf32>
    %cst_88 = arith.constant 1.250000e-01 : f32
    %236 = vector.broadcast %cst_88 : f32 to vector<4x16x32xf32>
    %237 = arith.mulf %236, %220 : vector<4x16x32xf32>
    %238 = arith.addf %235, %237 : vector<4x16x32xf32>
    %cst_89 = arith.constant 6.250000e-01 : f32
    %239 = vector.broadcast %cst_89 : f32 to vector<4x16x32xf32>
    %240 = arith.mulf %239, %217 : vector<4x16x32xf32>
    %cst_90 = arith.constant 3.750000e-01 : f32
    %241 = vector.broadcast %cst_90 : f32 to vector<4x16x32xf32>
    %242 = arith.mulf %241, %220 : vector<4x16x32xf32>
    %243 = arith.addf %240, %242 : vector<4x16x32xf32>
    %244 = vector.shape_cast %228 : vector<4x16x32xf32> to vector<4x1x16x32xf32>
    %245 = vector.shape_cast %233 : vector<4x16x32xf32> to vector<4x1x16x32xf32>
    %246 = vector.shape_cast %238 : vector<4x16x32xf32> to vector<4x1x16x32xf32>
    %247 = vector.shape_cast %243 : vector<4x16x32xf32> to vector<4x1x16x32xf32>
    %248 = tpu.concatenate %244, %245, %246, %247 in 1 : vector<4x1x16x32xf32>, vector<4x1x16x32xf32>, vector<4x1x16x32xf32>, vector<4x1x16x32xf32> -> vector<4x4x16x32xf32>
    %249 = vector.shape_cast %248 : vector<4x4x16x32xf32> to vector<16x16x32xf32>
    %250 = vector.extract_strided_slice %4 {offsets = [0, 0, 96], sizes = [16, 16, 32], strides = [1, 1, 1]} : vector<16x16x128xf32> to vector<16x16x32xf32>
    %251 = vector.shape_cast %250 : vector<16x16x32xf32> to vector<8x2x16x32xf32>
    %cst_91 = arith.constant dense<0.000000e+00> : vector<8x16x32xf32>
    %252 = vector.multi_reduction <add>, %251, %cst_91 [1] : vector<8x2x16x32xf32> to vector<8x16x32xf32>
    %cst_92 = arith.constant 2.000000e+00 : f32
    %253 = vector.broadcast %cst_92 : f32 to vector<8x16x32xf32>
    %254 = arith.divf %252, %253 : vector<8x16x32xf32>
    %c0_93 = arith.constant 0 : index
    %c0_94 = arith.constant 0 : index
    %255 = vector.load %arg10[%c0_93, %c0_94] : memref<8x16xf32, #tpu.memory_space<vmem>>, vector<8x16xf32>
    %256 = vector.shape_cast %255 : vector<8x16xf32> to vector<1x8x16xf32>
    %257 = vector.shape_cast %256 : vector<1x8x16xf32> to vector<1x8x16xf32>
    %258 = vector.broadcast %257 : vector<1x8x16xf32> to vector<8x8x16xf32>
    "tpu.trace_start"() <{level = 10 : i32, message = "bij,bjk->bik"}> : () -> ()
    %cst_95 = arith.constant dense<0.000000e+00> : vector<8x8x32xf32>
    %259 = tpu.matmul %258, %254, %cst_95 {dimension_numbers = #tpu.dot_dimension_numbers<[2], [1], [1], [2], [0, 0, 0, 1, 1, 2], [0], [0]>} : vector<8x8x16xf32>, vector<8x16x32xf32>, vector<8x8x32xf32> -> vector<8x8x32xf32>
    "tpu.trace_stop"() : () -> ()
    %c0_96 = arith.constant 0 : index
    %c96 = arith.constant 96 : index
    %260 = vector.load %arg3[%c0_96, %c96] : memref<1x128xf32, #tpu.memory_space<vmem>>, vector<1x32xf32>
    %261 = vector.shape_cast %260 : vector<1x32xf32> to vector<1x1x32xf32>
    %262 = vector.broadcast %261 : vector<1x1x32xf32> to vector<8x8x32xf32>
    %263 = arith.addf %259, %262 : vector<8x8x32xf32>
    %cst_97 = arith.constant 0.000000e+00 : f32
    %264 = vector.broadcast %cst_97 : f32 to vector<8x8x32xf32>
    %265 = arith.maximumf %263, %264 : vector<8x8x32xf32>
    %c0_98 = arith.constant 0 : index
    %c0_99 = arith.constant 0 : index
    %266 = vector.load %arg11[%c0_98, %c0_99] : memref<16x8xf32, #tpu.memory_space<vmem>>, vector<16x8xf32>
    %267 = vector.shape_cast %266 : vector<16x8xf32> to vector<1x16x8xf32>
    %268 = vector.shape_cast %267 : vector<1x16x8xf32> to vector<1x16x8xf32>
    %269 = vector.broadcast %268 : vector<1x16x8xf32> to vector<8x16x8xf32>
    "tpu.trace_start"() <{level = 10 : i32, message = "bij,bjk->bik"}> : () -> ()
    %cst_100 = arith.constant dense<0.000000e+00> : vector<8x16x32xf32>
    %270 = tpu.matmul %269, %265, %cst_100 {dimension_numbers = #tpu.dot_dimension_numbers<[2], [1], [1], [2], [0, 0, 0, 1, 1, 2], [0], [0]>} : vector<8x16x8xf32>, vector<8x8x32xf32>, vector<8x16x32xf32> -> vector<8x16x32xf32>
    "tpu.trace_stop"() : () -> ()
    %271 = vector.extract_strided_slice %270 {offsets = [1, 0, 0], sizes = [7, 16, 32], strides = [1, 1, 1]} : vector<8x16x32xf32> to vector<7x16x32xf32>
    %272 = vector.extract_strided_slice %270 {offsets = [7, 0, 0], sizes = [1, 16, 32], strides = [1, 1, 1]} : vector<8x16x32xf32> to vector<1x16x32xf32>
    %273 = tpu.concatenate %271, %272 in 0 : vector<7x16x32xf32>, vector<1x16x32xf32> -> vector<8x16x32xf32>
    %274 = vector.extract_strided_slice %270 {offsets = [0, 0, 0], sizes = [1, 16, 32], strides = [1, 1, 1]} : vector<8x16x32xf32> to vector<1x16x32xf32>
    %275 = vector.extract_strided_slice %270 {offsets = [0, 0, 0], sizes = [7, 16, 32], strides = [1, 1, 1]} : vector<8x16x32xf32> to vector<7x16x32xf32>
    %276 = tpu.concatenate %274, %275 in 0 : vector<1x16x32xf32>, vector<7x16x32xf32> -> vector<8x16x32xf32>
    %cst_101 = arith.constant 2.500000e-01 : f32
    %277 = vector.broadcast %cst_101 : f32 to vector<8x16x32xf32>
    %278 = arith.mulf %277, %276 : vector<8x16x32xf32>
    %cst_102 = arith.constant 7.500000e-01 : f32
    %279 = vector.broadcast %cst_102 : f32 to vector<8x16x32xf32>
    %280 = arith.mulf %279, %270 : vector<8x16x32xf32>
    %281 = arith.addf %278, %280 : vector<8x16x32xf32>
    %cst_103 = arith.constant 7.500000e-01 : f32
    %282 = vector.broadcast %cst_103 : f32 to vector<8x16x32xf32>
    %283 = arith.mulf %282, %270 : vector<8x16x32xf32>
    %cst_104 = arith.constant 2.500000e-01 : f32
    %284 = vector.broadcast %cst_104 : f32 to vector<8x16x32xf32>
    %285 = arith.mulf %284, %273 : vector<8x16x32xf32>
    %286 = arith.addf %283, %285 : vector<8x16x32xf32>
    %287 = vector.shape_cast %281 : vector<8x16x32xf32> to vector<8x1x16x32xf32>
    %288 = vector.shape_cast %286 : vector<8x16x32xf32> to vector<8x1x16x32xf32>
    %289 = tpu.concatenate %287, %288 in 1 : vector<8x1x16x32xf32>, vector<8x1x16x32xf32> -> vector<8x2x16x32xf32>
    %290 = vector.shape_cast %289 : vector<8x2x16x32xf32> to vector<16x16x32xf32>
    %291 = tpu.concatenate %119, %196, %249, %290 in 2 : vector<16x16x32xf32>, vector<16x16x32xf32>, vector<16x16x32xf32>, vector<16x16x32xf32> -> vector<16x16x128xf32>
    %c0_105 = arith.constant 0 : index
    %c0_106 = arith.constant 0 : index
    %c0_107 = arith.constant 0 : index
    %c0_108 = arith.constant 0 : index
    %292 = vector.load %arg12[%c0_105, %c0_106, %c0_107, %c0_108] : memref<1x16x16x128xf32, #tpu.memory_space<vmem>>, vector<1x16x16x128xf32>
    %293 = vector.shape_cast %292 : vector<1x16x16x128xf32> to vector<16x16x128xf32>
    %294 = vector.shape_cast %291 : vector<16x16x128xf32> to vector<1x16x16x128xf32>
    tpu.vector_store %arg12[%c0_105, %c0_106, %c0_107, %c0_108], %294 {strides = array<i32>} : memref<1x16x16x128xf32, #tpu.memory_space<vmem>>, vector<1x16x16x128xf32>,
    return
  }
  func.func @transform_0(%arg0: i32) -> (i32, i32, i32) {
    %c0_i32 = arith.constant 0 : i32
    %c0_i32_0 = arith.constant 0 : i32
    %c0_i32_1 = arith.constant 0 : i32
    return %arg0, %c0_i32, %c0_i32_0 : i32, i32, i32
  }
  func.func @transform_1(%arg0: i32) -> (i32, i32) {
    %c0_i32 = arith.constant 0 : i32
    %c0_i32_0 = arith.constant 0 : i32
    %c0_i32_1 = arith.constant 0 : i32
    return %c0_i32, %c0_i32_0 : i32, i32
  }
  func.func @transform_2(%arg0: i32) -> (i32, i32) {
    %c0_i32 = arith.constant 0 : i32
    %c0_i32_0 = arith.constant 0 : i32
    %c0_i32_1 = arith.constant 0 : i32
    return %c0_i32, %c0_i32_0 : i32, i32
  }
  func.func @transform_3(%arg0: i32) -> (i32, i32) {
    %c0_i32 = arith.constant 0 : i32
    %c0_i32_0 = arith.constant 0 : i32
    %c0_i32_1 = arith.constant 0 : i32
    return %c0_i32, %c0_i32_0 : i32, i32
  }
  func.func @transform_4(%arg0: i32) -> (i32, i32) {
    %c0_i32 = arith.constant 0 : i32
    %c0_i32_0 = arith.constant 0 : i32
    %c0_i32_1 = arith.constant 0 : i32
    return %c0_i32, %c0_i32_0 : i32, i32
  }
  func.func @transform_5(%arg0: i32) -> (i32, i32) {
    %c0_i32 = arith.constant 0 : i32
    %c0_i32_0 = arith.constant 0 : i32
    %c0_i32_1 = arith.constant 0 : i32
    return %c0_i32, %c0_i32_0 : i32, i32
  }
  func.func @transform_6(%arg0: i32) -> (i32, i32) {
    %c0_i32 = arith.constant 0 : i32
    %c0_i32_0 = arith.constant 0 : i32
    %c0_i32_1 = arith.constant 0 : i32
    return %c0_i32, %c0_i32_0 : i32, i32
  }
  func.func @transform_7(%arg0: i32) -> (i32, i32) {
    %c0_i32 = arith.constant 0 : i32
    %c0_i32_0 = arith.constant 0 : i32
    %c0_i32_1 = arith.constant 0 : i32
    return %c0_i32, %c0_i32_0 : i32, i32
  }
  func.func @transform_8(%arg0: i32) -> (i32, i32) {
    %c0_i32 = arith.constant 0 : i32
    %c0_i32_0 = arith.constant 0 : i32
    %c0_i32_1 = arith.constant 0 : i32
    return %c0_i32, %c0_i32_0 : i32, i32
  }
  func.func @transform_9(%arg0: i32) -> (i32, i32) {
    %c0_i32 = arith.constant 0 : i32
    %c0_i32_0 = arith.constant 0 : i32
    %c0_i32_1 = arith.constant 0 : i32
    return %c0_i32, %c0_i32_0 : i32, i32
  }
  func.func @transform_10(%arg0: i32) -> (i32, i32) {
    %c0_i32 = arith.constant 0 : i32
    %c0_i32_0 = arith.constant 0 : i32
    %c0_i32_1 = arith.constant 0 : i32
    return %c0_i32, %c0_i32_0 : i32, i32
  }
  func.func @transform_11(%arg0: i32) -> (i32, i32, i32, i32) {
    %c0_i32 = arith.constant 0 : i32
    %c0_i32_0 = arith.constant 0 : i32
    %c0_i32_1 = arith.constant 0 : i32
    %c0_i32_2 = arith.constant 0 : i32
    return %arg0, %c0_i32, %c0_i32_0, %c0_i32_1 : i32, i32, i32, i32
  }
}

</mosaic_0001>

<llo_original>
// kernel: tpu_custom_call.1
$region0: #{tpu_custom_call.1}
  #allocation0 [shape = 'u32[]', space=smem, size = 0x4, offset = 0x4, fixed_abs, tag = 'smem constant byte address 0x4 - core index']
  #allocation1 [shape = 'u32[144,128]{1,0:T(1,128)}', space=vmem, size = 0x12000, scoped, tag = 'internal scratch']
  %s0 = inlined_call_operand.vmem [shape: bf16[2,256,64], index: 0, kind: input, shape index: {}]
  %s1 = inlined_call_operand.vmem [shape: bf16[64,128], index: 1, kind: input, shape index: {}]
  %s2 = inlined_call_operand.vmem [shape: f32[1,128], index: 2, kind: input, shape index: {}]
  %s3 = inlined_call_operand.vmem [shape: f32[8,16], index: 3, kind: input, shape index: {}]
  %s4 = inlined_call_operand.vmem [shape: f32[16,8], index: 4, kind: input, shape index: {}]
  %s5 = inlined_call_operand.vmem [shape: f32[8,16], index: 5, kind: input, shape index: {}]
  %s6 = inlined_call_operand.vmem [shape: f32[16,8], index: 6, kind: input, shape index: {}]
  %s7 = inlined_call_operand.vmem [shape: f32[8,16], index: 7, kind: input, shape index: {}]
  %s8 = inlined_call_operand.vmem [shape: f32[16,8], index: 8, kind: input, shape index: {}]
  %s9 = inlined_call_operand.vmem [shape: f32[8,16], index: 9, kind: input, shape index: {}]
  %s10 = inlined_call_operand.vmem [shape: f32[16,8], index: 10, kind: input, shape index: {}]
  %s11 = inlined_call_operand.hbm [shape: f32[2,16,16,128], index: 11, kind: output, shape index: {}]
  %s12 = sld [smem:[#allocation0]]
  $region77: #{tpu_custom_call.1} parent=0
    _
  %s14 = ssub.s32 1, %s12
  %s15 = scalar_select 0, %s14, %s12
  $region1: #{tpu_custom_call.1} parent=0
    #allocation2 [shape = 'u8[262144]{0}', space=vmem, size = 0x40000, scoped, tag = 'output window, operand 0']
    #allocation3 [shape = 's32[2]{0}', space=sflag, size = 0x8, scoped, tag = 'scoped memory for tpu_custom_call.1']
    %16 = vsyncpa [#allocation3], 0
    %s17 = scalar_lea.sflag [#allocation3], 1
    %18 = vsyncpa %s17, 0
    loop: start=0, step=1, limit=4
    $region2: #{tpu_custom_call.1} parent=1 // loop_pre_header
      _
    $region3: #{tpu_custom_call.1} parent=1 // loop_header
      %s20 = sphi 0, %s24
      %p21 = scmp.ge.s32.totalorder %s20, 4
      %s30 = sphi 0, %s32
      %s33 = sphi 0, %s30
      %s34 = sphi 0, %s33
      %s50 = sphi 0, %s34
      %s54 = sphi 0, %s54
      %s56 = sphi 0, %s54
      %s57 = sphi 0, %s56
      %s71 = sphi 0, %s57
      %s75 = sphi 0, %s75
      %s77 = sphi 0, %s75
      %s78 = sphi 0, %s77
      %s92 = sphi 0, %s78
      %s96 = sphi 0, %s96
      %s98 = sphi 0, %s96
      %s99 = sphi 0, %s98
      %s113 = sphi 0, %s99
      %s117 = sphi 0, %s117
      %s119 = sphi 0, %s117
      %s120 = sphi 0, %s119
      %s134 = sphi 0, %s120
      %s138 = sphi 0, %s138
      %s140 = sphi 0, %s138
      %s141 = sphi 0, %s140
      %s155 = sphi 0, %s141
      %s159 = sphi 0, %s159
      %s161 = sphi 0, %s159
      %s162 = sphi 0, %s161
      %s176 = sphi 0, %s162
      %s180 = sphi 0, %s180
      %s182 = sphi 0, %s180
      %s183 = sphi 0, %s182
      %s197 = sphi 0, %s183
      %s201 = sphi 0, %s201
      %s203 = sphi 0, %s201
      %s204 = sphi 0, %s203
      %s218 = sphi 0, %s204
      %s222 = sphi 0, %s222
      %s224 = sphi 0, %s222
      %s225 = sphi 0, %s224
      %s239 = sphi 0, %s225
      %s243 = sphi 0, %s243
      %s245 = sphi 0, %s243
      %s246 = sphi 0, %s245
      %s260 = sphi 0, %s246
      %s266 = sphi 0, %s268
      %s269 = sphi 0, %s266
      %s270 = sphi 0, %s269
      %s286 = sphi 0, %s270
    $region4: #{tpu_custom_call.1} parent=1 // loop_header_branch
      %23 = sbr.rel (%p21) target = $region8
    $region5: #{tpu_custom_call.1} parent=1 // loop_body
      %s25 = ssub.s32 %s20, 1
      %s26 = ssub.s32 %s20, 2
      %s27 = sadd.s32 %s20, 1
      %s28 = ssub.s32 %s20, %s27
      %p29 = scmp.eq.s32.totalorder %s28, 0
      %s31 = sadd.s32 %s30, 1
      %s32 = scalar_select %p29, %s30, %s31
      %p35 = pneg %p29
      %p36 = scmp.eq.s32.totalorder %s20, 1
      %p37 = por %p35, %p36
      %p38 = scmp.ne.s32.totalorder %s30, %s33
      %p39 = scmp.eq.s32.totalorder %s20, 0
      %p40 = por %p38, %p39
      %p41 = scmp.ne.s32.totalorder %s30, %s33
      %p42 = scmp.eq.s32.totalorder %s25, 1
      %p43 = por %p41, %p42
      %p44 = scmp.ne.s32.totalorder %s33, %s34
      %p45 = scmp.eq.s32.totalorder %s25, 0
      %p46 = por %p44, %p45
      %p47 = scmp.ne.s32.totalorder %s33, %s34
      %p48 = scmp.eq.s32.totalorder %s26, 1
      %p49 = por %p47, %p48
      %p51 = scmp.ne.s32.totalorder %s34, %s50
      %p52 = scmp.eq.s32.totalorder %s26, 0
      %p53 = por %p51, %p52
      %s55 = sadd.s32 %s54, 1
      %p58 = scmp.eq.s32.totalorder %s20, 1
      %p59 = scmp.ne.s32.totalorder %s54, %s56
      %p60 = scmp.eq.s32.totalorder %s20, 0
      %p61 = por %p59, %p60
      %p62 = scmp.ne.s32.totalorder %s54, %s56
      %p63 = scmp.eq.s32.totalorder %s25, 1
      %p64 = por %p62, %p63
      %p65 = scmp.ne.s32.totalorder %s56, %s57
      %p66 = scmp.eq.s32.totalorder %s25, 0
      %p67 = por %p65, %p66
      %p68 = scmp.ne.s32.totalorder %s56, %s57
      %p69 = scmp.eq.s32.totalorder %s26, 1
      %p70 = por %p68, %p69
      %p72 = scmp.ne.s32.totalorder %s57, %s71
      %p73 = scmp.eq.s32.totalorder %s26, 0
      %p74 = por %p72, %p73
      %s76 = sadd.s32 %s75, 1
      %p79 = scmp.eq.s32.totalorder %s20, 1
      %p80 = scmp.ne.s32.totalorder %s75, %s77
      %p81 = scmp.eq.s32.totalorder %s20, 0
      %p82 = por %p80, %p81
      %p83 = scmp.ne.s32.totalorder %s75, %s77
      %p84 = scmp.eq.s32.totalorder %s25, 1
      %p85 = por %p83, %p84
      %p86 = scmp.ne.s32.totalorder %s77, %s78
      %p87 = scmp.eq.s32.totalorder %s25, 0
      %p88 = por %p86, %p87
      %p89 = scmp.ne.s32.totalorder %s77, %s78
      %p90 = scmp.eq.s32.totalorder %s26, 1
      %p91 = por %p89, %p90
      %p93 = scmp.ne.s32.totalorder %s78, %s92
      %p94 = scmp.eq.s32.totalorder %s26, 0
      %p95 = por %p93, %p94
      %s97 = sadd.s32 %s96, 1
      %p100 = scmp.eq.s32.totalorder %s20, 1
      %p101 = scmp.ne.s32.totalorder %s96, %s98
      %p102 = scmp.eq.s32.totalorder %s20, 0
      %p103 = por %p101, %p102
      %p104 = scmp.ne.s32.totalorder %s96, %s98
      %p105 = scmp.eq.s32.totalorder %s25, 1
      %p106 = por %p104, %p105
      %p107 = scmp.ne.s32.totalorder %s98, %s99
      %p108 = scmp.eq.s32.totalorder %s25, 0
      %p109 = por %p107, %p108
      %p110 = scmp.ne.s32.totalorder %s98, %s99
      %p111 = scmp.eq.s32.totalorder %s26, 1
      %p112 = por %p110, %p111
      %p114 = scmp.ne.s32.totalorder %s99, %s113
      %p115 = scmp.eq.s32.totalorder %s26, 0
      %p116 = por %p114, %p115
      %s118 = sadd.s32 %s117, 1
      %p121 = scmp.eq.s32.totalorder %s20, 1
      %p122 = scmp.ne.s32.totalorder %s117, %s119
      %p123 = scmp.eq.s32.totalorder %s20, 0
      %p124 = por %p122, %p123
      %p125 = scmp.ne.s32.totalorder %s117, %s119
      %p126 = scmp.eq.s32.totalorder %s25, 1
      %p127 = por %p125, %p126
      %p128 = scmp.ne.s32.totalorder %s119, %s120
      %p129 = scmp.eq.s32.totalorder %s25, 0
      %p130 = por %p128, %p129
      %p131 = scmp.ne.s32.totalorder %s119, %s120
      %p132 = scmp.eq.s32.totalorder %s26, 1
      %p133 = por %p131, %p132
      %p135 = scmp.ne.s32.totalorder %s120, %s134
      %p136 = scmp.eq.s32.totalorder %s26, 0
      %p137 = por %p135, %p136
      %s139 = sadd.s32 %s138, 1
      %p142 = scmp.eq.s32.totalorder %s20, 1
      %p143 = scmp.ne.s32.totalorder %s138, %s140
      %p144 = scmp.eq.s32.totalorder %s20, 0
      %p145 = por %p143, %p144
      %p146 = scmp.ne.s32.totalorder %s138, %s140
      %p147 = scmp.eq.s32.totalorder %s25, 1
      %p148 = por %p146, %p147
      %p149 = scmp.ne.s32.totalorder %s140, %s141
      %p150 = scmp.eq.s32.totalorder %s25, 0
      %p151 = por %p149, %p150
      %p152 = scmp.ne.s32.totalorder %s140, %s141
      %p153 = scmp.eq.s32.totalorder %s26, 1
      %p154 = por %p152, %p153
      %p156 = scmp.ne.s32.totalorder %s141, %s155
      %p157 = scmp.eq.s32.totalorder %s26, 0
      %p158 = por %p156, %p157
      %s160 = sadd.s32 %s159, 1
      %p163 = scmp.eq.s32.totalorder %s20, 1
      %p164 = scmp.ne.s32.totalorder %s159, %s161
      %p165 = scmp.eq.s32.totalorder %s20, 0
      %p166 = por %p164, %p165
      %p167 = scmp.ne.s32.totalorder %s159, %s161
      %p168 = scmp.eq.s32.totalorder %s25, 1
      %p169 = por %p167, %p168
      %p170 = scmp.ne.s32.totalorder %s161, %s162
      %p171 = scmp.eq.s32.totalorder %s25, 0
      %p172 = por %p170, %p171
      %p173 = scmp.ne.s32.totalorder %s161, %s162
      %p174 = scmp.eq.s32.totalorder %s26, 1
      %p175 = por %p173, %p174
      %p177 = scmp.ne.s32.totalorder %s162, %s176
      %p178 = scmp.eq.s32.totalorder %s26, 0
      %p179 = por %p177, %p178
      %s181 = sadd.s32 %s180, 1
      %p184 = scmp.eq.s32.totalorder %s20, 1
      %p185 = scmp.ne.s32.totalorder %s180, %s182
      %p186 = scmp.eq.s32.totalorder %s20, 0
      %p187 = por %p185, %p186
      %p188 = scmp.ne.s32.totalorder %s180, %s182
      %p189 = scmp.eq.s32.totalorder %s25, 1
      %p190 = por %p188, %p189
      %p191 = scmp.ne.s32.totalorder %s182, %s183
      %p192 = scmp.eq.s32.totalorder %s25, 0
      %p193 = por %p191, %p192
      %p194 = scmp.ne.s32.totalorder %s182, %s183
      %p195 = scmp.eq.s32.totalorder %s26, 1
      %p196 = por %p194, %p195
      %p198 = scmp.ne.s32.totalorder %s183, %s197
      %p199 = scmp.eq.s32.totalorder %s26, 0
      %p200 = por %p198, %p199
      %s202 = sadd.s32 %s201, 1
      %p205 = scmp.eq.s32.totalorder %s20, 1
      %p206 = scmp.ne.s32.totalorder %s201, %s203
      %p207 = scmp.eq.s32.totalorder %s20, 0
      %p208 = por %p206, %p207
      %p209 = scmp.ne.s32.totalorder %s201, %s203
      %p210 = scmp.eq.s32.totalorder %s25, 1
      %p211 = por %p209, %p210
      %p212 = scmp.ne.s32.totalorder %s203, %s204
      %p213 = scmp.eq.s32.totalorder %s25, 0
      %p214 = por %p212, %p213
      %p215 = scmp.ne.s32.totalorder %s203, %s204
      %p216 = scmp.eq.s32.totalorder %s26, 1
      %p217 = por %p215, %p216
      %p219 = scmp.ne.s32.totalorder %s204, %s218
      %p220 = scmp.eq.s32.totalorder %s26, 0
      %p221 = por %p219, %p220
      %s223 = sadd.s32 %s222, 1
      %p226 = scmp.eq.s32.totalorder %s20, 1
      %p227 = scmp.ne.s32.totalorder %s222, %s224
      %p228 = scmp.eq.s32.totalorder %s20, 0
      %p229 = por %p227, %p228
      %p230 = scmp.ne.s32.totalorder %s222, %s224
      %p231 = scmp.eq.s32.totalorder %s25, 1
      %p232 = por %p230, %p231
      %p233 = scmp.ne.s32.totalorder %s224, %s225
      %p234 = scmp.eq.s32.totalorder %s25, 0
      %p235 = por %p233, %p234
      %p236 = scmp.ne.s32.totalorder %s224, %s225
      %p237 = scmp.eq.s32.totalorder %s26, 1
      %p238 = por %p236, %p237
      %p240 = scmp.ne.s32.totalorder %s225, %s239
      %p241 = scmp.eq.s32.totalorder %s26, 0
      %p242 = por %p240, %p241
      %s244 = sadd.s32 %s243, 1
      %p247 = scmp.eq.s32.totalorder %s20, 1
      %p248 = scmp.ne.s32.totalorder %s243, %s245
      %p249 = scmp.eq.s32.totalorder %s20, 0
      %p250 = por %p248, %p249
      %p251 = scmp.ne.s32.totalorder %s243, %s245
      %p252 = scmp.eq.s32.totalorder %s25, 1
      %p253 = por %p251, %p252
      %p254 = scmp.ne.s32.totalorder %s245, %s246
      %p255 = scmp.eq.s32.totalorder %s25, 0
      %p256 = por %p254, %p255
      %p257 = scmp.ne.s32.totalorder %s245, %s246
      %p258 = scmp.eq.s32.totalorder %s26, 1
      %p259 = por %p257, %p258
      %p261 = scmp.ne.s32.totalorder %s246, %s260
      %p262 = scmp.eq.s32.totalorder %s26, 0
      %p263 = por %p261, %p262
      %s264 = ssub.s32 %s20, %s27
      %p265 = scmp.eq.s32.totalorder %s264, 0
      %s267 = sadd.s32 %s266, 1
      %s268 = scalar_select %p265, %s266, %s267
      %p271 = pneg %p265
      %p272 = scmp.eq.s32.totalorder %s20, 1
      %p273 = por %p271, %p272
      %p274 = scmp.ne.s32.totalorder %s266, %s269
      %p275 = scmp.eq.s32.totalorder %s20, 0
      %p276 = por %p274, %p275
      %p277 = scmp.ne.s32.totalorder %s266, %s269
      %p278 = scmp.eq.s32.totalorder %s25, 1
      %p279 = por %p277, %p278
      %p280 = scmp.ne.s32.totalorder %s269, %s270
      %p281 = scmp.eq.s32.totalorder %s25, 0
      %p282 = por %p280, %p281
      %p283 = scmp.ne.s32.totalorder %s269, %s270
      %p284 = scmp.eq.s32.totalorder %s26, 1
      %p285 = por %p283, %p284
      %p287 = scmp.ne.s32.totalorder %s270, %s286
      %p288 = scmp.eq.s32.totalorder %s26, 0
      %p289 = por %p287, %p288
      %p290 = scmp.le.s32.totalorder 1, %s20
      %p291 = scmp.lt.s32.totalorder %s20, 3
      %p292 = pnand %p290, %p291
      %p293 = pneg %p292
      // Predicated region
      $region9: #{tpu_custom_call.1} parent=5 // pred_check
        _
      $region10: #{tpu_custom_call.1} parent=5 // pred_check_branch
        %295 = sbr.rel (%p292) target = $region12
      $region11: #{tpu_custom_call.1} parent=5 // pred_region
        %s296 = ssub.s32 %s20, 1
        // Predicated region
        $region13: #{tpu_custom_call.1} parent=11 // pred_check
          %p297 = pneg %p67
        $region14: #{tpu_custom_call.1} parent=11 // pred_check_branch
          %299 = sbr.rel (%p297) target = $region16
        $region15: #{tpu_custom_call.1} parent=11 // pred_region
          _
        $region16: #{tpu_custom_call.1} parent=11 // pred_fallthru
          _
        // Predicated region
        $region17: #{tpu_custom_call.1} parent=11 // pred_check
          %p300 = pneg %p88
        $region18: #{tpu_custom_call.1} parent=11 // pred_check_branch
          %302 = sbr.rel (%p300) target = $region20
        $region19: #{tpu_custom_call.1} parent=11 // pred_region
          _
        $region20: #{tpu_custom_call.1} parent=11 // pred_fallthru
          _
        // Predicated region
        $region21: #{tpu_custom_call.1} parent=11 // pred_check
          %p303 = pneg %p109
        $region22: #{tpu_custom_call.1} parent=11 // pred_check_branch
          %305 = sbr.rel (%p303) target = $region24
        $region23: #{tpu_custom_call.1} parent=11 // pred_region
          _
        $region24: #{tpu_custom_call.1} parent=11 // pred_fallthru
          _
        // Predicated region
        $region25: #{tpu_custom_call.1} parent=11 // pred_check
          %p306 = pneg %p130
        $region26: #{tpu_custom_call.1} parent=11 // pred_check_branch
          %308 = sbr.rel (%p306) target = $region28
        $region27: #{tpu_custom_call.1} parent=11 // pred_region
          _
        $region28: #{tpu_custom_call.1} parent=11 // pred_fallthru
          _
        // Predicated region
        $region29: #{tpu_custom_call.1} parent=11 // pred_check
          %p309 = pneg %p151
        $region30: #{tpu_custom_call.1} parent=11 // pred_check_branch
          %311 = sbr.rel (%p309) target = $region32
        $region31: #{tpu_custom_call.1} parent=11 // pred_region
          _
        $region32: #{tpu_custom_call.1} parent=11 // pred_fallthru
          _
        // Predicated region
        $region33: #{tpu_custom_call.1} parent=11 // pred_check
          %p312 = pneg %p172
        $region34: #{tpu_custom_call.1} parent=11 // pred_check_branch
          %314 = sbr.rel (%p312) target = $region36
        $region35: #{tpu_custom_call.1} parent=11 // pred_region
          _
        $region36: #{tpu_custom_call.1} parent=11 // pred_fallthru
          _
        // Predicated region
        $region37: #{tpu_custom_call.1} parent=11 // pred_check
          %p315 = pneg %p193
        $region38: #{tpu_custom_call.1} parent=11 // pred_check_branch
          %317 = sbr.rel (%p315) target = $region40
        $region39: #{tpu_custom_call.1} parent=11 // pred_region
          _
        $region40: #{tpu_custom_call.1} parent=11 // pred_fallthru
          _
        // Predicated region
        $region41: #{tpu_custom_call.1} parent=11 // pred_check
          %p318 = pneg %p214
        $region42: #{tpu_custom_call.1} parent=11 // pred_check_branch
          %320 = sbr.rel (%p318) target = $region44
        $region43: #{tpu_custom_call.1} parent=11 // pred_region
          _
        $region44: #{tpu_custom_call.1} parent=11 // pred_fallthru
          _
        // Predicated region
        $region45: #{tpu_custom_call.1} parent=11 // pred_check
          %p321 = pneg %p235
        $region46: #{tpu_custom_call.1} parent=11 // pred_check_branch
          %323 = sbr.rel (%p321) target = $region48
        $region47: #{tpu_custom_call.1} parent=11 // pred_region
          _
        $region48: #{tpu_custom_call.1} parent=11 // pred_fallthru
          _
        // Predicated region
        $region49: #{tpu_custom_call.1} parent=11 // pred_check
          %p324 = pneg %p256
        $region50: #{tpu_custom_call.1} parent=11 // pred_check_branch
          %326 = sbr.rel (%p324) target = $region52
        $region51: #{tpu_custom_call.1} parent=11 // pred_region
          _
        $region52: #{tpu_custom_call.1} parent=11 // pred_fallthru
          _
      $region12: #{tpu_custom_call.1} parent=5 // pred_fallthru
        _
      %p327 = scmp.lt.s32.totalorder %s20, 2
      // Predicated region
      $region53: #{tpu_custom_call.1} parent=5 // pred_check
        %p328 = pneg %p327
      $region54: #{tpu_custom_call.1} parent=5 // pred_check_branch
        %330 = sbr.rel (%p328) target = $region56
      $region55: #{tpu_custom_call.1} parent=5 // pred_region
        // Predicated region
        $region57: #{tpu_custom_call.1} parent=55 // pred_check
          %p331 = pneg %p40
        $region58: #{tpu_custom_call.1} parent=55 // pred_check_branch
          %333 = sbr.rel (%p331) target = $region60
        $region59: #{tpu_custom_call.1} parent=55 // pred_region
          %p334 = scmp.lt.s32.totalorder %s20, 1
          %s335 = scalar_select %p334, %s20, 1
          %s336 = smul.addr %s335, 32
          %s337 = smul.addr %s336, 4
          %s338 = scalar_lea.vmem %s0, %s337
        $region60: #{tpu_custom_call.1} parent=55 // pred_fallthru
          _
      $region56: #{tpu_custom_call.1} parent=5 // pred_fallthru
        _
      %p339 = scmp.le.s32.totalorder 1, %s20
      %p340 = scmp.lt.s32.totalorder %s20, 3
      %p341 = pnand %p339, %p340
      %p342 = pneg %p341
      // Predicated region
      $region61: #{tpu_custom_call.1} parent=5 // pred_check
        _
      $region62: #{tpu_custom_call.1} parent=5 // pred_check_branch
        %344 = sbr.rel (%p341) target = $region64
      $region63: #{tpu_custom_call.1} parent=5 // pred_region
        %s345 = ssub.s32 %s20, 1
        %p346 = scmp.lt.s32.totalorder %s25, 1
        %s347 = scalar_select %p346, %s25, 1
        %s348 = smul.addr %s347, 32
        %s349 = smul.addr %s348, 4
        %s350 = scalar_lea.vmem %s0, %s349
        %p351 = pneg %p46
        %p352 = pneg %p43
        %p353 = pneg %p67
        %p354 = pneg %p64
        %p355 = pneg %p88
        %p356 = pneg %p85
        %p357 = pneg %p109
        %p358 = pneg %p106
        %p359 = pneg %p130
        %p360 = pneg %p127
        %p361 = pneg %p151
        %p362 = pneg %p148
        %p363 = pneg %p172
        %p364 = pneg %p169
        %p365 = pneg %p193
        %p366 = pneg %p190
        %p367 = pneg %p214
        %p368 = pneg %p211
        %p369 = pneg %p235
        %p370 = pneg %p232
        %p371 = pneg %p256
        %p372 = pneg %p253
        %p373 = pneg %p282
        %p374 = pneg %p279
        %s375 = sand.u32 %s269, 1
        %s376 = scalar_lea.sflag [#allocation3], %s375
        %s377 = sand.u32 %s269, 1
        %s378 = smul.addr %s377, 256
        %s379 = scalar_lea.vmem [#allocation2], %s378
        %p380 = scmp.lt.s32.totalorder %s25, 1
        %s381 = scalar_select %p380, %s25, 1
        %s382 = smul.addr %s381, 32
        %s383 = smul.addr %s382, 4
        %s384 = scalar_lea.vmem %s0, %s383
        %v386 = vld [vmem:[%s384] sm:$0xf]
        %v387 = vld [vmem:[%s384 + $0x4] sm:$0xf]
        %v388 = vld [vmem:[%s384 + $0x8] sm:$0xf]
        %v389 = vld [vmem:[%s384 + $0xc] sm:$0xf]
        %v390 = vld [vmem:[%s384 + $0x10] sm:$0xf]
        %v391 = vld [vmem:[%s384 + $0x14] sm:$0xf]
        %v392 = vld [vmem:[%s384 + $0x18] sm:$0xf]
        %v393 = vld [vmem:[%s384 + $0x1c] sm:$0xf]
        %v394 = vld [vmem:[%s384 + $0x20] sm:$0xf]
        %v395 = vld [vmem:[%s384 + $0x24] sm:$0xf]
        %v396 = vld [vmem:[%s384 + $0x28] sm:$0xf]
        %v397 = vld [vmem:[%s384 + $0x2c] sm:$0xf]
        %v398 = vld [vmem:[%s384 + $0x30] sm:$0xf]
        %v399 = vld [vmem:[%s384 + $0x34] sm:$0xf]
        %v400 = vld [vmem:[%s384 + $0x38] sm:$0xf]
        %v401 = vld [vmem:[%s384 + $0x3c] sm:$0xf]
        %v402 = vld [vmem:[%s384 + $0x40] sm:$0xf]
        %v403 = vld [vmem:[%s384 + $0x44] sm:$0xf]
        %v404 = vld [vmem:[%s384 + $0x48] sm:$0xf]
        %v405 = vld [vmem:[%s384 + $0x4c] sm:$0xf]
        %v406 = vld [vmem:[%s384 + $0x50] sm:$0xf]
        %v407 = vld [vmem:[%s384 + $0x54] sm:$0xf]
        %v408 = vld [vmem:[%s384 + $0x58] sm:$0xf]
        %v409 = vld [vmem:[%s384 + $0x5c] sm:$0xf]
        %v410 = vld [vmem:[%s384 + $0x60] sm:$0xf]
        %v411 = vld [vmem:[%s384 + $0x64] sm:$0xf]
        %v412 = vld [vmem:[%s384 + $0x68] sm:$0xf]
        %v413 = vld [vmem:[%s384 + $0x6c] sm:$0xf]
        %v414 = vld [vmem:[%s384 + $0x70] sm:$0xf]
        %v415 = vld [vmem:[%s384 + $0x74] sm:$0xf]
        %v416 = vld [vmem:[%s384 + $0x78] sm:$0xf]
        %v417 = vld [vmem:[%s384 + $0x7c] sm:$0xf]
        %v418 = vld [vmem:[%s1] sm:$0xf]
        %v419 = vld [vmem:[%s1 + $0x4] sm:$0xf]
        %v420 = vld [vmem:[%s1 + $0x8] sm:$0xf]
        %v421 = vld [vmem:[%s1 + $0xc] sm:$0xf]
        %v422 = vld [vmem:[%s1 + $0x10] sm:$0xf]
        %v423 = vld [vmem:[%s1 + $0x14] sm:$0xf]
        %v424 = vld [vmem:[%s1 + $0x18] sm:$0xf]
        %v425 = vld [vmem:[%s1 + $0x1c] sm:$0xf]
        %v458 = vunpack.c.l.b16 %v386
        %v459 = vunpack.c.l.b16 %v387
        %v460 = vunpack.c.l.b16 %v388
        %v461 = vunpack.c.l.b16 %v389
        %v462 = vunpack.c.l.b16 %v390
        %v463 = vunpack.c.l.b16 %v391
        %v464 = vunpack.c.l.b16 %v392
        %v465 = vunpack.c.l.b16 %v393
        %v466 = vunpack.c.l.b16 %v394
        %v467 = vunpack.c.l.b16 %v395
        %v468 = vunpack.c.l.b16 %v396
        %v469 = vunpack.c.l.b16 %v397
        %v470 = vunpack.c.l.b16 %v398
        %v471 = vunpack.c.l.b16 %v399
        %v472 = vunpack.c.l.b16 %v400
        %v473 = vunpack.c.l.b16 %v401
        %v474 = vunpack.c.l.b16 %v402
        %v475 = vunpack.c.l.b16 %v403
        %v476 = vunpack.c.l.b16 %v404
        %v477 = vunpack.c.l.b16 %v405
        %v478 = vunpack.c.l.b16 %v406
        %v479 = vunpack.c.l.b16 %v407
        %v480 = vunpack.c.l.b16 %v408
        %v481 = vunpack.c.l.b16 %v409
        %v482 = vunpack.c.l.b16 %v410
        %v483 = vunpack.c.l.b16 %v411
        %v484 = vunpack.c.l.b16 %v412
        %v485 = vunpack.c.l.b16 %v413
        %v486 = vunpack.c.l.b16 %v414
        %v487 = vunpack.c.l.b16 %v415
        %v488 = vunpack.c.l.b16 %v416
        %v489 = vunpack.c.l.b16 %v417
        %v490 = vpack.c.b16 %v459, %v458
        %v491 = vpack.c.b16 %v461, %v460
        %v492 = vpack.c.b16 %v463, %v462
        %v493 = vpack.c.b16 %v465, %v464
        %v494 = vpack.c.b16 %v467, %v466
        %v495 = vpack.c.b16 %v469, %v468
        %v496 = vpack.c.b16 %v471, %v470
        %v497 = vpack.c.b16 %v473, %v472
        %v498 = vpack.c.b16 %v475, %v474
        %v499 = vpack.c.b16 %v477, %v476
        %v500 = vpack.c.b16 %v479, %v478
        %v501 = vpack.c.b16 %v481, %v480
        %v502 = vpack.c.b16 %v483, %v482
        %v503 = vpack.c.b16 %v485, %v484
        %v504 = vpack.c.b16 %v487, %v486
        %v505 = vpack.c.b16 %v489, %v488
        %v514 = vunpack.c.l.b16 %v418
        %v515 = vunpack.c.l.b16 %v419
        %v516 = vunpack.c.l.b16 %v420
        %v517 = vunpack.c.l.b16 %v421
        %v518 = vunpack.c.l.b16 %v422
        %v519 = vunpack.c.l.b16 %v423
        %v520 = vunpack.c.l.b16 %v424
        %v521 = vunpack.c.l.b16 %v425
        %v522 = vpack.c.b16 %v515, %v514
        %v523 = vpack.c.b16 %v517, %v516
        %v524 = vpack.c.b16 %v519, %v518
        %v525 = vpack.c.b16 %v521, %v520
        %vm530 = vcmask 523264
        %v532 = vsel %vm530, %v490, 0
        %v535 = vsel %vm530, %v491, 0
        %v538 = vsel %vm530, %v492, 0
        %v541 = vsel %vm530, %v493, 0
        %v544 = vsel %vm530, %v494, 0
        %v547 = vsel %vm530, %v495, 0
        %v550 = vsel %vm530, %v496, 0
        %v553 = vsel %vm530, %v497, 0
        %v556 = vsel %vm530, %v498, 0
        %v559 = vsel %vm530, %v499, 0
        %v562 = vsel %vm530, %v500, 0
        %v565 = vsel %vm530, %v501, 0
        %v568 = vsel %vm530, %v502, 0
        %v571 = vsel %vm530, %v503, 0
        %v574 = vsel %vm530, %v504, 0
        %v577 = vsel %vm530, %v505, 0
        %579 = vmatprep.subr.bf16.mxu0 0
        %580 = vmatpush1.bf16.msra.mxu0 %v522
        %581 = vmatprep.subr.bf16.mxu0 0
        %582 = vmatpush1.bf16.msra.mxu0 %v523
        %583 = vmatprep.subr.bf16.mxu0 0
        %584 = vmatpush1.bf16.msra.mxu0 %v524
        %585 = vmatprep.subr.bf16.mxu0 0
        %586 = vmatpush1.bf16.msra.mxu0 %v525
        %587 = vmatprep.subr.bf16.mxu0 0
        %588 = vmatpush1.bf16.msra.mxu0 0
        %589 = vmatprep.subr.bf16.mxu0 0
        %590 = vmatpush1.bf16.msra.mxu0 0
        %591 = vmatprep.subr.bf16.mxu0 0
        %592 = vmatpush1.bf16.msra.mxu0 0
        %593 = vmatprep.subr.bf16.mxu0 0
        %594 = vmatpush1.bf16.msra.mxu0 0
        %595 = vmatprep.subr.bf16.mxu0 0
        %596 = vmatpush1.bf16.msra.mxu0 0
        %597 = vmatprep.subr.bf16.mxu0 0
        %598 = vmatpush1.bf16.msra.mxu0 0
        %599 = vmatprep.subr.bf16.mxu0 0
        %600 = vmatpush1.bf16.msra.mxu0 0
        %601 = vmatprep.subr.bf16.mxu0 0
        %602 = vmatpush1.bf16.msra.mxu0 0
        %603 = vmatprep.subr.bf16.mxu0 0
        %604 = vmatpush1.bf16.msra.mxu0 0
        %605 = vmatprep.subr.bf16.mxu0 0
        %606 = vmatpush1.bf16.msra.mxu0 0
        %607 = vmatprep.subr.bf16.mxu0 0
        %608 = vmatpush1.bf16.msra.mxu0 0
        %609 = vmatprep.subr.bf16.mxu0 0
        %610 = vmatpush1.bf16.msra.mxu0 0
        %611 = vmatprep.mubr.bf16.mxu0 0
        %612 = vmatmul.mubr.bf16.gmra.mrb[0].mxu0 %v532
        %v613 = vpop.f32.mrb[0].mxu0
        %v614 = vadd.f32 0.0, %v613
        %v615 = vpop.f32.mrb[0].mxu0
        %v616 = vpop.f32.mrb[0].mxu0
        %v617 = vadd.f32 0.0, %v616
        %v618 = vpop.f32.mrb[0].mxu0
        %619 = vmatprep.mubr.bf16.mxu0 0
        %620 = vmatmul.mubr.bf16.gmra.mrb[0].mxu0 %v535
        %v621 = vpop.f32.mrb[0].mxu0
        %v622 = vadd.f32 0.0, %v621
        %v623 = vpop.f32.mrb[0].mxu0
        %v624 = vpop.f32.mrb[0].mxu0
        %v625 = vadd.f32 0.0, %v624
        %v626 = vpop.f32.mrb[0].mxu0
        %627 = vmatprep.mubr.bf16.mxu0 0
        %628 = vmatmul.mubr.bf16.gmra.mrb[0].mxu0 %v538
        %v629 = vpop.f32.mrb[0].mxu0
        %v630 = vadd.f32 0.0, %v629
        %v631 = vpop.f32.mrb[0].mxu0
        %v632 = vpop.f32.mrb[0].mxu0
        %v633 = vadd.f32 0.0, %v632
        %v634 = vpop.f32.mrb[0].mxu0
        %635 = vmatprep.mubr.bf16.mxu0 0
        %636 = vmatmul.mubr.bf16.gmra.mrb[0].mxu0 %v541
        %v637 = vpop.f32.mrb[0].mxu0
        %v638 = vadd.f32 0.0, %v637
        %v639 = vpop.f32.mrb[0].mxu0
        %v640 = vpop.f32.mrb[0].mxu0
        %v641 = vadd.f32 0.0, %v640
        %v642 = vpop.f32.mrb[0].mxu0
        %643 = vmatprep.mubr.bf16.mxu0 0
        %644 = vmatmul.mubr.bf16.gmra.mrb[0].mxu0 %v544
        %v645 = vpop.f32.mrb[0].mxu0
        %v646 = vadd.f32 0.0, %v645
        %v647 = vpop.f32.mrb[0].mxu0
        %v648 = vpop.f32.mrb[0].mxu0
        %v649 = vadd.f32 0.0, %v648
        %v650 = vpop.f32.mrb[0].mxu0
        %651 = vmatprep.mubr.bf16.mxu0 0
        %652 = vmatmul.mubr.bf16.gmra.mrb[0].mxu0 %v547
        %v653 = vpop.f32.mrb[0].mxu0
        %v654 = vadd.f32 0.0, %v653
        %v655 = vpop.f32.mrb[0].mxu0
        %v656 = vpop.f32.mrb[0].mxu0
        %v657 = vadd.f32 0.0, %v656
        %v658 = vpop.f32.mrb[0].mxu0
        %659 = vmatprep.mubr.bf16.mxu0 0
        %660 = vmatmul.mubr.bf16.gmra.mrb[0].mxu0 %v550
        %v661 = vpop.f32.mrb[0].mxu0
        %v662 = vadd.f32 0.0, %v661
        %v663 = vpop.f32.mrb[0].mxu0
        %v664 = vpop.f32.mrb[0].mxu0
        %v665 = vadd.f32 0.0, %v664
        %v666 = vpop.f32.mrb[0].mxu0
        %667 = vmatprep.mubr.bf16.mxu0 0
        %668 = vmatmul.mubr.bf16.gmra.mrb[0].mxu0 %v553
        %v669 = vpop.f32.mrb[0].mxu0
        %v670 = vadd.f32 0.0, %v669
        %v671 = vpop.f32.mrb[0].mxu0
        %v672 = vpop.f32.mrb[0].mxu0
        %v673 = vadd.f32 0.0, %v672
        %v674 = vpop.f32.mrb[0].mxu0
        %675 = vmatprep.mubr.bf16.mxu0 0
        %676 = vmatmul.mubr.bf16.gmra.mrb[0].mxu0 %v556
        %v677 = vpop.f32.mrb[0].mxu0
        %v678 = vadd.f32 0.0, %v677
        %v679 = vpop.f32.mrb[0].mxu0
        %v680 = vpop.f32.mrb[0].mxu0
        %v681 = vadd.f32 0.0, %v680
        %v682 = vpop.f32.mrb[0].mxu0
        %683 = vmatprep.mubr.bf16.mxu0 0
        %684 = vmatmul.mubr.bf16.gmra.mrb[0].mxu0 %v559
        %v685 = vpop.f32.mrb[0].mxu0
        %v686 = vadd.f32 0.0, %v685
        %v687 = vpop.f32.mrb[0].mxu0
        %v688 = vpop.f32.mrb[0].mxu0
        %v689 = vadd.f32 0.0, %v688
        %v690 = vpop.f32.mrb[0].mxu0
        %691 = vmatprep.mubr.bf16.mxu0 0
        %692 = vmatmul.mubr.bf16.gmra.mrb[0].mxu0 %v562
        %v693 = vpop.f32.mrb[0].mxu0
        %v694 = vadd.f32 0.0, %v693
        %v695 = vpop.f32.mrb[0].mxu0
        %v696 = vpop.f32.mrb[0].mxu0
        %v697 = vadd.f32 0.0, %v696
        %v698 = vpop.f32.mrb[0].mxu0
        %699 = vmatprep.mubr.bf16.mxu0 0
        %700 = vmatmul.mubr.bf16.gmra.mrb[0].mxu0 %v565
        %v701 = vpop.f32.mrb[0].mxu0
        %v702 = vadd.f32 0.0, %v701
        %v703 = vpop.f32.mrb[0].mxu0
        %v704 = vpop.f32.mrb[0].mxu0
        %v705 = vadd.f32 0.0, %v704
        %v706 = vpop.f32.mrb[0].mxu0
        %707 = vmatprep.mubr.bf16.mxu0 0
        %708 = vmatmul.mubr.bf16.gmra.mrb[0].mxu0 %v568
        %v709 = vpop.f32.mrb[0].mxu0
        %v710 = vadd.f32 0.0, %v709
        %v711 = vpop.f32.mrb[0].mxu0
        %v712 = vpop.f32.mrb[0].mxu0
        %v713 = vadd.f32 0.0, %v712
        %v714 = vpop.f32.mrb[0].mxu0
        %715 = vmatprep.mubr.bf16.mxu0 0
        %716 = vmatmul.mubr.bf16.gmra.mrb[0].mxu0 %v571
        %v717 = vpop.f32.mrb[0].mxu0
        %v718 = vadd.f32 0.0, %v717
        %v719 = vpop.f32.mrb[0].mxu0
        %v720 = vpop.f32.mrb[0].mxu0
        %v721 = vadd.f32 0.0, %v720
        %v722 = vpop.f32.mrb[0].mxu0
        %723 = vmatprep.mubr.bf16.mxu0 0
        %724 = vmatmul.mubr.bf16.gmra.mrb[0].mxu0 %v574
        %v725 = vpop.f32.mrb[0].mxu0
        %v726 = vadd.f32 0.0, %v725
        %v727 = vpop.f32.mrb[0].mxu0
        %v728 = vpop.f32.mrb[0].mxu0
        %v729 = vadd.f32 0.0, %v728
        %v730 = vpop.f32.mrb[0].mxu0
        %731 = vmatprep.mubr.bf16.mxu0 0
        %732 = vmatmul.mubr.bf16.gmra.mrb[0].mxu0 %v577
        %v733 = vpop.f32.mrb[0].mxu0
        %v734 = vadd.f32 0.0, %v733
        %v735 = vpop.f32.mrb[0].mxu0
        %v736 = vpop.f32.mrb[0].mxu0
        %v737 = vadd.f32 0.0, %v736
        %v738 = vpop.f32.mrb[0].mxu0
        %739 = vdwg.mxu0
        %vm740 = vcmask 261120
        %v741 = vsel %vm740, %v614, 0.0
        %v742 = vsel %vm740, %v622, 0.0
        %v743 = vadd.f32 %v741, %v742
        %v744 = vsel %vm740, %v630, 0.0
        %v745 = vadd.f32 %v743, %v744
        %v746 = vsel %vm740, %v638, 0.0
        %v747 = vadd.f32 %v745, %v746
        %v748 = vsel %vm740, %v646, 0.0
        %v749 = vadd.f32 %v747, %v748
        %v750 = vsel %vm740, %v654, 0.0
        %v751 = vadd.f32 %v749, %v750
        %v752 = vsel %vm740, %v662, 0.0
        %v753 = vadd.f32 %v751, %v752
        %v754 = vsel %vm740, %v670, 0.0
        %v755 = vadd.f32 %v753, %v754
        %v756 = vsel %vm740, %v678, 0.0
        %v757 = vadd.f32 %v755, %v756
        %v758 = vsel %vm740, %v686, 0.0
        %v759 = vadd.f32 %v757, %v758
        %v760 = vsel %vm740, %v694, 0.0
        %v761 = vadd.f32 %v759, %v760
        %v762 = vsel %vm740, %v702, 0.0
        %v763 = vadd.f32 %v761, %v762
        %v764 = vsel %vm740, %v710, 0.0
        %v765 = vadd.f32 %v763, %v764
        %v766 = vsel %vm740, %v718, 0.0
        %v767 = vadd.f32 %v765, %v766
        %v768 = vsel %vm740, %v726, 0.0
        %v769 = vadd.f32 %v767, %v768
        %v770 = vsel %vm740, %v734, 0.0
        %v771 = vadd.f32 %v769, %v770
        %v772 = vsel %vm740, %v617, 0.0
        %v773 = vsel %vm740, %v625, 0.0
        %v774 = vadd.f32 %v772, %v773
        %v775 = vsel %vm740, %v633, 0.0
        %v776 = vadd.f32 %v774, %v775
        %v777 = vsel %vm740, %v641, 0.0
        %v778 = vadd.f32 %v776, %v777
        %v779 = vsel %vm740, %v649, 0.0
        %v780 = vadd.f32 %v778, %v779
        %v781 = vsel %vm740, %v657, 0.0
        %v782 = vadd.f32 %v780, %v781
        %v783 = vsel %vm740, %v665, 0.0
        %v784 = vadd.f32 %v782, %v783
        %v785 = vsel %vm740, %v673, 0.0
        %v786 = vadd.f32 %v784, %v785
        %v787 = vsel %vm740, %v681, 0.0
        %v788 = vadd.f32 %v786, %v787
        %v789 = vsel %vm740, %v689, 0.0
        %v790 = vadd.f32 %v788, %v789
        %v791 = vsel %vm740, %v697, 0.0
        %v792 = vadd.f32 %v790, %v791
        %v793 = vsel %vm740, %v705, 0.0
        %v794 = vadd.f32 %v792, %v793
        %v795 = vsel %vm740, %v713, 0.0
        %v796 = vadd.f32 %v794, %v795
        %v797 = vsel %vm740, %v721, 0.0
        %v798 = vadd.f32 %v796, %v797
        %v799 = vsel %vm740, %v729, 0.0
        %v800 = vadd.f32 %v798, %v799
        %v801 = vsel %vm740, %v737, 0.0
        %v802 = vadd.f32 %v800, %v801
        %v803 = vrcp.pop 16.0
        %v804 = vmul.f32 %v771, %v803
        %v805 = vmul.f32 %v802, %v803
        %v806 = vld [vmem:[%s3] sm:$0xff]
        %v807 = vld [vmem:[%s2] sm:$0x1]
        %v809 = vlaneseq
        %v810 = vshrl.u32 %v809, 7
        %v811 = vsub.s32 0, %v810
        %v812 = vrot.slane %v807, %v811
        %vm814 = vcmask 130048
        %v816 = vsel %vm814, %v806, 0
        %818 = vmatprep.subr.mxu0 0.0
        %819 = vmatpush1.msra.mxu0 %v804
        %820 = vmatprep.subr.mxu0 0.0
        %821 = vmatpush1.msra.mxu0 %v805
        %822 = vmatprep.subr.mxu0 0.0
        %823 = vmatpush1.msra.mxu0 0.0
        %824 = vmatprep.subr.mxu0 0.0
        %825 = vmatpush1.msra.mxu0 0.0
        %826 = vmatprep.subr.mxu0 0.0
        %827 = vmatpush1.msra.mxu0 0.0
        %828 = vmatprep.subr.mxu0 0.0
        %829 = vmatpush1.msra.mxu0 0.0
        %830 = vmatprep.subr.mxu0 0.0
        %831 = vmatpush1.msra.mxu0 0.0
        %832 = vmatprep.subr.mxu0 0.0
        %833 = vmatpush1.msra.mxu0 0.0
        %834 = vmatprep.subr.mxu0 0.0
        %835 = vmatpush1.msra.mxu0 0.0
        %836 = vmatprep.subr.mxu0 0.0
        %837 = vmatpush1.msra.mxu0 0.0
        %838 = vmatprep.subr.mxu0 0.0
        %839 = vmatpush1.msra.mxu0 0.0
        %840 = vmatprep.subr.mxu0 0.0
        %841 = vmatpush1.msra.mxu0 0.0
        %842 = vmatprep.subr.mxu0 0.0
        %843 = vmatpush1.msra.mxu0 0.0
        %844 = vmatprep.subr.mxu0 0.0
        %845 = vmatpush1.msra.mxu0 0.0
        %846 = vmatprep.subr.mxu0 0.0
        %847 = vmatpush1.msra.mxu0 0.0
        %848 = vmatprep.subr.mxu0 0.0
        %849 = vmatpush1.msra.mxu0 0.0
        %850 = vmatprep.subr.mxu0 0.0
        %851 = vmatpush1.msra.mxu0 0.0
        %852 = vmatprep.subr.mxu0 0.0
        %853 = vmatpush1.msra.mxu0 0.0
        %854 = vmatprep.subr.mxu0 0.0
        %855 = vmatpush1.msra.mxu0 0.0
        %856 = vmatprep.subr.mxu0 0.0
        %857 = vmatpush1.msra.mxu0 0.0
        %858 = vmatprep.subr.mxu0 0.0
        %859 = vmatpush1.msra.mxu0 0.0
        %860 = vmatprep.subr.mxu0 0.0
        %861 = vmatpush1.msra.mxu0 0.0
        %862 = vmatprep.subr.mxu0 0.0
        %863 = vmatpush1.msra.mxu0 0.0
        %864 = vmatprep.subr.mxu0 0.0
        %865 = vmatpush1.msra.mxu0 0.0
        %866 = vmatprep.subr.mxu0 0.0
        %867 = vmatpush1.msra.mxu0 0.0
        %868 = vmatprep.subr.mxu0 0.0
        %869 = vmatpush1.msra.mxu0 0.0
        %870 = vmatprep.subr.mxu0 0.0
        %871 = vmatpush1.msra.mxu0 0.0
        %872 = vmatprep.subr.mxu0 0.0
        %873 = vmatpush1.msra.mxu0 0.0
        %874 = vmatprep.subr.mxu0 0.0
        %875 = vmatpush1.msra.mxu0 0.0
        %876 = vmatprep.subr.mxu0 0.0
        %877 = vmatpush1.msra.mxu0 0.0
        %878 = vmatprep.subr.mxu0 0.0
        %879 = vmatpush1.msra.mxu0 0.0
        %880 = vmatprep.subr.mxu0 0.0
        %881 = vmatpush1.msra.mxu0 0.0
        %882 = vmatprep.mubr.f32.mxu0 0.0
        %883 = vmatmul.mubr.f32.gmra.mrb[0].mxu0 %v816
        %v884 = vpop.f32.mrb[0].mxu0
        %v885 = vadd.f32 %v812, %v884
        %v886 = vpop.f32.mrb[0].mxu0
        %887 = vdwg.mxu0
        %v888 = vmax.f32 %v885, 0.0
        %v889 = vld [vmem:[%s4] sm:$0xff]
        %v890 = vld [vmem:[%s4 + $0x8] sm:$0xff]
        %vm891 = vcmask 64512
        %v893 = vsel %vm891, %v889, 0
        %v896 = vsel %vm891, %v890, 0
        %898 = vmatprep.subr.mxu0 0.0
        %899 = vmatpush1.msra.mxu0 %v888
        %900 = vmatprep.subr.mxu0 0.0
        %901 = vmatpush1.msra.mxu0 0.0
        %902 = vmatprep.subr.mxu0 0.0
        %903 = vmatpush1.msra.mxu0 0.0
        %904 = vmatprep.subr.mxu0 0.0
        %905 = vmatpush1.msra.mxu0 0.0
        %906 = vmatprep.subr.mxu0 0.0
        %907 = vmatpush1.msra.mxu0 0.0
        %908 = vmatprep.subr.mxu0 0.0
        %909 = vmatpush1.msra.mxu0 0.0
        %910 = vmatprep.subr.mxu0 0.0
        %911 = vmatpush1.msra.mxu0 0.0
        %912 = vmatprep.subr.mxu0 0.0
        %913 = vmatpush1.msra.mxu0 0.0
        %914 = vmatprep.subr.mxu0 0.0
        %915 = vmatpush1.msra.mxu0 0.0
        %916 = vmatprep.subr.mxu0 0.0
        %917 = vmatpush1.msra.mxu0 0.0
        %918 = vmatprep.subr.mxu0 0.0
        %919 = vmatpush1.msra.mxu0 0.0
        %920 = vmatprep.subr.mxu0 0.0
        %921 = vmatpush1.msra.mxu0 0.0
        %922 = vmatprep.subr.mxu0 0.0
        %923 = vmatpush1.msra.mxu0 0.0
        %924 = vmatprep.subr.mxu0 0.0
        %925 = vmatpush1.msra.mxu0 0.0
        %926 = vmatprep.subr.mxu0 0.0
        %927 = vmatpush1.msra.mxu0 0.0
        %928 = vmatprep.subr.mxu0 0.0
        %929 = vmatpush1.msra.mxu0 0.0
        %930 = vmatprep.subr.mxu0 0.0
        %931 = vmatpush1.msra.mxu0 0.0
        %932 = vmatprep.subr.mxu0 0.0
        %933 = vmatpush1.msra.mxu0 0.0
        %934 = vmatprep.subr.mxu0 0.0
        %935 = vmatpush1.msra.mxu0 0.0
        %936 = vmatprep.subr.mxu0 0.0
        %937 = vmatpush1.msra.mxu0 0.0
        %938 = vmatprep.subr.mxu0 0.0
        %939 = vmatpush1.msra.mxu0 0.0
        %940 = vmatprep.subr.mxu0 0.0
        %941 = vmatpush1.msra.mxu0 0.0
        %942 = vmatprep.subr.mxu0 0.0
        %943 = vmatpush1.msra.mxu0 0.0
        %944 = vmatprep.subr.mxu0 0.0
        %945 = vmatpush1.msra.mxu0 0.0
        %946 = vmatprep.subr.mxu0 0.0
        %947 = vmatpush1.msra.mxu0 0.0
        %948 = vmatprep.subr.mxu0 0.0
        %949 = vmatpush1.msra.mxu0 0.0
        %950 = vmatprep.subr.mxu0 0.0
        %951 = vmatpush1.msra.mxu0 0.0
        %952 = vmatprep.subr.mxu0 0.0
        %953 = vmatpush1.msra.mxu0 0.0
        %954 = vmatprep.subr.mxu0 0.0
        %955 = vmatpush1.msra.mxu0 0.0
        %956 = vmatprep.subr.mxu0 0.0
        %957 = vmatpush1.msra.mxu0 0.0
        %958 = vmatprep.subr.mxu0 0.0
        %959 = vmatpush1.msra.mxu0 0.0
        %960 = vmatprep.subr.mxu0 0.0
        %961 = vmatpush1.msra.mxu0 0.0
        %962 = vmatprep.mubr.f32.mxu0 0.0
        %963 = vmatmul.mubr.f32.gmra.mrb[0].mxu0 %v893
        %v964 = vpop.f32.mrb[0].mxu0
        %v965 = vadd.f32 0.0, %v964
        %v966 = vpop.f32.mrb[0].mxu0
        %967 = vmatprep.mubr.f32.mxu0 0.0
        %968 = vmatmul.mubr.f32.gmra.mrb[0].mxu0 %v896
        %v969 = vpop.f32.mrb[0].mxu0
        %v970 = vadd.f32 0.0, %v969
        %v971 = vpop.f32.mrb[0].mxu0
        %972 = vdwg.mxu0
        %v973 = vmul.f32 %v965, 0.46875
        %v974 = vmul.f32 %v970, 0.46875
        %v975 = vmul.f32 %v965, 0.53125
        %v976 = vmul.f32 %v970, 0.53125
        %v977 = vadd.f32 %v973, %v975
        %v978 = vadd.f32 %v974, %v976
        %v979 = vmul.f32 %v965, 0.40625
        %v980 = vmul.f32 %v970, 0.40625
        %v981 = vmul.f32 %v965, 0.59375
        %v982 = vmul.f32 %v970, 0.59375
        %v983 = vadd.f32 %v979, %v981
        %v984 = vadd.f32 %v980, %v982
        %v985 = vmul.f32 %v965, 0.34375
        %v986 = vmul.f32 %v970, 0.34375
        %v987 = vmul.f32 %v965, 0.65625
        %v988 = vmul.f32 %v970, 0.65625
        %v989 = vadd.f32 %v985, %v987
        %v990 = vadd.f32 %v986, %v988
        %v991 = vmul.f32 %v965, 0.28125
        %v992 = vmul.f32 %v970, 0.28125
        %v993 = vmul.f32 %v965, 0.71875
        %v994 = vmul.f32 %v970, 0.71875
        %v995 = vadd.f32 %v991, %v993
        %v996 = vadd.f32 %v992, %v994
        %v997 = vmul.f32 %v965, 0.21875
        %v998 = vmul.f32 %v970, 0.21875
        %v999 = vmul.f32 %v965, 0.78125
        %v1000 = vmul.f32 %v970, 0.78125
        %v1001 = vadd.f32 %v997, %v999
        %v1002 = vadd.f32 %v998, %v1000
        %v1003 = vmul.f32 %v965, 0.15625
        %v1004 = vmul.f32 %v970, 0.15625
        %v1005 = vmul.f32 %v965, 0.84375
        %v1006 = vmul.f32 %v970, 0.84375
        %v1007 = vadd.f32 %v1003, %v1005
        %v1008 = vadd.f32 %v1004, %v1006
        %v1009 = vmul.f32 %v965, 0.09375
        %v1010 = vmul.f32 %v970, 0.09375
        %v1011 = vmul.f32 %v965, 0.90625
        %v1012 = vmul.f32 %v970, 0.90625
        %v1013 = vadd.f32 %v1009, %v1011
        %v1014 = vadd.f32 %v1010, %v1012
        %v1015 = vmul.f32 %v965, 0.03125
        %v1016 = vmul.f32 %v970, 0.03125
        %v1017 = vmul.f32 %v965, 0.96875
        %v1018 = vmul.f32 %v970, 0.96875
        %v1019 = vadd.f32 %v1015, %v1017
        %v1020 = vadd.f32 %v1016, %v1018
        %vm1021 = vcmask 523520
        %v1022 = vsel %vm1021, %v614, 0.0
        %v1023 = vsel %vm1021, %v622, 0.0
        %v1024 = vadd.f32 %v1022, %v1023
        %v1025 = vsel %vm1021, %v630, 0.0
        %v1026 = vadd.f32 %v1024, %v1025
        %v1027 = vsel %vm1021, %v638, 0.0
        %v1028 = vadd.f32 %v1026, %v1027
        %v1029 = vsel %vm1021, %v646, 0.0
        %v1030 = vadd.f32 %v1028, %v1029
        %v1031 = vsel %vm1021, %v654, 0.0
        %v1032 = vadd.f32 %v1030, %v1031
        %v1033 = vsel %vm1021, %v662, 0.0
        %v1034 = vadd.f32 %v1032, %v1033
        %v1035 = vsel %vm1021, %v670, 0.0
        %v1036 = vadd.f32 %v1034, %v1035
        %v1037 = vsel %vm1021, %v617, 0.0
        %v1038 = vsel %vm1021, %v625, 0.0
        %v1039 = vadd.f32 %v1037, %v1038
        %v1040 = vsel %vm1021, %v633, 0.0
        %v1041 = vadd.f32 %v1039, %v1040
        %v1042 = vsel %vm1021, %v641, 0.0
        %v1043 = vadd.f32 %v1041, %v1042
        %v1044 = vsel %vm1021, %v649, 0.0
        %v1045 = vadd.f32 %v1043, %v1044
        %v1046 = vsel %vm1021, %v657, 0.0
        %v1047 = vadd.f32 %v1045, %v1046
        %v1048 = vsel %vm1021, %v665, 0.0
        %v1049 = vadd.f32 %v1047, %v1048
        %v1050 = vsel %vm1021, %v673, 0.0
        %v1051 = vadd.f32 %v1049, %v1050
        %v1052 = vsel %vm1021, %v678, 0.0
        %v1053 = vsel %vm1021, %v686, 0.0
        %v1054 = vadd.f32 %v1052, %v1053
        %v1055 = vsel %vm1021, %v694, 0.0
        %v1056 = vadd.f32 %v1054, %v1055
        %v1057 = vsel %vm1021, %v702, 0.0
        %v1058 = vadd.f32 %v1056, %v1057
        %v1059 = vsel %vm1021, %v710, 0.0
        %v1060 = vadd.f32 %v1058, %v1059
        %v1061 = vsel %vm1021, %v718, 0.0
        %v1062 = vadd.f32 %v1060, %v1061
        %v1063 = vsel %vm1021, %v726, 0.0
        %v1064 = vadd.f32 %v1062, %v1063
        %v1065 = vsel %vm1021, %v734, 0.0
        %v1066 = vadd.f32 %v1064, %v1065
        %v1067 = vsel %vm1021, %v681, 0.0
        %v1068 = vsel %vm1021, %v689, 0.0
        %v1069 = vadd.f32 %v1067, %v1068
        %v1070 = vsel %vm1021, %v697, 0.0
        %v1071 = vadd.f32 %v1069, %v1070
        %v1072 = vsel %vm1021, %v705, 0.0
        %v1073 = vadd.f32 %v1071, %v1072
        %v1074 = vsel %vm1021, %v713, 0.0
        %v1075 = vadd.f32 %v1073, %v1074
        %v1076 = vsel %vm1021, %v721, 0.0
        %v1077 = vadd.f32 %v1075, %v1076
        %v1078 = vsel %vm1021, %v729, 0.0
        %v1079 = vadd.f32 %v1077, %v1078
        %v1080 = vsel %vm1021, %v737, 0.0
        %v1081 = vadd.f32 %v1079, %v1080
        %v1082 = vrcp.pop 8.0
        %v1083 = vmul.f32 %v1036, %v1082
        %v1084 = vmul.f32 %v1051, %v1082
        %v1085 = vmul.f32 %v1066, %v1082
        %v1086 = vmul.f32 %v1081, %v1082
        %v1087 = vld [vmem:[%s5] sm:$0xff]
        %v1088 = vld [vmem:[%s2] sm:$0x1]
        %v1090 = vlaneseq
        %v1091 = vshrl.u32 %v1090, 7
        %v1092 = vsub.s32 0, %v1091
        %v1093 = vrot.slane %v1088, %v1092
        %1096 = vrot.lane.b32.xlu0 %v1083, 96
        %v1097 = vpop.permute.xlu0 %1096
        %1098 = vrot.lane.b32.xlu0 %v1084, 96
        %v1099 = vpop.permute.xlu0 %1098
        %1102 = vrot.lane.b32.xlu0 %v1093, 96
        %v1103 = vpop.permute.xlu0 %1102
        %v1106 = vsel %vm814, %v1087, 0
        %1108 = vmatprep.subr.mxu0 0.0
        %1109 = vmatpush1.msra.mxu0 %v1097
        %1110 = vmatprep.subr.mxu0 0.0
        %1111 = vmatpush1.msra.mxu0 %v1099
        %1112 = vmatprep.subr.mxu0 0.0
        %1113 = vmatpush1.msra.mxu0 0.0
        %1114 = vmatprep.subr.mxu0 0.0
        %1115 = vmatpush1.msra.mxu0 0.0
        %1116 = vmatprep.subr.mxu0 0.0
        %1117 = vmatpush1.msra.mxu0 0.0
        %1118 = vmatprep.subr.mxu0 0.0
        %1119 = vmatpush1.msra.mxu0 0.0
        %1120 = vmatprep.subr.mxu0 0.0
        %1121 = vmatpush1.msra.mxu0 0.0
        %1122 = vmatprep.subr.mxu0 0.0
        %1123 = vmatpush1.msra.mxu0 0.0
        %1124 = vmatprep.subr.mxu0 0.0
        %1125 = vmatpush1.msra.mxu0 0.0
        %1126 = vmatprep.subr.mxu0 0.0
        %1127 = vmatpush1.msra.mxu0 0.0
        %1128 = vmatprep.subr.mxu0 0.0
        %1129 = vmatpush1.msra.mxu0 0.0
        %1130 = vmatprep.subr.mxu0 0.0
        %1131 = vmatpush1.msra.mxu0 0.0
        %1132 = vmatprep.subr.mxu0 0.0
        %1133 = vmatpush1.msra.mxu0 0.0
        %1134 = vmatprep.subr.mxu0 0.0
        %1135 = vmatpush1.msra.mxu0 0.0
        %1136 = vmatprep.subr.mxu0 0.0
        %1137 = vmatpush1.msra.mxu0 0.0
        %1138 = vmatprep.subr.mxu0 0.0
        %1139 = vmatpush1.msra.mxu0 0.0
        %1140 = vmatprep.subr.mxu0 0.0
        %1141 = vmatpush1.msra.mxu0 0.0
        %1142 = vmatprep.subr.mxu0 0.0
        %1143 = vmatpush1.msra.mxu0 0.0
        %1144 = vmatprep.subr.mxu0 0.0
        %1145 = vmatpush1.msra.mxu0 0.0
        %1146 = vmatprep.subr.mxu0 0.0
        %1147 = vmatpush1.msra.mxu0 0.0
        %1148 = vmatprep.subr.mxu0 0.0
        %1149 = vmatpush1.msra.mxu0 0.0
        %1150 = vmatprep.subr.mxu0 0.0
        %1151 = vmatpush1.msra.mxu0 0.0
        %1152 = vmatprep.subr.mxu0 0.0
        %1153 = vmatpush1.msra.mxu0 0.0
        %1154 = vmatprep.subr.mxu0 0.0
        %1155 = vmatpush1.msra.mxu0 0.0
        %1156 = vmatprep.subr.mxu0 0.0
        %1157 = vmatpush1.msra.mxu0 0.0
        %1158 = vmatprep.subr.mxu0 0.0
        %1159 = vmatpush1.msra.mxu0 0.0
        %1160 = vmatprep.subr.mxu0 0.0
        %1161 = vmatpush1.msra.mxu0 0.0
        %1162 = vmatprep.subr.mxu0 0.0
        %1163 = vmatpush1.msra.mxu0 0.0
        %1164 = vmatprep.subr.mxu0 0.0
        %1165 = vmatpush1.msra.mxu0 0.0
        %1166 = vmatprep.subr.mxu0 0.0
        %1167 = vmatpush1.msra.mxu0 0.0
        %1168 = vmatprep.subr.mxu0 0.0
        %1169 = vmatpush1.msra.mxu0 0.0
        %1170 = vmatprep.subr.mxu0 0.0
        %1171 = vmatpush1.msra.mxu0 0.0
        %1172 = vmatprep.mubr.f32.mxu0 0.0
        %1173 = vmatmul.mubr.f32.gmra.mrb[0].mxu0 %v1106
        %v1174 = vpop.f32.mrb[0].mxu0
        %v1175 = vadd.f32 %v1103, %v1174
        %v1176 = vpop.f32.mrb[0].mxu0
        %1177 = vdwg.mxu0
        %1180 = vrot.lane.b32.xlu0 %v1085, 96
        %v1181 = vpop.permute.xlu0 %1180
        %1182 = vrot.lane.b32.xlu0 %v1086, 96
        %v1183 = vpop.permute.xlu0 %1182
        %1186 = vmatprep.subr.mxu0 0.0
        %1187 = vmatpush1.msra.mxu0 %v1181
        %1188 = vmatprep.subr.mxu0 0.0
        %1189 = vmatpush1.msra.mxu0 %v1183
        %1190 = vmatprep.subr.mxu0 0.0
        %1191 = vmatpush1.msra.mxu0 0.0
        %1192 = vmatprep.subr.mxu0 0.0
        %1193 = vmatpush1.msra.mxu0 0.0
        %1194 = vmatprep.subr.mxu0 0.0
        %1195 = vmatpush1.msra.mxu0 0.0
        %1196 = vmatprep.subr.mxu0 0.0
        %1197 = vmatpush1.msra.mxu0 0.0
        %1198 = vmatprep.subr.mxu0 0.0
        %1199 = vmatpush1.msra.mxu0 0.0
        %1200 = vmatprep.subr.mxu0 0.0
        %1201 = vmatpush1.msra.mxu0 0.0
        %1202 = vmatprep.subr.mxu0 0.0
        %1203 = vmatpush1.msra.mxu0 0.0
        %1204 = vmatprep.subr.mxu0 0.0
        %1205 = vmatpush1.msra.mxu0 0.0
        %1206 = vmatprep.subr.mxu0 0.0
        %1207 = vmatpush1.msra.mxu0 0.0
        %1208 = vmatprep.subr.mxu0 0.0
        %1209 = vmatpush1.msra.mxu0 0.0
        %1210 = vmatprep.subr.mxu0 0.0
        %1211 = vmatpush1.msra.mxu0 0.0
        %1212 = vmatprep.subr.mxu0 0.0
        %1213 = vmatpush1.msra.mxu0 0.0
        %1214 = vmatprep.subr.mxu0 0.0
        %1215 = vmatpush1.msra.mxu0 0.0
        %1216 = vmatprep.subr.mxu0 0.0
        %1217 = vmatpush1.msra.mxu0 0.0
        %1218 = vmatprep.subr.mxu0 0.0
        %1219 = vmatpush1.msra.mxu0 0.0
        %1220 = vmatprep.subr.mxu0 0.0
        %1221 = vmatpush1.msra.mxu0 0.0
        %1222 = vmatprep.subr.mxu0 0.0
        %1223 = vmatpush1.msra.mxu0 0.0
        %1224 = vmatprep.subr.mxu0 0.0
        %1225 = vmatpush1.msra.mxu0 0.0
        %1226 = vmatprep.subr.mxu0 0.0
        %1227 = vmatpush1.msra.mxu0 0.0
        %1228 = vmatprep.subr.mxu0 0.0
        %1229 = vmatpush1.msra.mxu0 0.0
        %1230 = vmatprep.subr.mxu0 0.0
        %1231 = vmatpush1.msra.mxu0 0.0
        %1232 = vmatprep.subr.mxu0 0.0
        %1233 = vmatpush1.msra.mxu0 0.0
        %1234 = vmatprep.subr.mxu0 0.0
        %1235 = vmatpush1.msra.mxu0 0.0
        %1236 = vmatprep.subr.mxu0 0.0
        %1237 = vmatpush1.msra.mxu0 0.0
        %1238 = vmatprep.subr.mxu0 0.0
        %1239 = vmatpush1.msra.mxu0 0.0
        %1240 = vmatprep.subr.mxu0 0.0
        %1241 = vmatpush1.msra.mxu0 0.0
        %1242 = vmatprep.subr.mxu0 0.0
        %1243 = vmatpush1.msra.mxu0 0.0
        %1244 = vmatprep.subr.mxu0 0.0
        %1245 = vmatpush1.msra.mxu0 0.0
        %1246 = vmatprep.subr.mxu0 0.0
        %1247 = vmatpush1.msra.mxu0 0.0
        %1248 = vmatprep.subr.mxu0 0.0
        %1249 = vmatpush1.msra.mxu0 0.0
        %1250 = vmatprep.mubr.f32.mxu0 0.0
        %1251 = vmatmul.mubr.f32.gmra.mrb[0].mxu0 %v1106
        %v1252 = vpop.f32.mrb[0].mxu0
        %v1253 = vadd.f32 %v1103, %v1252
        %v1254 = vpop.f32.mrb[0].mxu0
        %1255 = vdwg.mxu0
        %v1256 = vmax.f32 %v1175, 0.0
        %v1257 = vmax.f32 %v1253, 0.0
        %v1258 = vld [vmem:[%s6] sm:$0xff]
        %v1259 = vld [vmem:[%s6 + $0x8] sm:$0xff]
        %v1261 = vsel %vm891, %v1258, 0
        %v1264 = vsel %vm891, %v1259, 0
        %1266 = vmatprep.subr.mxu0 0.0
        %1267 = vmatpush1.msra.mxu0 %v1256
        %1268 = vmatprep.subr.mxu0 0.0
        %1269 = vmatpush1.msra.mxu0 0.0
        %1270 = vmatprep.subr.mxu0 0.0
        %1271 = vmatpush1.msra.mxu0 0.0
        %1272 = vmatprep.subr.mxu0 0.0
        %1273 = vmatpush1.msra.mxu0 0.0
        %1274 = vmatprep.subr.mxu0 0.0
        %1275 = vmatpush1.msra.mxu0 0.0
        %1276 = vmatprep.subr.mxu0 0.0
        %1277 = vmatpush1.msra.mxu0 0.0
        %1278 = vmatprep.subr.mxu0 0.0
        %1279 = vmatpush1.msra.mxu0 0.0
        %1280 = vmatprep.subr.mxu0 0.0
        %1281 = vmatpush1.msra.mxu0 0.0
        %1282 = vmatprep.subr.mxu0 0.0
        %1283 = vmatpush1.msra.mxu0 0.0
        %1284 = vmatprep.subr.mxu0 0.0
        %1285 = vmatpush1.msra.mxu0 0.0
        %1286 = vmatprep.subr.mxu0 0.0
        %1287 = vmatpush1.msra.mxu0 0.0
        %1288 = vmatprep.subr.mxu0 0.0
        %1289 = vmatpush1.msra.mxu0 0.0
        %1290 = vmatprep.subr.mxu0 0.0
        %1291 = vmatpush1.msra.mxu0 0.0
        %1292 = vmatprep.subr.mxu0 0.0
        %1293 = vmatpush1.msra.mxu0 0.0
        %1294 = vmatprep.subr.mxu0 0.0
        %1295 = vmatpush1.msra.mxu0 0.0
        %1296 = vmatprep.subr.mxu0 0.0
        %1297 = vmatpush1.msra.mxu0 0.0
        %1298 = vmatprep.subr.mxu0 0.0
        %1299 = vmatpush1.msra.mxu0 0.0
        %1300 = vmatprep.subr.mxu0 0.0
        %1301 = vmatpush1.msra.mxu0 0.0
        %1302 = vmatprep.subr.mxu0 0.0
        %1303 = vmatpush1.msra.mxu0 0.0
        %1304 = vmatprep.subr.mxu0 0.0
        %1305 = vmatpush1.msra.mxu0 0.0
        %1306 = vmatprep.subr.mxu0 0.0
        %1307 = vmatpush1.msra.mxu0 0.0
        %1308 = vmatprep.subr.mxu0 0.0
        %1309 = vmatpush1.msra.mxu0 0.0
        %1310 = vmatprep.subr.mxu0 0.0
        %1311 = vmatpush1.msra.mxu0 0.0
        %1312 = vmatprep.subr.mxu0 0.0
        %1313 = vmatpush1.msra.mxu0 0.0
        %1314 = vmatprep.subr.mxu0 0.0
        %1315 = vmatpush1.msra.mxu0 0.0
        %1316 = vmatprep.subr.mxu0 0.0
        %1317 = vmatpush1.msra.mxu0 0.0
        %1318 = vmatprep.subr.mxu0 0.0
        %1319 = vmatpush1.msra.mxu0 0.0
        %1320 = vmatprep.subr.mxu0 0.0
        %1321 = vmatpush1.msra.mxu0 0.0
        %1322 = vmatprep.subr.mxu0 0.0
        %1323 = vmatpush1.msra.mxu0 0.0
        %1324 = vmatprep.subr.mxu0 0.0
        %1325 = vmatpush1.msra.mxu0 0.0
        %1326 = vmatprep.subr.mxu0 0.0
        %1327 = vmatpush1.msra.mxu0 0.0
        %1328 = vmatprep.subr.mxu0 0.0
        %1329 = vmatpush1.msra.mxu0 0.0
        %1330 = vmatprep.mubr.f32.mxu0 0.0
        %1331 = vmatmul.mubr.f32.gmra.mrb[0].mxu0 %v1261
        %v1332 = vpop.f32.mrb[0].mxu0
        %v1333 = vadd.f32 0.0, %v1332
        %v1334 = vpop.f32.mrb[0].mxu0
        %1335 = vmatprep.mubr.f32.mxu0 0.0
        %1336 = vmatmul.mubr.f32.gmra.mrb[0].mxu0 %v1264
        %v1337 = vpop.f32.mrb[0].mxu0
        %v1338 = vadd.f32 0.0, %v1337
        %v1339 = vpop.f32.mrb[0].mxu0
        %1340 = vdwg.mxu0
        %1341 = vmatprep.subr.mxu0 0.0
        %1342 = vmatpush1.msra.mxu0 %v1257
        %1343 = vmatprep.subr.mxu0 0.0
        %1344 = vmatpush1.msra.mxu0 0.0
        %1345 = vmatprep.subr.mxu0 0.0
        %1346 = vmatpush1.msra.mxu0 0.0
        %1347 = vmatprep.subr.mxu0 0.0
        %1348 = vmatpush1.msra.mxu0 0.0
        %1349 = vmatprep.subr.mxu0 0.0
        %1350 = vmatpush1.msra.mxu0 0.0
        %1351 = vmatprep.subr.mxu0 0.0
        %1352 = vmatpush1.msra.mxu0 0.0
        %1353 = vmatprep.subr.mxu0 0.0
        %1354 = vmatpush1.msra.mxu0 0.0
        %1355 = vmatprep.subr.mxu0 0.0
        %1356 = vmatpush1.msra.mxu0 0.0
        %1357 = vmatprep.subr.mxu0 0.0
        %1358 = vmatpush1.msra.mxu0 0.0
        %1359 = vmatprep.subr.mxu0 0.0
        %1360 = vmatpush1.msra.mxu0 0.0
        %1361 = vmatprep.subr.mxu0 0.0
        %1362 = vmatpush1.msra.mxu0 0.0
        %1363 = vmatprep.subr.mxu0 0.0
        %1364 = vmatpush1.msra.mxu0 0.0
        %1365 = vmatprep.subr.mxu0 0.0
        %1366 = vmatpush1.msra.mxu0 0.0
        %1367 = vmatprep.subr.mxu0 0.0
        %1368 = vmatpush1.msra.mxu0 0.0
        %1369 = vmatprep.subr.mxu0 0.0
        %1370 = vmatpush1.msra.mxu0 0.0
        %1371 = vmatprep.subr.mxu0 0.0
        %1372 = vmatpush1.msra.mxu0 0.0
        %1373 = vmatprep.subr.mxu0 0.0
        %1374 = vmatpush1.msra.mxu0 0.0
        %1375 = vmatprep.subr.mxu0 0.0
        %1376 = vmatpush1.msra.mxu0 0.0
        %1377 = vmatprep.subr.mxu0 0.0
        %1378 = vmatpush1.msra.mxu0 0.0
        %1379 = vmatprep.subr.mxu0 0.0
        %1380 = vmatpush1.msra.mxu0 0.0
        %1381 = vmatprep.subr.mxu0 0.0
        %1382 = vmatpush1.msra.mxu0 0.0
        %1383 = vmatprep.subr.mxu0 0.0
        %1384 = vmatpush1.msra.mxu0 0.0
        %1385 = vmatprep.subr.mxu0 0.0
        %1386 = vmatpush1.msra.mxu0 0.0
        %1387 = vmatprep.subr.mxu0 0.0
        %1388 = vmatpush1.msra.mxu0 0.0
        %1389 = vmatprep.subr.mxu0 0.0
        %1390 = vmatpush1.msra.mxu0 0.0
        %1391 = vmatprep.subr.mxu0 0.0
        %1392 = vmatpush1.msra.mxu0 0.0
        %1393 = vmatprep.subr.mxu0 0.0
        %1394 = vmatpush1.msra.mxu0 0.0
        %1395 = vmatprep.subr.mxu0 0.0
        %1396 = vmatpush1.msra.mxu0 0.0
        %1397 = vmatprep.subr.mxu0 0.0
        %1398 = vmatpush1.msra.mxu0 0.0
        %1399 = vmatprep.subr.mxu0 0.0
        %1400 = vmatpush1.msra.mxu0 0.0
        %1401 = vmatprep.subr.mxu0 0.0
        %1402 = vmatpush1.msra.mxu0 0.0
        %1403 = vmatprep.subr.mxu0 0.0
        %1404 = vmatpush1.msra.mxu0 0.0
        %1405 = vmatprep.mubr.f32.mxu0 0.0
        %1406 = vmatmul.mubr.f32.gmra.mrb[0].mxu0 %v1261
        %v1407 = vpop.f32.mrb[0].mxu0
        %v1408 = vadd.f32 0.0, %v1407
        %v1409 = vpop.f32.mrb[0].mxu0
        %1410 = vmatprep.mubr.f32.mxu0 0.0
        %1411 = vmatmul.mubr.f32.gmra.mrb[0].mxu0 %v1264
        %v1412 = vpop.f32.mrb[0].mxu0
        %v1413 = vadd.f32 0.0, %v1412
        %v1414 = vpop.f32.mrb[0].mxu0
        %1415 = vdwg.mxu0
        %v1416 = vmul.f32 %v1333, 0.4375
        %v1417 = vmul.f32 %v1338, 0.4375
        %v1418 = vmul.f32 %v1333, 0.5625
        %v1419 = vmul.f32 %v1338, 0.5625
        %v1420 = vmul.f32 %v1408, 0.5625
        %v1421 = vmul.f32 %v1413, 0.5625
        %v1422 = vadd.f32 %v1416, %v1418
        %v1423 = vadd.f32 %v1417, %v1419
        %v1424 = vadd.f32 %v1416, %v1420
        %v1425 = vadd.f32 %v1417, %v1421
        %v1426 = vmul.f32 %v1333, 0.3125
        %v1427 = vmul.f32 %v1338, 0.3125
        %v1428 = vmul.f32 %v1333, 0.6875
        %v1429 = vmul.f32 %v1338, 0.6875
        %v1430 = vmul.f32 %v1408, 0.6875
        %v1431 = vmul.f32 %v1413, 0.6875
        %v1432 = vadd.f32 %v1426, %v1428
        %v1433 = vadd.f32 %v1427, %v1429
        %v1434 = vadd.f32 %v1426, %v1430
        %v1435 = vadd.f32 %v1427, %v1431
        %v1436 = vmul.f32 %v1333, 0.1875
        %v1437 = vmul.f32 %v1338, 0.1875
        %v1438 = vmul.f32 %v1333, 0.8125
        %v1439 = vmul.f32 %v1338, 0.8125
        %v1440 = vmul.f32 %v1408, 0.8125
        %v1441 = vmul.f32 %v1413, 0.8125
        %v1442 = vadd.f32 %v1436, %v1438
        %v1443 = vadd.f32 %v1437, %v1439
        %v1444 = vadd.f32 %v1436, %v1440
        %v1445 = vadd.f32 %v1437, %v1441
        %v1446 = vmul.f32 %v1333, 0.0625
        %v1447 = vmul.f32 %v1338, 0.0625
        %v1448 = vmul.f32 %v1333, 0.9375
        %v1449 = vmul.f32 %v1338, 0.9375
        %v1450 = vmul.f32 %v1408, 0.9375
        %v1451 = vmul.f32 %v1413, 0.9375
        %v1452 = vadd.f32 %v1446, %v1448
        %v1453 = vadd.f32 %v1447, %v1449
        %v1454 = vadd.f32 %v1446, %v1450
        %v1455 = vadd.f32 %v1447, %v1451
        %v1456 = vmul.f32 %v1408, 0.0625
        %v1457 = vmul.f32 %v1413, 0.0625
        %v1458 = vadd.f32 %v1448, %v1456
        %v1459 = vadd.f32 %v1449, %v1457
        %v1460 = vadd.f32 %v1450, %v1456
        %v1461 = vadd.f32 %v1451, %v1457
        %v1462 = vmul.f32 %v1408, 0.1875
        %v1463 = vmul.f32 %v1413, 0.1875
        %v1464 = vadd.f32 %v1438, %v1462
        %v1465 = vadd.f32 %v1439, %v1463
        %v1466 = vadd.f32 %v1440, %v1462
        %v1467 = vadd.f32 %v1441, %v1463
        %v1468 = vmul.f32 %v1408, 0.3125
        %v1469 = vmul.f32 %v1413, 0.3125
        %v1470 = vadd.f32 %v1428, %v1468
        %v1471 = vadd.f32 %v1429, %v1469
        %v1472 = vadd.f32 %v1430, %v1468
        %v1473 = vadd.f32 %v1431, %v1469
        %v1474 = vmul.f32 %v1408, 0.4375
        %v1475 = vmul.f32 %v1413, 0.4375
        %v1476 = vadd.f32 %v1418, %v1474
        %v1477 = vadd.f32 %v1419, %v1475
        %v1478 = vadd.f32 %v1420, %v1474
        %v1479 = vadd.f32 %v1421, %v1475
        %vm1480 = vcmask 785920
        %v1481 = vsel %vm1480, %v614, 0.0
        %v1482 = vsel %vm1480, %v622, 0.0
        %v1483 = vadd.f32 %v1481, %v1482
        %v1484 = vsel %vm1480, %v630, 0.0
        %v1485 = vadd.f32 %v1483, %v1484
        %v1486 = vsel %vm1480, %v638, 0.0
        %v1487 = vadd.f32 %v1485, %v1486
        %v1488 = vsel %vm1480, %v617, 0.0
        %v1489 = vsel %vm1480, %v625, 0.0
        %v1490 = vadd.f32 %v1488, %v1489
        %v1491 = vsel %vm1480, %v633, 0.0
        %v1492 = vadd.f32 %v1490, %v1491
        %v1493 = vsel %vm1480, %v641, 0.0
        %v1494 = vadd.f32 %v1492, %v1493
        %v1495 = vsel %vm1480, %v646, 0.0
        %v1496 = vsel %vm1480, %v654, 0.0
        %v1497 = vadd.f32 %v1495, %v1496
        %v1498 = vsel %vm1480, %v662, 0.0
        %v1499 = vadd.f32 %v1497, %v1498
        %v1500 = vsel %vm1480, %v670, 0.0
        %v1501 = vadd.f32 %v1499, %v1500
        %v1502 = vsel %vm1480, %v649, 0.0
        %v1503 = vsel %vm1480, %v657, 0.0
        %v1504 = vadd.f32 %v1502, %v1503
        %v1505 = vsel %vm1480, %v665, 0.0
        %v1506 = vadd.f32 %v1504, %v1505
        %v1507 = vsel %vm1480, %v673, 0.0
        %v1508 = vadd.f32 %v1506, %v1507
        %v1509 = vsel %vm1480, %v678, 0.0
        %v1510 = vsel %vm1480, %v686, 0.0
        %v1511 = vadd.f32 %v1509, %v1510
        %v1512 = vsel %vm1480, %v694, 0.0
        %v1513 = vadd.f32 %v1511, %v1512
        %v1514 = vsel %vm1480, %v702, 0.0
        %v1515 = vadd.f32 %v1513, %v1514
        %v1516 = vsel %vm1480, %v681, 0.0
        %v1517 = vsel %vm1480, %v689, 0.0
        %v1518 = vadd.f32 %v1516, %v1517
        %v1519 = vsel %vm1480, %v697, 0.0
        %v1520 = vadd.f32 %v1518, %v1519
        %v1521 = vsel %vm1480, %v705, 0.0
        %v1522 = vadd.f32 %v1520, %v1521
        %v1523 = vsel %vm1480, %v710, 0.0
        %v1524 = vsel %vm1480, %v718, 0.0
        %v1525 = vadd.f32 %v1523, %v1524
        %v1526 = vsel %vm1480, %v726, 0.0
        %v1527 = vadd.f32 %v1525, %v1526
        %v1528 = vsel %vm1480, %v734, 0.0
        %v1529 = vadd.f32 %v1527, %v1528
        %v1530 = vsel %vm1480, %v713, 0.0
        %v1531 = vsel %vm1480, %v721, 0.0
        %v1532 = vadd.f32 %v1530, %v1531
        %v1533 = vsel %vm1480, %v729, 0.0
        %v1534 = vadd.f32 %v1532, %v1533
        %v1535 = vsel %vm1480, %v737, 0.0
        %v1536 = vadd.f32 %v1534, %v1535
        %v1537 = vrcp.pop 4.0
        %v1538 = vmul.f32 %v1487, %v1537
        %v1539 = vmul.f32 %v1494, %v1537
        %v1540 = vmul.f32 %v1501, %v1537
        %v1541 = vmul.f32 %v1508, %v1537
        %v1542 = vmul.f32 %v1515, %v1537
        %v1543 = vmul.f32 %v1522, %v1537
        %v1544 = vmul.f32 %v1529, %v1537
        %v1545 = vmul.f32 %v1536, %v1537
        %v1546 = vld [vmem:[%s7] sm:$0xff]
        %v1547 = vld [vmem:[%s2] sm:$0x1]
        %v1549 = vlaneseq
        %v1550 = vshrl.u32 %v1549, 7
        %v1551 = vsub.s32 0, %v1550
        %v1552 = vrot.slane %v1547, %v1551
        %1555 = vrot.lane.b32.xlu0 %v1538, 64
        %v1556 = vpop.permute.xlu0 %1555
        %1557 = vrot.lane.b32.xlu0 %v1539, 64
        %v1558 = vpop.permute.xlu0 %1557
        %1561 = vrot.lane.b32.xlu0 %v1552, 64
        %v1562 = vpop.permute.xlu0 %1561
        %v1565 = vsel %vm814, %v1546, 0
        %1567 = vmatprep.subr.mxu0 0.0
        %1568 = vmatpush1.msra.mxu0 %v1556
        %1569 = vmatprep.subr.mxu0 0.0
        %1570 = vmatpush1.msra.mxu0 %v1558
        %1571 = vmatprep.subr.mxu0 0.0
        %1572 = vmatpush1.msra.mxu0 0.0
        %1573 = vmatprep.subr.mxu0 0.0
        %1574 = vmatpush1.msra.mxu0 0.0
        %1575 = vmatprep.subr.mxu0 0.0
        %1576 = vmatpush1.msra.mxu0 0.0
        %1577 = vmatprep.subr.mxu0 0.0
        %1578 = vmatpush1.msra.mxu0 0.0
        %1579 = vmatprep.subr.mxu0 0.0
        %1580 = vmatpush1.msra.mxu0 0.0
        %1581 = vmatprep.subr.mxu0 0.0
        %1582 = vmatpush1.msra.mxu0 0.0
        %1583 = vmatprep.subr.mxu0 0.0
        %1584 = vmatpush1.msra.mxu0 0.0
        %1585 = vmatprep.subr.mxu0 0.0
        %1586 = vmatpush1.msra.mxu0 0.0
        %1587 = vmatprep.subr.mxu0 0.0
        %1588 = vmatpush1.msra.mxu0 0.0
        %1589 = vmatprep.subr.mxu0 0.0
        %1590 = vmatpush1.msra.mxu0 0.0
        %1591 = vmatprep.subr.mxu0 0.0
        %1592 = vmatpush1.msra.mxu0 0.0
        %1593 = vmatprep.subr.mxu0 0.0
        %1594 = vmatpush1.msra.mxu0 0.0
        %1595 = vmatprep.subr.mxu0 0.0
        %1596 = vmatpush1.msra.mxu0 0.0
        %1597 = vmatprep.subr.mxu0 0.0
        %1598 = vmatpush1.msra.mxu0 0.0
        %1599 = vmatprep.subr.mxu0 0.0
        %1600 = vmatpush1.msra.mxu0 0.0
        %1601 = vmatprep.subr.mxu0 0.0
        %1602 = vmatpush1.msra.mxu0 0.0
        %1603 = vmatprep.subr.mxu0 0.0
        %1604 = vmatpush1.msra.mxu0 0.0
        %1605 = vmatprep.subr.mxu0 0.0
        %1606 = vmatpush1.msra.mxu0 0.0
        %1607 = vmatprep.subr.mxu0 0.0
        %1608 = vmatpush1.msra.mxu0 0.0
        %1609 = vmatprep.subr.mxu0 0.0
        %1610 = vmatpush1.msra.mxu0 0.0
        %1611 = vmatprep.subr.mxu0 0.0
        %1612 = vmatpush1.msra.mxu0 0.0
        %1613 = vmatprep.subr.mxu0 0.0
        %1614 = vmatpush1.msra.mxu0 0.0
        %1615 = vmatprep.subr.mxu0 0.0
        %1616 = vmatpush1.msra.mxu0 0.0
        %1617 = vmatprep.subr.mxu0 0.0
        %1618 = vmatpush1.msra.mxu0 0.0
        %1619 = vmatprep.subr.mxu0 0.0
        %1620 = vmatpush1.msra.mxu0 0.0
        %1621 = vmatprep.subr.mxu0 0.0
        %1622 = vmatpush1.msra.mxu0 0.0
        %1623 = vmatprep.subr.mxu0 0.0
        %1624 = vmatpush1.msra.mxu0 0.0
        %1625 = vmatprep.subr.mxu0 0.0
        %1626 = vmatpush1.msra.mxu0 0.0
        %1627 = vmatprep.subr.mxu0 0.0
        %1628 = vmatpush1.msra.mxu0 0.0
        %1629 = vmatprep.subr.mxu0 0.0
        %1630 = vmatpush1.msra.mxu0 0.0
        %1631 = vmatprep.mubr.f32.mxu0 0.0
        %1632 = vmatmul.mubr.f32.gmra.mrb[0].mxu0 %v1565
        %v1633 = vpop.f32.mrb[0].mxu0
        %v1634 = vadd.f32 %v1562, %v1633
        %v1635 = vpop.f32.mrb[0].mxu0
        %1636 = vdwg.mxu0
        %1639 = vrot.lane.b32.xlu0 %v1540, 64
        %v1640 = vpop.permute.xlu0 %1639
        %1641 = vrot.lane.b32.xlu0 %v1541, 64
        %v1642 = vpop.permute.xlu0 %1641
        %1645 = vmatprep.subr.mxu0 0.0
        %1646 = vmatpush1.msra.mxu0 %v1640
        %1647 = vmatprep.subr.mxu0 0.0
        %1648 = vmatpush1.msra.mxu0 %v1642
        %1649 = vmatprep.subr.mxu0 0.0
        %1650 = vmatpush1.msra.mxu0 0.0
        %1651 = vmatprep.subr.mxu0 0.0
        %1652 = vmatpush1.msra.mxu0 0.0
        %1653 = vmatprep.subr.mxu0 0.0
        %1654 = vmatpush1.msra.mxu0 0.0
        %1655 = vmatprep.subr.mxu0 0.0
        %1656 = vmatpush1.msra.mxu0 0.0
        %1657 = vmatprep.subr.mxu0 0.0
        %1658 = vmatpush1.msra.mxu0 0.0
        %1659 = vmatprep.subr.mxu0 0.0
        %1660 = vmatpush1.msra.mxu0 0.0
        %1661 = vmatprep.subr.mxu0 0.0
        %1662 = vmatpush1.msra.mxu0 0.0
        %1663 = vmatprep.subr.mxu0 0.0
        %1664 = vmatpush1.msra.mxu0 0.0
        %1665 = vmatprep.subr.mxu0 0.0
        %1666 = vmatpush1.msra.mxu0 0.0
        %1667 = vmatprep.subr.mxu0 0.0
        %1668 = vmatpush1.msra.mxu0 0.0
        %1669 = vmatprep.subr.mxu0 0.0
        %1670 = vmatpush1.msra.mxu0 0.0
        %1671 = vmatprep.subr.mxu0 0.0
        %1672 = vmatpush1.msra.mxu0 0.0
        %1673 = vmatprep.subr.mxu0 0.0
        %1674 = vmatpush1.msra.mxu0 0.0
        %1675 = vmatprep.subr.mxu0 0.0
        %1676 = vmatpush1.msra.mxu0 0.0
        %1677 = vmatprep.subr.mxu0 0.0
        %1678 = vmatpush1.msra.mxu0 0.0
        %1679 = vmatprep.subr.mxu0 0.0
        %1680 = vmatpush1.msra.mxu0 0.0
        %1681 = vmatprep.subr.mxu0 0.0
        %1682 = vmatpush1.msra.mxu0 0.0
        %1683 = vmatprep.subr.mxu0 0.0
        %1684 = vmatpush1.msra.mxu0 0.0
        %1685 = vmatprep.subr.mxu0 0.0
        %1686 = vmatpush1.msra.mxu0 0.0
        %1687 = vmatprep.subr.mxu0 0.0
        %1688 = vmatpush1.msra.mxu0 0.0
        %1689 = vmatprep.subr.mxu0 0.0
        %1690 = vmatpush1.msra.mxu0 0.0
        %1691 = vmatprep.subr.mxu0 0.0
        %1692 = vmatpush1.msra.mxu0 0.0
        %1693 = vmatprep.subr.mxu0 0.0
        %1694 = vmatpush1.msra.mxu0 0.0
        %1695 = vmatprep.subr.mxu0 0.0
        %1696 = vmatpush1.msra.mxu0 0.0
        %1697 = vmatprep.subr.mxu0 0.0
        %1698 = vmatpush1.msra.mxu0 0.0
        %1699 = vmatprep.subr.mxu0 0.0
        %1700 = vmatpush1.msra.mxu0 0.0
        %1701 = vmatprep.subr.mxu0 0.0
        %1702 = vmatpush1.msra.mxu0 0.0
        %1703 = vmatprep.subr.mxu0 0.0
        %1704 = vmatpush1.msra.mxu0 0.0
        %1705 = vmatprep.subr.mxu0 0.0
        %1706 = vmatpush1.msra.mxu0 0.0
        %1707 = vmatprep.subr.mxu0 0.0
        %1708 = vmatpush1.msra.mxu0 0.0
        %1709 = vmatprep.mubr.f32.mxu0 0.0
        %1710 = vmatmul.mubr.f32.gmra.mrb[0].mxu0 %v1565
        %v1711 = vpop.f32.mrb[0].mxu0
        %v1712 = vadd.f32 %v1562, %v1711
        %v1713 = vpop.f32.mrb[0].mxu0
        %1714 = vdwg.mxu0
        %1717 = vrot.lane.b32.xlu0 %v1542, 64
        %v1718 = vpop.permute.xlu0 %1717
        %1719 = vrot.lane.b32.xlu0 %v1543, 64
        %v1720 = vpop.permute.xlu0 %1719
        %1723 = vmatprep.subr.mxu0 0.0
        %1724 = vmatpush1.msra.mxu0 %v1718
        %1725 = vmatprep.subr.mxu0 0.0
        %1726 = vmatpush1.msra.mxu0 %v1720
        %1727 = vmatprep.subr.mxu0 0.0
        %1728 = vmatpush1.msra.mxu0 0.0
        %1729 = vmatprep.subr.mxu0 0.0
        %1730 = vmatpush1.msra.mxu0 0.0
        %1731 = vmatprep.subr.mxu0 0.0
        %1732 = vmatpush1.msra.mxu0 0.0
        %1733 = vmatprep.subr.mxu0 0.0
        %1734 = vmatpush1.msra.mxu0 0.0
        %1735 = vmatprep.subr.mxu0 0.0
        %1736 = vmatpush1.msra.mxu0 0.0
        %1737 = vmatprep.subr.mxu0 0.0
        %1738 = vmatpush1.msra.mxu0 0.0
        %1739 = vmatprep.subr.mxu0 0.0
        %1740 = vmatpush1.msra.mxu0 0.0
        %1741 = vmatprep.subr.mxu0 0.0
        %1742 = vmatpush1.msra.mxu0 0.0
        %1743 = vmatprep.subr.mxu0 0.0
        %1744 = vmatpush1.msra.mxu0 0.0
        %1745 = vmatprep.subr.mxu0 0.0
        %1746 = vmatpush1.msra.mxu0 0.0
        %1747 = vmatprep.subr.mxu0 0.0
        %1748 = vmatpush1.msra.mxu0 0.0
        %1749 = vmatprep.subr.mxu0 0.0
        %1750 = vmatpush1.msra.mxu0 0.0
        %1751 = vmatprep.subr.mxu0 0.0
        %1752 = vmatpush1.msra.mxu0 0.0
        %1753 = vmatprep.subr.mxu0 0.0
        %1754 = vmatpush1.msra.mxu0 0.0
        %1755 = vmatprep.subr.mxu0 0.0
        %1756 = vmatpush1.msra.mxu0 0.0
        %1757 = vmatprep.subr.mxu0 0.0
        %1758 = vmatpush1.msra.mxu0 0.0
        %1759 = vmatprep.subr.mxu0 0.0
        %1760 = vmatpush1.msra.mxu0 0.0
        %1761 = vmatprep.subr.mxu0 0.0
        %1762 = vmatpush1.msra.mxu0 0.0
        %1763 = vmatprep.subr.mxu0 0.0
        %1764 = vmatpush1.msra.mxu0 0.0
        %1765 = vmatprep.subr.mxu0 0.0
        %1766 = vmatpush1.msra.mxu0 0.0
        %1767 = vmatprep.subr.mxu0 0.0
        %1768 = vmatpush1.msra.mxu0 0.0
        %1769 = vmatprep.subr.mxu0 0.0
        %1770 = vmatpush1.msra.mxu0 0.0
        %1771 = vmatprep.subr.mxu0 0.0
        %1772 = vmatpush1.msra.mxu0 0.0
        %1773 = vmatprep.subr.mxu0 0.0
        %1774 = vmatpush1.msra.mxu0 0.0
        %1775 = vmatprep.subr.mxu0 0.0
        %1776 = vmatpush1.msra.mxu0 0.0
        %1777 = vmatprep.subr.mxu0 0.0
        %1778 = vmatpush1.msra.mxu0 0.0
        %1779 = vmatprep.subr.mxu0 0.0
        %1780 = vmatpush1.msra.mxu0 0.0
        %1781 = vmatprep.subr.mxu0 0.0
        %1782 = vmatpush1.msra.mxu0 0.0
        %1783 = vmatprep.subr.mxu0 0.0
        %1784 = vmatpush1.msra.mxu0 0.0
        %1785 = vmatprep.subr.mxu0 0.0
        %1786 = vmatpush1.msra.mxu0 0.0
        %1787 = vmatprep.mubr.f32.mxu0 0.0
        %1788 = vmatmul.mubr.f32.gmra.mrb[0].mxu0 %v1565
        %v1789 = vpop.f32.mrb[0].mxu0
        %v1790 = vadd.f32 %v1562, %v1789
        %v1791 = vpop.f32.mrb[0].mxu0
        %1792 = vdwg.mxu0
        %1795 = vrot.lane.b32.xlu0 %v1544, 64
        %v1796 = vpop.permute.xlu0 %1795
        %1797 = vrot.lane.b32.xlu0 %v1545, 64
        %v1798 = vpop.permute.xlu0 %1797
        %1801 = vmatprep.subr.mxu0 0.0
        %1802 = vmatpush1.msra.mxu0 %v1796
        %1803 = vmatprep.subr.mxu0 0.0
        %1804 = vmatpush1.msra.mxu0 %v1798
        %1805 = vmatprep.subr.mxu0 0.0
        %1806 = vmatpush1.msra.mxu0 0.0
        %1807 = vmatprep.subr.mxu0 0.0
        %1808 = vmatpush1.msra.mxu0 0.0
        %1809 = vmatprep.subr.mxu0 0.0
        %1810 = vmatpush1.msra.mxu0 0.0
        %1811 = vmatprep.subr.mxu0 0.0
        %1812 = vmatpush1.msra.mxu0 0.0
        %1813 = vmatprep.subr.mxu0 0.0
        %1814 = vmatpush1.msra.mxu0 0.0
        %1815 = vmatprep.subr.mxu0 0.0
        %1816 = vmatpush1.msra.mxu0 0.0
        %1817 = vmatprep.subr.mxu0 0.0
        %1818 = vmatpush1.msra.mxu0 0.0
        %1819 = vmatprep.subr.mxu0 0.0
        %1820 = vmatpush1.msra.mxu0 0.0
        %1821 = vmatprep.subr.mxu0 0.0
        %1822 = vmatpush1.msra.mxu0 0.0
        %1823 = vmatprep.subr.mxu0 0.0
        %1824 = vmatpush1.msra.mxu0 0.0
        %1825 = vmatprep.subr.mxu0 0.0
        %1826 = vmatpush1.msra.mxu0 0.0
        %1827 = vmatprep.subr.mxu0 0.0
        %1828 = vmatpush1.msra.mxu0 0.0
        %1829 = vmatprep.subr.mxu0 0.0
        %1830 = vmatpush1.msra.mxu0 0.0
        %1831 = vmatprep.subr.mxu0 0.0
        %1832 = vmatpush1.msra.mxu0 0.0
        %1833 = vmatprep.subr.mxu0 0.0
        %1834 = vmatpush1.msra.mxu0 0.0
        %1835 = vmatprep.subr.mxu0 0.0
        %1836 = vmatpush1.msra.mxu0 0.0
        %1837 = vmatprep.subr.mxu0 0.0
        %1838 = vmatpush1.msra.mxu0 0.0
        %1839 = vmatprep.subr.mxu0 0.0
        %1840 = vmatpush1.msra.mxu0 0.0
        %1841 = vmatprep.subr.mxu0 0.0
        %1842 = vmatpush1.msra.mxu0 0.0
        %1843 = vmatprep.subr.mxu0 0.0
        %1844 = vmatpush1.msra.mxu0 0.0
        %1845 = vmatprep.subr.mxu0 0.0
        %1846 = vmatpush1.msra.mxu0 0.0
        %1847 = vmatprep.subr.mxu0 0.0
        %1848 = vmatpush1.msra.mxu0 0.0
        %1849 = vmatprep.subr.mxu0 0.0
        %1850 = vmatpush1.msra.mxu0 0.0
        %1851 = vmatprep.subr.mxu0 0.0
        %1852 = vmatpush1.msra.mxu0 0.0
        %1853 = vmatprep.subr.mxu0 0.0
        %1854 = vmatpush1.msra.mxu0 0.0
        %1855 = vmatprep.subr.mxu0 0.0
        %1856 = vmatpush1.msra.mxu0 0.0
        %1857 = vmatprep.subr.mxu0 0.0
        %1858 = vmatpush1.msra.mxu0 0.0
        %1859 = vmatprep.subr.mxu0 0.0
        %1860 = vmatpush1.msra.mxu0 0.0
        %1861 = vmatprep.subr.mxu0 0.0
        %1862 = vmatpush1.msra.mxu0 0.0
        %1863 = vmatprep.subr.mxu0 0.0
        %1864 = vmatpush1.msra.mxu0 0.0
        %1865 = vmatprep.mubr.f32.mxu0 0.0
        %1866 = vmatmul.mubr.f32.gmra.mrb[0].mxu0 %v1565
        %v1867 = vpop.f32.mrb[0].mxu0
        %v1868 = vadd.f32 %v1562, %v1867
        %v1869 = vpop.f32.mrb[0].mxu0
        %1870 = vdwg.mxu0
        %v1871 = vmax.f32 %v1634, 0.0
        %v1872 = vmax.f32 %v1712, 0.0
        %v1873 = vmax.f32 %v1790, 0.0
        %v1874 = vmax.f32 %v1868, 0.0
        %v1875 = vld [vmem:[%s8] sm:$0xff]
        %v1876 = vld [vmem:[%s8 + $0x8] sm:$0xff]
        %v1878 = vsel %vm891, %v1875, 0
        %v1881 = vsel %vm891, %v1876, 0
        %1883 = vmatprep.subr.mxu0 0.0
        %1884 = vmatpush1.msra.mxu0 %v1871
        %1885 = vmatprep.subr.mxu0 0.0
        %1886 = vmatpush1.msra.mxu0 0.0
        %1887 = vmatprep.subr.mxu0 0.0
        %1888 = vmatpush1.msra.mxu0 0.0
        %1889 = vmatprep.subr.mxu0 0.0
        %1890 = vmatpush1.msra.mxu0 0.0
        %1891 = vmatprep.subr.mxu0 0.0
        %1892 = vmatpush1.msra.mxu0 0.0
        %1893 = vmatprep.subr.mxu0 0.0
        %1894 = vmatpush1.msra.mxu0 0.0
        %1895 = vmatprep.subr.mxu0 0.0
        %1896 = vmatpush1.msra.mxu0 0.0
        %1897 = vmatprep.subr.mxu0 0.0
        %1898 = vmatpush1.msra.mxu0 0.0
        %1899 = vmatprep.subr.mxu0 0.0
        %1900 = vmatpush1.msra.mxu0 0.0
        %1901 = vmatprep.subr.mxu0 0.0
        %1902 = vmatpush1.msra.mxu0 0.0
        %1903 = vmatprep.subr.mxu0 0.0
        %1904 = vmatpush1.msra.mxu0 0.0
        %1905 = vmatprep.subr.mxu0 0.0
        %1906 = vmatpush1.msra.mxu0 0.0
        %1907 = vmatprep.subr.mxu0 0.0
        %1908 = vmatpush1.msra.mxu0 0.0
        %1909 = vmatprep.subr.mxu0 0.0
        %1910 = vmatpush1.msra.mxu0 0.0
        %1911 = vmatprep.subr.mxu0 0.0
        %1912 = vmatpush1.msra.mxu0 0.0
        %1913 = vmatprep.subr.mxu0 0.0
        %1914 = vmatpush1.msra.mxu0 0.0
        %1915 = vmatprep.subr.mxu0 0.0
        %1916 = vmatpush1.msra.mxu0 0.0
        %1917 = vmatprep.subr.mxu0 0.0
        %1918 = vmatpush1.msra.mxu0 0.0
        %1919 = vmatprep.subr.mxu0 0.0
        %1920 = vmatpush1.msra.mxu0 0.0
        %1921 = vmatprep.subr.mxu0 0.0
        %1922 = vmatpush1.msra.mxu0 0.0
        %1923 = vmatprep.subr.mxu0 0.0
        %1924 = vmatpush1.msra.mxu0 0.0
        %1925 = vmatprep.subr.mxu0 0.0
        %1926 = vmatpush1.msra.mxu0 0.0
        %1927 = vmatprep.subr.mxu0 0.0
        %1928 = vmatpush1.msra.mxu0 0.0
        %1929 = vmatprep.subr.mxu0 0.0
        %1930 = vmatpush1.msra.mxu0 0.0
        %1931 = vmatprep.subr.mxu0 0.0
        %1932 = vmatpush1.msra.mxu0 0.0
        %1933 = vmatprep.subr.mxu0 0.0
        %1934 = vmatpush1.msra.mxu0 0.0
        %1935 = vmatprep.subr.mxu0 0.0
        %1936 = vmatpush1.msra.mxu0 0.0
        %1937 = vmatprep.subr.mxu0 0.0
        %1938 = vmatpush1.msra.mxu0 0.0
        %1939 = vmatprep.subr.mxu0 0.0
        %1940 = vmatpush1.msra.mxu0 0.0
        %1941 = vmatprep.subr.mxu0 0.0
        %1942 = vmatpush1.msra.mxu0 0.0
        %1943 = vmatprep.subr.mxu0 0.0
        %1944 = vmatpush1.msra.mxu0 0.0
        %1945 = vmatprep.subr.mxu0 0.0
        %1946 = vmatpush1.msra.mxu0 0.0
        %1947 = vmatprep.mubr.f32.mxu0 0.0
        %1948 = vmatmul.mubr.f32.gmra.mrb[0].mxu0 %v1878
        %v1949 = vpop.f32.mrb[0].mxu0
        %v1950 = vadd.f32 0.0, %v1949
        %v1951 = vpop.f32.mrb[0].mxu0
        %1952 = vmatprep.mubr.f32.mxu0 0.0
        %1953 = vmatmul.mubr.f32.gmra.mrb[0].mxu0 %v1881
        %v1954 = vpop.f32.mrb[0].mxu0
        %v1955 = vadd.f32 0.0, %v1954
        %v1956 = vpop.f32.mrb[0].mxu0
        %1957 = vdwg.mxu0
        %1958 = vmatprep.subr.mxu0 0.0
        %1959 = vmatpush1.msra.mxu0 %v1872
        %1960 = vmatprep.subr.mxu0 0.0
        %1961 = vmatpush1.msra.mxu0 0.0
        %1962 = vmatprep.subr.mxu0 0.0
        %1963 = vmatpush1.msra.mxu0 0.0
        %1964 = vmatprep.subr.mxu0 0.0
        %1965 = vmatpush1.msra.mxu0 0.0
        %1966 = vmatprep.subr.mxu0 0.0
        %1967 = vmatpush1.msra.mxu0 0.0
        %1968 = vmatprep.subr.mxu0 0.0
        %1969 = vmatpush1.msra.mxu0 0.0
        %1970 = vmatprep.subr.mxu0 0.0
        %1971 = vmatpush1.msra.mxu0 0.0
        %1972 = vmatprep.subr.mxu0 0.0
        %1973 = vmatpush1.msra.mxu0 0.0
        %1974 = vmatprep.subr.mxu0 0.0
        %1975 = vmatpush1.msra.mxu0 0.0
        %1976 = vmatprep.subr.mxu0 0.0
        %1977 = vmatpush1.msra.mxu0 0.0
        %1978 = vmatprep.subr.mxu0 0.0
        %1979 = vmatpush1.msra.mxu0 0.0
        %1980 = vmatprep.subr.mxu0 0.0
        %1981 = vmatpush1.msra.mxu0 0.0
        %1982 = vmatprep.subr.mxu0 0.0
        %1983 = vmatpush1.msra.mxu0 0.0
        %1984 = vmatprep.subr.mxu0 0.0
        %1985 = vmatpush1.msra.mxu0 0.0
        %1986 = vmatprep.subr.mxu0 0.0
        %1987 = vmatpush1.msra.mxu0 0.0
        %1988 = vmatprep.subr.mxu0 0.0
        %1989 = vmatpush1.msra.mxu0 0.0
        %1990 = vmatprep.subr.mxu0 0.0
        %1991 = vmatpush1.msra.mxu0 0.0
        %1992 = vmatprep.subr.mxu0 0.0
        %1993 = vmatpush1.msra.mxu0 0.0
        %1994 = vmatprep.subr.mxu0 0.0
        %1995 = vmatpush1.msra.mxu0 0.0
        %1996 = vmatprep.subr.mxu0 0.0
        %1997 = vmatpush1.msra.mxu0 0.0
        %1998 = vmatprep.subr.mxu0 0.0
        %1999 = vmatpush1.msra.mxu0 0.0
        %2000 = vmatprep.subr.mxu0 0.0
        %2001 = vmatpush1.msra.mxu0 0.0
        %2002 = vmatprep.subr.mxu0 0.0
        %2003 = vmatpush1.msra.mxu0 0.0
        %2004 = vmatprep.subr.mxu0 0.0
        %2005 = vmatpush1.msra.mxu0 0.0
        %2006 = vmatprep.subr.mxu0 0.0
        %2007 = vmatpush1.msra.mxu0 0.0
        %2008 = vmatprep.subr.mxu0 0.0
        %2009 = vmatpush1.msra.mxu0 0.0
        %2010 = vmatprep.subr.mxu0 0.0
        %2011 = vmatpush1.msra.mxu0 0.0
        %2012 = vmatprep.subr.mxu0 0.0
        %2013 = vmatpush1.msra.mxu0 0.0
        %2014 = vmatprep.subr.mxu0 0.0
        %2015 = vmatpush1.msra.mxu0 0.0
        %2016 = vmatprep.subr.mxu0 0.0
        %2017 = vmatpush1.msra.mxu0 0.0
        %2018 = vmatprep.subr.mxu0 0.0
        %2019 = vmatpush1.msra.mxu0 0.0
        %2020 = vmatprep.subr.mxu0 0.0
        %2021 = vmatpush1.msra.mxu0 0.0
        %2022 = vmatprep.mubr.f32.mxu0 0.0
        %2023 = vmatmul.mubr.f32.gmra.mrb[0].mxu0 %v1878
        %v2024 = vpop.f32.mrb[0].mxu0
        %v2025 = vadd.f32 0.0, %v2024
        %v2026 = vpop.f32.mrb[0].mxu0
        %2027 = vmatprep.mubr.f32.mxu0 0.0
        %2028 = vmatmul.mubr.f32.gmra.mrb[0].mxu0 %v1881
        %v2029 = vpop.f32.mrb[0].mxu0
        %v2030 = vadd.f32 0.0, %v2029
        %v2031 = vpop.f32.mrb[0].mxu0
        %2032 = vdwg.mxu0
        %2033 = vmatprep.subr.mxu0 0.0
        %2034 = vmatpush1.msra.mxu0 %v1873
        %2035 = vmatprep.subr.mxu0 0.0
        %2036 = vmatpush1.msra.mxu0 0.0
        %2037 = vmatprep.subr.mxu0 0.0
        %2038 = vmatpush1.msra.mxu0 0.0
        %2039 = vmatprep.subr.mxu0 0.0
        %2040 = vmatpush1.msra.mxu0 0.0
        %2041 = vmatprep.subr.mxu0 0.0
        %2042 = vmatpush1.msra.mxu0 0.0
        %2043 = vmatprep.subr.mxu0 0.0
        %2044 = vmatpush1.msra.mxu0 0.0
        %2045 = vmatprep.subr.mxu0 0.0
        %2046 = vmatpush1.msra.mxu0 0.0
        %2047 = vmatprep.subr.mxu0 0.0
        %2048 = vmatpush1.msra.mxu0 0.0
        %2049 = vmatprep.subr.mxu0 0.0
        %2050 = vmatpush1.msra.mxu0 0.0
        %2051 = vmatprep.subr.mxu0 0.0
        %2052 = vmatpush1.msra.mxu0 0.0
        %2053 = vmatprep.subr.mxu0 0.0
        %2054 = vmatpush1.msra.mxu0 0.0
        %2055 = vmatprep.subr.mxu0 0.0
        %2056 = vmatpush1.msra.mxu0 0.0
        %2057 = vmatprep.subr.mxu0 0.0
        %2058 = vmatpush1.msra.mxu0 0.0
        %2059 = vmatprep.subr.mxu0 0.0
        %2060 = vmatpush1.msra.mxu0 0.0
        %2061 = vmatprep.subr.mxu0 0.0
        %2062 = vmatpush1.msra.mxu0 0.0
        %2063 = vmatprep.subr.mxu0 0.0
        %2064 = vmatpush1.msra.mxu0 0.0
        %2065 = vmatprep.subr.mxu0 0.0
        %2066 = vmatpush1.msra.mxu0 0.0
        %2067 = vmatprep.subr.mxu0 0.0
        %2068 = vmatpush1.msra.mxu0 0.0
        %2069 = vmatprep.subr.mxu0 0.0
        %2070 = vmatpush1.msra.mxu0 0.0
        %2071 = vmatprep.subr.mxu0 0.0
        %2072 = vmatpush1.msra.mxu0 0.0
        %2073 = vmatprep.subr.mxu0 0.0
        %2074 = vmatpush1.msra.mxu0 0.0
        %2075 = vmatprep.subr.mxu0 0.0
        %2076 = vmatpush1.msra.mxu0 0.0
        %2077 = vmatprep.subr.mxu0 0.0
        %2078 = vmatpush1.msra.mxu0 0.0
        %2079 = vmatprep.subr.mxu0 0.0
        %2080 = vmatpush1.msra.mxu0 0.0
        %2081 = vmatprep.subr.mxu0 0.0
        %2082 = vmatpush1.msra.mxu0 0.0
        %2083 = vmatprep.subr.mxu0 0.0
        %2084 = vmatpush1.msra.mxu0 0.0
        %2085 = vmatprep.subr.mxu0 0.0
        %2086 = vmatpush1.msra.mxu0 0.0
        %2087 = vmatprep.subr.mxu0 0.0
        %2088 = vmatpush1.msra.mxu0 0.0
        %2089 = vmatprep.subr.mxu0 0.0
        %2090 = vmatpush1.msra.mxu0 0.0
        %2091 = vmatprep.subr.mxu0 0.0
        %2092 = vmatpush1.msra.mxu0 0.0
        %2093 = vmatprep.subr.mxu0 0.0
        %2094 = vmatpush1.msra.mxu0 0.0
        %2095 = vmatprep.subr.mxu0 0.0
        %2096 = vmatpush1.msra.mxu0 0.0
        %2097 = vmatprep.mubr.f32.mxu0 0.0
        %2098 = vmatmul.mubr.f32.gmra.mrb[0].mxu0 %v1878
        %v2099 = vpop.f32.mrb[0].mxu0
        %v2100 = vadd.f32 0.0, %v2099
        %v2101 = vpop.f32.mrb[0].mxu0
        %2102 = vmatprep.mubr.f32.mxu0 0.0
        %2103 = vmatmul.mubr.f32.gmra.mrb[0].mxu0 %v1881
        %v2104 = vpop.f32.mrb[0].mxu0
        %v2105 = vadd.f32 0.0, %v2104
        %v2106 = vpop.f32.mrb[0].mxu0
        %2107 = vdwg.mxu0
        %2108 = vmatprep.subr.mxu0 0.0
        %2109 = vmatpush1.msra.mxu0 %v1874
        %2110 = vmatprep.subr.mxu0 0.0
        %2111 = vmatpush1.msra.mxu0 0.0
        %2112 = vmatprep.subr.mxu0 0.0
        %2113 = vmatpush1.msra.mxu0 0.0
        %2114 = vmatprep.subr.mxu0 0.0
        %2115 = vmatpush1.msra.mxu0 0.0
        %2116 = vmatprep.subr.mxu0 0.0
        %2117 = vmatpush1.msra.mxu0 0.0
        %2118 = vmatprep.subr.mxu0 0.0
        %2119 = vmatpush1.msra.mxu0 0.0
        %2120 = vmatprep.subr.mxu0 0.0
        %2121 = vmatpush1.msra.mxu0 0.0
        %2122 = vmatprep.subr.mxu0 0.0
        %2123 = vmatpush1.msra.mxu0 0.0
        %2124 = vmatprep.subr.mxu0 0.0
        %2125 = vmatpush1.msra.mxu0 0.0
        %2126 = vmatprep.subr.mxu0 0.0
        %2127 = vmatpush1.msra.mxu0 0.0
        %2128 = vmatprep.subr.mxu0 0.0
        %2129 = vmatpush1.msra.mxu0 0.0
        %2130 = vmatprep.subr.mxu0 0.0
        %2131 = vmatpush1.msra.mxu0 0.0
        %2132 = vmatprep.subr.mxu0 0.0
        %2133 = vmatpush1.msra.mxu0 0.0
        %2134 = vmatprep.subr.mxu0 0.0
        %2135 = vmatpush1.msra.mxu0 0.0
        %2136 = vmatprep.subr.mxu0 0.0
        %2137 = vmatpush1.msra.mxu0 0.0
        %2138 = vmatprep.subr.mxu0 0.0
        %2139 = vmatpush1.msra.mxu0 0.0
        %2140 = vmatprep.subr.mxu0 0.0
        %2141 = vmatpush1.msra.mxu0 0.0
        %2142 = vmatprep.subr.mxu0 0.0
        %2143 = vmatpush1.msra.mxu0 0.0
        %2144 = vmatprep.subr.mxu0 0.0
        %2145 = vmatpush1.msra.mxu0 0.0
        %2146 = vmatprep.subr.mxu0 0.0
        %2147 = vmatpush1.msra.mxu0 0.0
        %2148 = vmatprep.subr.mxu0 0.0
        %2149 = vmatpush1.msra.mxu0 0.0
        %2150 = vmatprep.subr.mxu0 0.0
        %2151 = vmatpush1.msra.mxu0 0.0
        %2152 = vmatprep.subr.mxu0 0.0
        %2153 = vmatpush1.msra.mxu0 0.0
        %2154 = vmatprep.subr.mxu0 0.0
        %2155 = vmatpush1.msra.mxu0 0.0
        %2156 = vmatprep.subr.mxu0 0.0
        %2157 = vmatpush1.msra.mxu0 0.0
        %2158 = vmatprep.subr.mxu0 0.0
        %2159 = vmatpush1.msra.mxu0 0.0
        %2160 = vmatprep.subr.mxu0 0.0
        %2161 = vmatpush1.msra.mxu0 0.0
        %2162 = vmatprep.subr.mxu0 0.0
        %2163 = vmatpush1.msra.mxu0 0.0
        %2164 = vmatprep.subr.mxu0 0.0
        %2165 = vmatpush1.msra.mxu0 0.0
        %2166 = vmatprep.subr.mxu0 0.0
        %2167 = vmatpush1.msra.mxu0 0.0
        %2168 = vmatprep.subr.mxu0 0.0
        %2169 = vmatpush1.msra.mxu0 0.0
        %2170 = vmatprep.subr.mxu0 0.0
        %2171 = vmatpush1.msra.mxu0 0.0
        %2172 = vmatprep.mubr.f32.mxu0 0.0
        %2173 = vmatmul.mubr.f32.gmra.mrb[0].mxu0 %v1878
        %v2174 = vpop.f32.mrb[0].mxu0
        %v2175 = vadd.f32 0.0, %v2174
        %v2176 = vpop.f32.mrb[0].mxu0
        %2177 = vmatprep.mubr.f32.mxu0 0.0
        %2178 = vmatmul.mubr.f32.gmra.mrb[0].mxu0 %v1881
        %v2179 = vpop.f32.mrb[0].mxu0
        %v2180 = vadd.f32 0.0, %v2179
        %v2181 = vpop.f32.mrb[0].mxu0
        %2182 = vdwg.mxu0
        %v2183 = vmul.f32 %v1950, 0.375
        %v2184 = vmul.f32 %v1955, 0.375
        %v2185 = vmul.f32 %v2025, 0.375
        %v2186 = vmul.f32 %v2030, 0.375
        %v2187 = vmul.f32 %v2100, 0.375
        %v2188 = vmul.f32 %v2105, 0.375
        %v2189 = vmul.f32 %v1950, 0.625
        %v2190 = vmul.f32 %v1955, 0.625
        %v2191 = vmul.f32 %v2025, 0.625
        %v2192 = vmul.f32 %v2030, 0.625
        %v2193 = vmul.f32 %v2100, 0.625
        %v2194 = vmul.f32 %v2105, 0.625
        %v2195 = vmul.f32 %v2175, 0.625
        %v2196 = vmul.f32 %v2180, 0.625
        %v2197 = vadd.f32 %v2183, %v2189
        %v2198 = vadd.f32 %v2184, %v2190
        %v2199 = vadd.f32 %v2183, %v2191
        %v2200 = vadd.f32 %v2184, %v2192
        %v2201 = vadd.f32 %v2185, %v2193
        %v2202 = vadd.f32 %v2186, %v2194
        %v2203 = vadd.f32 %v2187, %v2195
        %v2204 = vadd.f32 %v2188, %v2196
        %v2205 = vmul.f32 %v1950, 0.125
        %v2206 = vmul.f32 %v1955, 0.125
        %v2207 = vmul.f32 %v2025, 0.125
        %v2208 = vmul.f32 %v2030, 0.125
        %v2209 = vmul.f32 %v2100, 0.125
        %v2210 = vmul.f32 %v2105, 0.125
        %v2211 = vmul.f32 %v1950, 0.875
        %v2212 = vmul.f32 %v1955, 0.875
        %v2213 = vmul.f32 %v2025, 0.875
        %v2214 = vmul.f32 %v2030, 0.875
        %v2215 = vmul.f32 %v2100, 0.875
        %v2216 = vmul.f32 %v2105, 0.875
        %v2217 = vmul.f32 %v2175, 0.875
        %v2218 = vmul.f32 %v2180, 0.875
        %v2219 = vadd.f32 %v2205, %v2211
        %v2220 = vadd.f32 %v2206, %v2212
        %v2221 = vadd.f32 %v2205, %v2213
        %v2222 = vadd.f32 %v2206, %v2214
        %v2223 = vadd.f32 %v2207, %v2215
        %v2224 = vadd.f32 %v2208, %v2216
        %v2225 = vadd.f32 %v2209, %v2217
        %v2226 = vadd.f32 %v2210, %v2218
        %v2227 = vmul.f32 %v2175, 0.125
        %v2228 = vmul.f32 %v2180, 0.125
        %v2229 = vadd.f32 %v2211, %v2207
        %v2230 = vadd.f32 %v2212, %v2208
        %v2231 = vadd.f32 %v2213, %v2209
        %v2232 = vadd.f32 %v2214, %v2210
        %v2233 = vadd.f32 %v2215, %v2227
        %v2234 = vadd.f32 %v2216, %v2228
        %v2235 = vadd.f32 %v2217, %v2227
        %v2236 = vadd.f32 %v2218, %v2228
        %v2237 = vmul.f32 %v2175, 0.375
        %v2238 = vmul.f32 %v2180, 0.375
        %v2239 = vadd.f32 %v2189, %v2185
        %v2240 = vadd.f32 %v2190, %v2186
        %v2241 = vadd.f32 %v2191, %v2187
        %v2242 = vadd.f32 %v2192, %v2188
        %v2243 = vadd.f32 %v2193, %v2237
        %v2244 = vadd.f32 %v2194, %v2238
        %v2245 = vadd.f32 %v2195, %v2237
        %v2246 = vadd.f32 %v2196, %v2238
        %vm2247 = vcmask 1048320
        %v2248 = vsel %vm2247, %v614, 0.0
        %v2249 = vsel %vm2247, %v622, 0.0
        %v2250 = vadd.f32 %v2248, %v2249
        %v2251 = vsel %vm2247, %v617, 0.0
        %v2252 = vsel %vm2247, %v625, 0.0
        %v2253 = vadd.f32 %v2251, %v2252
        %v2254 = vsel %vm2247, %v630, 0.0
        %v2255 = vsel %vm2247, %v638, 0.0
        %v2256 = vadd.f32 %v2254, %v2255
        %v2257 = vsel %vm2247, %v633, 0.0
        %v2258 = vsel %vm2247, %v641, 0.0
        %v2259 = vadd.f32 %v2257, %v2258
        %v2260 = vsel %vm2247, %v646, 0.0
        %v2261 = vsel %vm2247, %v654, 0.0
        %v2262 = vadd.f32 %v2260, %v2261
        %v2263 = vsel %vm2247, %v649, 0.0
        %v2264 = vsel %vm2247, %v657, 0.0
        %v2265 = vadd.f32 %v2263, %v2264
        %v2266 = vsel %vm2247, %v662, 0.0
        %v2267 = vsel %vm2247, %v670, 0.0
        %v2268 = vadd.f32 %v2266, %v2267
        %v2269 = vsel %vm2247, %v665, 0.0
        %v2270 = vsel %vm2247, %v673, 0.0
        %v2271 = vadd.f32 %v2269, %v2270
        %v2272 = vsel %vm2247, %v678, 0.0
        %v2273 = vsel %vm2247, %v686, 0.0
        %v2274 = vadd.f32 %v2272, %v2273
        %v2275 = vsel %vm2247, %v681, 0.0
        %v2276 = vsel %vm2247, %v689, 0.0
        %v2277 = vadd.f32 %v2275, %v2276
        %v2278 = vsel %vm2247, %v694, 0.0
        %v2279 = vsel %vm2247, %v702, 0.0
        %v2280 = vadd.f32 %v2278, %v2279
        %v2281 = vsel %vm2247, %v697, 0.0
        %v2282 = vsel %vm2247, %v705, 0.0
        %v2283 = vadd.f32 %v2281, %v2282
        %v2284 = vsel %vm2247, %v710, 0.0
        %v2285 = vsel %vm2247, %v718, 0.0
        %v2286 = vadd.f32 %v2284, %v2285
        %v2287 = vsel %vm2247, %v713, 0.0
        %v2288 = vsel %vm2247, %v721, 0.0
        %v2289 = vadd.f32 %v2287, %v2288
        %v2290 = vsel %vm2247, %v726, 0.0
        %v2291 = vsel %vm2247, %v734, 0.0
        %v2292 = vadd.f32 %v2290, %v2291
        %v2293 = vsel %vm2247, %v729, 0.0
        %v2294 = vsel %vm2247, %v737, 0.0
        %v2295 = vadd.f32 %v2293, %v2294
        %v2296 = vrcp.pop 2.0
        %v2297 = vmul.f32 %v2250, %v2296
        %v2298 = vmul.f32 %v2253, %v2296
        %v2299 = vmul.f32 %v2256, %v2296
        %v2300 = vmul.f32 %v2259, %v2296
        %v2301 = vmul.f32 %v2262, %v2296
        %v2302 = vmul.f32 %v2265, %v2296
        %v2303 = vmul.f32 %v2268, %v2296
        %v2304 = vmul.f32 %v2271, %v2296
        %v2305 = vmul.f32 %v2274, %v2296
        %v2306 = vmul.f32 %v2277, %v2296
        %v2307 = vmul.f32 %v2280, %v2296
        %v2308 = vmul.f32 %v2283, %v2296
        %v2309 = vmul.f32 %v2286, %v2296
        %v2310 = vmul.f32 %v2289, %v2296
        %v2311 = vmul.f32 %v2292, %v2296
        %v2312 = vmul.f32 %v2295, %v2296
        %v2313 = vld [vmem:[%s9] sm:$0xff]
        %v2314 = vld [vmem:[%s2] sm:$0x1]
        %v2316 = vlaneseq
        %v2317 = vshrl.u32 %v2316, 7
        %v2318 = vsub.s32 0, %v2317
        %v2319 = vrot.slane %v2314, %v2318
        %2322 = vrot.lane.b32.xlu0 %v2297, 32
        %v2323 = vpop.permute.xlu0 %2322
        %2324 = vrot.lane.b32.xlu0 %v2298, 32
        %v2325 = vpop.permute.xlu0 %2324
        %2328 = vrot.lane.b32.xlu0 %v2319, 32
        %v2329 = vpop.permute.xlu0 %2328
        %v2332 = vsel %vm814, %v2313, 0
        %2334 = vmatprep.subr.mxu0 0.0
        %2335 = vmatpush1.msra.mxu0 %v2323
        %2336 = vmatprep.subr.mxu0 0.0
        %2337 = vmatpush1.msra.mxu0 %v2325
        %2338 = vmatprep.subr.mxu0 0.0
        %2339 = vmatpush1.msra.mxu0 0.0
        %2340 = vmatprep.subr.mxu0 0.0
        %2341 = vmatpush1.msra.mxu0 0.0
        %2342 = vmatprep.subr.mxu0 0.0
        %2343 = vmatpush1.msra.mxu0 0.0
        %2344 = vmatprep.subr.mxu0 0.0
        %2345 = vmatpush1.msra.mxu0 0.0
        %2346 = vmatprep.subr.mxu0 0.0
        %2347 = vmatpush1.msra.mxu0 0.0
        %2348 = vmatprep.subr.mxu0 0.0
        %2349 = vmatpush1.msra.mxu0 0.0
        %2350 = vmatprep.subr.mxu0 0.0
        %2351 = vmatpush1.msra.mxu0 0.0
        %2352 = vmatprep.subr.mxu0 0.0
        %2353 = vmatpush1.msra.mxu0 0.0
        %2354 = vmatprep.subr.mxu0 0.0
        %2355 = vmatpush1.msra.mxu0 0.0
        %2356 = vmatprep.subr.mxu0 0.0
        %2357 = vmatpush1.msra.mxu0 0.0
        %2358 = vmatprep.subr.mxu0 0.0
        %2359 = vmatpush1.msra.mxu0 0.0
        %2360 = vmatprep.subr.mxu0 0.0
        %2361 = vmatpush1.msra.mxu0 0.0
        %2362 = vmatprep.subr.mxu0 0.0
        %2363 = vmatpush1.msra.mxu0 0.0
        %2364 = vmatprep.subr.mxu0 0.0
        %2365 = vmatpush1.msra.mxu0 0.0
        %2366 = vmatprep.subr.mxu0 0.0
        %2367 = vmatpush1.msra.mxu0 0.0
        %2368 = vmatprep.subr.mxu0 0.0
        %2369 = vmatpush1.msra.mxu0 0.0
        %2370 = vmatprep.subr.mxu0 0.0
        %2371 = vmatpush1.msra.mxu0 0.0
        %2372 = vmatprep.subr.mxu0 0.0
        %2373 = vmatpush1.msra.mxu0 0.0
        %2374 = vmatprep.subr.mxu0 0.0
        %2375 = vmatpush1.msra.mxu0 0.0
        %2376 = vmatprep.subr.mxu0 0.0
        %2377 = vmatpush1.msra.mxu0 0.0
        %2378 = vmatprep.subr.mxu0 0.0
        %2379 = vmatpush1.msra.mxu0 0.0
        %2380 = vmatprep.subr.mxu0 0.0
        %2381 = vmatpush1.msra.mxu0 0.0
        %2382 = vmatprep.subr.mxu0 0.0
        %2383 = vmatpush1.msra.mxu0 0.0
        %2384 = vmatprep.subr.mxu0 0.0
        %2385 = vmatpush1.msra.mxu0 0.0
        %2386 = vmatprep.subr.mxu0 0.0
        %2387 = vmatpush1.msra.mxu0 0.0
        %2388 = vmatprep.subr.mxu0 0.0
        %2389 = vmatpush1.msra.mxu0 0.0
        %2390 = vmatprep.subr.mxu0 0.0
        %2391 = vmatpush1.msra.mxu0 0.0
        %2392 = vmatprep.subr.mxu0 0.0
        %2393 = vmatpush1.msra.mxu0 0.0
        %2394 = vmatprep.subr.mxu0 0.0
        %2395 = vmatpush1.msra.mxu0 0.0
        %2396 = vmatprep.subr.mxu0 0.0
        %2397 = vmatpush1.msra.mxu0 0.0
        %2398 = vmatprep.mubr.f32.mxu0 0.0
        %2399 = vmatmul.mubr.f32.gmra.mrb[0].mxu0 %v2332
        %v2400 = vpop.f32.mrb[0].mxu0
        %v2401 = vadd.f32 %v2329, %v2400
        %v2402 = vpop.f32.mrb[0].mxu0
        %2403 = vdwg.mxu0
        %2406 = vrot.lane.b32.xlu0 %v2299, 32
        %v2407 = vpop.permute.xlu0 %2406
        %2408 = vrot.lane.b32.xlu0 %v2300, 32
        %v2409 = vpop.permute.xlu0 %2408
        %2412 = vmatprep.subr.mxu0 0.0
        %2413 = vmatpush1.msra.mxu0 %v2407
        %2414 = vmatprep.subr.mxu0 0.0
        %2415 = vmatpush1.msra.mxu0 %v2409
        %2416 = vmatprep.subr.mxu0 0.0
        %2417 = vmatpush1.msra.mxu0 0.0
        %2418 = vmatprep.subr.mxu0 0.0
        %2419 = vmatpush1.msra.mxu0 0.0
        %2420 = vmatprep.subr.mxu0 0.0
        %2421 = vmatpush1.msra.mxu0 0.0
        %2422 = vmatprep.subr.mxu0 0.0
        %2423 = vmatpush1.msra.mxu0 0.0
        %2424 = vmatprep.subr.mxu0 0.0
        %2425 = vmatpush1.msra.mxu0 0.0
        %2426 = vmatprep.subr.mxu0 0.0
        %2427 = vmatpush1.msra.mxu0 0.0
        %2428 = vmatprep.subr.mxu0 0.0
        %2429 = vmatpush1.msra.mxu0 0.0
        %2430 = vmatprep.subr.mxu0 0.0
        %2431 = vmatpush1.msra.mxu0 0.0
        %2432 = vmatprep.subr.mxu0 0.0
        %2433 = vmatpush1.msra.mxu0 0.0
        %2434 = vmatprep.subr.mxu0 0.0
        %2435 = vmatpush1.msra.mxu0 0.0
        %2436 = vmatprep.subr.mxu0 0.0
        %2437 = vmatpush1.msra.mxu0 0.0
        %2438 = vmatprep.subr.mxu0 0.0
        %2439 = vmatpush1.msra.mxu0 0.0
        %2440 = vmatprep.subr.mxu0 0.0
        %2441 = vmatpush1.msra.mxu0 0.0
        %2442 = vmatprep.subr.mxu0 0.0
        %2443 = vmatpush1.msra.mxu0 0.0
        %2444 = vmatprep.subr.mxu0 0.0
        %2445 = vmatpush1.msra.mxu0 0.0
        %2446 = vmatprep.subr.mxu0 0.0
        %2447 = vmatpush1.msra.mxu0 0.0
        %2448 = vmatprep.subr.mxu0 0.0
        %2449 = vmatpush1.msra.mxu0 0.0
        %2450 = vmatprep.subr.mxu0 0.0
        %2451 = vmatpush1.msra.mxu0 0.0
        %2452 = vmatprep.subr.mxu0 0.0
        %2453 = vmatpush1.msra.mxu0 0.0
        %2454 = vmatprep.subr.mxu0 0.0
        %2455 = vmatpush1.msra.mxu0 0.0
        %2456 = vmatprep.subr.mxu0 0.0
        %2457 = vmatpush1.msra.mxu0 0.0
        %2458 = vmatprep.subr.mxu0 0.0
        %2459 = vmatpush1.msra.mxu0 0.0
        %2460 = vmatprep.subr.mxu0 0.0
        %2461 = vmatpush1.msra.mxu0 0.0
        %2462 = vmatprep.subr.mxu0 0.0
        %2463 = vmatpush1.msra.mxu0 0.0
        %2464 = vmatprep.subr.mxu0 0.0
        %2465 = vmatpush1.msra.mxu0 0.0
        %2466 = vmatprep.subr.mxu0 0.0
        %2467 = vmatpush1.msra.mxu0 0.0
        %2468 = vmatprep.subr.mxu0 0.0
        %2469 = vmatpush1.msra.mxu0 0.0
        %2470 = vmatprep.subr.mxu0 0.0
        %2471 = vmatpush1.msra.mxu0 0.0
        %2472 = vmatprep.subr.mxu0 0.0
        %2473 = vmatpush1.msra.mxu0 0.0
        %2474 = vmatprep.subr.mxu0 0.0
        %2475 = vmatpush1.msra.mxu0 0.0
        %2476 = vmatprep.mubr.f32.mxu0 0.0
        %2477 = vmatmul.mubr.f32.gmra.mrb[0].mxu0 %v2332
        %v2478 = vpop.f32.mrb[0].mxu0
        %v2479 = vadd.f32 %v2329, %v2478
        %v2480 = vpop.f32.mrb[0].mxu0
        %2481 = vdwg.mxu0
        %2484 = vrot.lane.b32.xlu0 %v2301, 32
        %v2485 = vpop.permute.xlu0 %2484
        %2486 = vrot.lane.b32.xlu0 %v2302, 32
        %v2487 = vpop.permute.xlu0 %2486
        %2490 = vmatprep.subr.mxu0 0.0
        %2491 = vmatpush1.msra.mxu0 %v2485
        %2492 = vmatprep.subr.mxu0 0.0
        %2493 = vmatpush1.msra.mxu0 %v2487
        %2494 = vmatprep.subr.mxu0 0.0
        %2495 = vmatpush1.msra.mxu0 0.0
        %2496 = vmatprep.subr.mxu0 0.0
        %2497 = vmatpush1.msra.mxu0 0.0
        %2498 = vmatprep.subr.mxu0 0.0
        %2499 = vmatpush1.msra.mxu0 0.0
        %2500 = vmatprep.subr.mxu0 0.0
        %2501 = vmatpush1.msra.mxu0 0.0
        %2502 = vmatprep.subr.mxu0 0.0
        %2503 = vmatpush1.msra.mxu0 0.0
        %2504 = vmatprep.subr.mxu0 0.0
        %2505 = vmatpush1.msra.mxu0 0.0
        %2506 = vmatprep.subr.mxu0 0.0
        %2507 = vmatpush1.msra.mxu0 0.0
        %2508 = vmatprep.subr.mxu0 0.0
        %2509 = vmatpush1.msra.mxu0 0.0
        %2510 = vmatprep.subr.mxu0 0.0
        %2511 = vmatpush1.msra.mxu0 0.0
        %2512 = vmatprep.subr.mxu0 0.0
        %2513 = vmatpush1.msra.mxu0 0.0
        %2514 = vmatprep.subr.mxu0 0.0
        %2515 = vmatpush1.msra.mxu0 0.0
        %2516 = vmatprep.subr.mxu0 0.0
        %2517 = vmatpush1.msra.mxu0 0.0
        %2518 = vmatprep.subr.mxu0 0.0
        %2519 = vmatpush1.msra.mxu0 0.0
        %2520 = vmatprep.subr.mxu0 0.0
        %2521 = vmatpush1.msra.mxu0 0.0
        %2522 = vmatprep.subr.mxu0 0.0
        %2523 = vmatpush1.msra.mxu0 0.0
        %2524 = vmatprep.subr.mxu0 0.0
        %2525 = vmatpush1.msra.mxu0 0.0
        %2526 = vmatprep.subr.mxu0 0.0
        %2527 = vmatpush1.msra.mxu0 0.0
        %2528 = vmatprep.subr.mxu0 0.0
        %2529 = vmatpush1.msra.mxu0 0.0
        %2530 = vmatprep.subr.mxu0 0.0
        %2531 = vmatpush1.msra.mxu0 0.0
        %2532 = vmatprep.subr.mxu0 0.0
        %2533 = vmatpush1.msra.mxu0 0.0
        %2534 = vmatprep.subr.mxu0 0.0
        %2535 = vmatpush1.msra.mxu0 0.0
        %2536 = vmatprep.subr.mxu0 0.0
        %2537 = vmatpush1.msra.mxu0 0.0
        %2538 = vmatprep.subr.mxu0 0.0
        %2539 = vmatpush1.msra.mxu0 0.0
        %2540 = vmatprep.subr.mxu0 0.0
        %2541 = vmatpush1.msra.mxu0 0.0
        %2542 = vmatprep.subr.mxu0 0.0
        %2543 = vmatpush1.msra.mxu0 0.0
        %2544 = vmatprep.subr.mxu0 0.0
        %2545 = vmatpush1.msra.mxu0 0.0
        %2546 = vmatprep.subr.mxu0 0.0
        %2547 = vmatpush1.msra.mxu0 0.0
        %2548 = vmatprep.subr.mxu0 0.0
        %2549 = vmatpush1.msra.mxu0 0.0
        %2550 = vmatprep.subr.mxu0 0.0
        %2551 = vmatpush1.msra.mxu0 0.0
        %2552 = vmatprep.subr.mxu0 0.0
        %2553 = vmatpush1.msra.mxu0 0.0
        %2554 = vmatprep.mubr.f32.mxu0 0.0
        %2555 = vmatmul.mubr.f32.gmra.mrb[0].mxu0 %v2332
        %v2556 = vpop.f32.mrb[0].mxu0
        %v2557 = vadd.f32 %v2329, %v2556
        %v2558 = vpop.f32.mrb[0].mxu0
        %2559 = vdwg.mxu0
        %2562 = vrot.lane.b32.xlu0 %v2303, 32
        %v2563 = vpop.permute.xlu0 %2562
        %2564 = vrot.lane.b32.xlu0 %v2304, 32
        %v2565 = vpop.permute.xlu0 %2564
        %2568 = vmatprep.subr.mxu0 0.0
        %2569 = vmatpush1.msra.mxu0 %v2563
        %2570 = vmatprep.subr.mxu0 0.0
        %2571 = vmatpush1.msra.mxu0 %v2565
        %2572 = vmatprep.subr.mxu0 0.0
        %2573 = vmatpush1.msra.mxu0 0.0
        %2574 = vmatprep.subr.mxu0 0.0
        %2575 = vmatpush1.msra.mxu0 0.0
        %2576 = vmatprep.subr.mxu0 0.0
        %2577 = vmatpush1.msra.mxu0 0.0
        %2578 = vmatprep.subr.mxu0 0.0
        %2579 = vmatpush1.msra.mxu0 0.0
        %2580 = vmatprep.subr.mxu0 0.0
        %2581 = vmatpush1.msra.mxu0 0.0
        %2582 = vmatprep.subr.mxu0 0.0
        %2583 = vmatpush1.msra.mxu0 0.0
        %2584 = vmatprep.subr.mxu0 0.0
        %2585 = vmatpush1.msra.mxu0 0.0
        %2586 = vmatprep.subr.mxu0 0.0
        %2587 = vmatpush1.msra.mxu0 0.0
        %2588 = vmatprep.subr.mxu0 0.0
        %2589 = vmatpush1.msra.mxu0 0.0
        %2590 = vmatprep.subr.mxu0 0.0
        %2591 = vmatpush1.msra.mxu0 0.0
        %2592 = vmatprep.subr.mxu0 0.0
        %2593 = vmatpush1.msra.mxu0 0.0
        %2594 = vmatprep.subr.mxu0 0.0
        %2595 = vmatpush1.msra.mxu0 0.0
        %2596 = vmatprep.subr.mxu0 0.0
        %2597 = vmatpush1.msra.mxu0 0.0
        %2598 = vmatprep.subr.mxu0 0.0
        %2599 = vmatpush1.msra.mxu0 0.0
        %2600 = vmatprep.subr.mxu0 0.0
        %2601 = vmatpush1.msra.mxu0 0.0
        %2602 = vmatprep.subr.mxu0 0.0
        %2603 = vmatpush1.msra.mxu0 0.0
        %2604 = vmatprep.subr.mxu0 0.0
        %2605 = vmatpush1.msra.mxu0 0.0
        %2606 = vmatprep.subr.mxu0 0.0
        %2607 = vmatpush1.msra.mxu0 0.0
        %2608 = vmatprep.subr.mxu0 0.0
        %2609 = vmatpush1.msra.mxu0 0.0
        %2610 = vmatprep.subr.mxu0 0.0
        %2611 = vmatpush1.msra.mxu0 0.0
        %2612 = vmatprep.subr.mxu0 0.0
        %2613 = vmatpush1.msra.mxu0 0.0
        %2614 = vmatprep.subr.mxu0 0.0
        %2615 = vmatpush1.msra.mxu0 0.0
        %2616 = vmatprep.subr.mxu0 0.0
        %2617 = vmatpush1.msra.mxu0 0.0
        %2618 = vmatprep.subr.mxu0 0.0
        %2619 = vmatpush1.msra.mxu0 0.0
        %2620 = vmatprep.subr.mxu0 0.0
        %2621 = vmatpush1.msra.mxu0 0.0
        %2622 = vmatprep.subr.mxu0 0.0
        %2623 = vmatpush1.msra.mxu0 0.0
        %2624 = vmatprep.subr.mxu0 0.0
        %2625 = vmatpush1.msra.mxu0 0.0
        %2626 = vmatprep.subr.mxu0 0.0
        %2627 = vmatpush1.msra.mxu0 0.0
        %2628 = vmatprep.subr.mxu0 0.0
        %2629 = vmatpush1.msra.mxu0 0.0
        %2630 = vmatprep.subr.mxu0 0.0
        %2631 = vmatpush1.msra.mxu0 0.0
        %2632 = vmatprep.mubr.f32.mxu0 0.0
        %2633 = vmatmul.mubr.f32.gmra.mrb[0].mxu0 %v2332
        %v2634 = vpop.f32.mrb[0].mxu0
        %v2635 = vadd.f32 %v2329, %v2634
        %v2636 = vpop.f32.mrb[0].mxu0
        %2637 = vdwg.mxu0
        %2640 = vrot.lane.b32.xlu0 %v2305, 32
        %v2641 = vpop.permute.xlu0 %2640
        %2642 = vrot.lane.b32.xlu0 %v2306, 32
        %v2643 = vpop.permute.xlu0 %2642
        %2646 = vmatprep.subr.mxu0 0.0
        %2647 = vmatpush1.msra.mxu0 %v2641
        %2648 = vmatprep.subr.mxu0 0.0
        %2649 = vmatpush1.msra.mxu0 %v2643
        %2650 = vmatprep.subr.mxu0 0.0
        %2651 = vmatpush1.msra.mxu0 0.0
        %2652 = vmatprep.subr.mxu0 0.0
        %2653 = vmatpush1.msra.mxu0 0.0
        %2654 = vmatprep.subr.mxu0 0.0
        %2655 = vmatpush1.msra.mxu0 0.0
        %2656 = vmatprep.subr.mxu0 0.0
        %2657 = vmatpush1.msra.mxu0 0.0
        %2658 = vmatprep.subr.mxu0 0.0
        %2659 = vmatpush1.msra.mxu0 0.0
        %2660 = vmatprep.subr.mxu0 0.0
        %2661 = vmatpush1.msra.mxu0 0.0
        %2662 = vmatprep.subr.mxu0 0.0
        %2663 = vmatpush1.msra.mxu0 0.0
        %2664 = vmatprep.subr.mxu0 0.0
        %2665 = vmatpush1.msra.mxu0 0.0
        %2666 = vmatprep.subr.mxu0 0.0
        %2667 = vmatpush1.msra.mxu0 0.0
        %2668 = vmatprep.subr.mxu0 0.0
        %2669 = vmatpush1.msra.mxu0 0.0
        %2670 = vmatprep.subr.mxu0 0.0
        %2671 = vmatpush1.msra.mxu0 0.0
        %2672 = vmatprep.subr.mxu0 0.0
        %2673 = vmatpush1.msra.mxu0 0.0
        %2674 = vmatprep.subr.mxu0 0.0
        %2675 = vmatpush1.msra.mxu0 0.0
        %2676 = vmatprep.subr.mxu0 0.0
        %2677 = vmatpush1.msra.mxu0 0.0
        %2678 = vmatprep.subr.mxu0 0.0
        %2679 = vmatpush1.msra.mxu0 0.0
        %2680 = vmatprep.subr.mxu0 0.0
        %2681 = vmatpush1.msra.mxu0 0.0
        %2682 = vmatprep.subr.mxu0 0.0
        %2683 = vmatpush1.msra.mxu0 0.0
        %2684 = vmatprep.subr.mxu0 0.0
        %2685 = vmatpush1.msra.mxu0 0.0
        %2686 = vmatprep.subr.mxu0 0.0
        %2687 = vmatpush1.msra.mxu0 0.0
        %2688 = vmatprep.subr.mxu0 0.0
        %2689 = vmatpush1.msra.mxu0 0.0
        %2690 = vmatprep.subr.mxu0 0.0
        %2691 = vmatpush1.msra.mxu0 0.0
        %2692 = vmatprep.subr.mxu0 0.0
        %2693 = vmatpush1.msra.mxu0 0.0
        %2694 = vmatprep.subr.mxu0 0.0
        %2695 = vmatpush1.msra.mxu0 0.0
        %2696 = vmatprep.subr.mxu0 0.0
        %2697 = vmatpush1.msra.mxu0 0.0
        %2698 = vmatprep.subr.mxu0 0.0
        %2699 = vmatpush1.msra.mxu0 0.0
        %2700 = vmatprep.subr.mxu0 0.0
        %2701 = vmatpush1.msra.mxu0 0.0
        %2702 = vmatprep.subr.mxu0 0.0
        %2703 = vmatpush1.msra.mxu0 0.0
        %2704 = vmatprep.subr.mxu0 0.0
        %2705 = vmatpush1.msra.mxu0 0.0
        %2706 = vmatprep.subr.mxu0 0.0
        %2707 = vmatpush1.msra.mxu0 0.0
        %2708 = vmatprep.subr.mxu0 0.0
        %2709 = vmatpush1.msra.mxu0 0.0
        %2710 = vmatprep.mubr.f32.mxu0 0.0
        %2711 = vmatmul.mubr.f32.gmra.mrb[0].mxu0 %v2332
        %v2712 = vpop.f32.mrb[0].mxu0
        %v2713 = vadd.f32 %v2329, %v2712
        %v2714 = vpop.f32.mrb[0].mxu0
        %2715 = vdwg.mxu0
        %2718 = vrot.lane.b32.xlu0 %v2307, 32
        %v2719 = vpop.permute.xlu0 %2718
        %2720 = vrot.lane.b32.xlu0 %v2308, 32
        %v2721 = vpop.permute.xlu0 %2720
        %2724 = vmatprep.subr.mxu0 0.0
        %2725 = vmatpush1.msra.mxu0 %v2719
        %2726 = vmatprep.subr.mxu0 0.0
        %2727 = vmatpush1.msra.mxu0 %v2721
        %2728 = vmatprep.subr.mxu0 0.0
        %2729 = vmatpush1.msra.mxu0 0.0
        %2730 = vmatprep.subr.mxu0 0.0
        %2731 = vmatpush1.msra.mxu0 0.0
        %2732 = vmatprep.subr.mxu0 0.0
        %2733 = vmatpush1.msra.mxu0 0.0
        %2734 = vmatprep.subr.mxu0 0.0
        %2735 = vmatpush1.msra.mxu0 0.0
        %2736 = vmatprep.subr.mxu0 0.0
        %2737 = vmatpush1.msra.mxu0 0.0
        %2738 = vmatprep.subr.mxu0 0.0
        %2739 = vmatpush1.msra.mxu0 0.0
        %2740 = vmatprep.subr.mxu0 0.0
        %2741 = vmatpush1.msra.mxu0 0.0
        %2742 = vmatprep.subr.mxu0 0.0
        %2743 = vmatpush1.msra.mxu0 0.0
        %2744 = vmatprep.subr.mxu0 0.0
        %2745 = vmatpush1.msra.mxu0 0.0
        %2746 = vmatprep.subr.mxu0 0.0
        %2747 = vmatpush1.msra.mxu0 0.0
        %2748 = vmatprep.subr.mxu0 0.0
        %2749 = vmatpush1.msra.mxu0 0.0
        %2750 = vmatprep.subr.mxu0 0.0
        %2751 = vmatpush1.msra.mxu0 0.0
        %2752 = vmatprep.subr.mxu0 0.0
        %2753 = vmatpush1.msra.mxu0 0.0
        %2754 = vmatprep.subr.mxu0 0.0
        %2755 = vmatpush1.msra.mxu0 0.0
        %2756 = vmatprep.subr.mxu0 0.0
        %2757 = vmatpush1.msra.mxu0 0.0
        %2758 = vmatprep.subr.mxu0 0.0
        %2759 = vmatpush1.msra.mxu0 0.0
        %2760 = vmatprep.subr.mxu0 0.0
        %2761 = vmatpush1.msra.mxu0 0.0
        %2762 = vmatprep.subr.mxu0 0.0
        %2763 = vmatpush1.msra.mxu0 0.0
        %2764 = vmatprep.subr.mxu0 0.0
        %2765 = vmatpush1.msra.mxu0 0.0
        %2766 = vmatprep.subr.mxu0 0.0
        %2767 = vmatpush1.msra.mxu0 0.0
        %2768 = vmatprep.subr.mxu0 0.0
        %2769 = vmatpush1.msra.mxu0 0.0
        %2770 = vmatprep.subr.mxu0 0.0
        %2771 = vmatpush1.msra.mxu0 0.0
        %2772 = vmatprep.subr.mxu0 0.0
        %2773 = vmatpush1.msra.mxu0 0.0
        %2774 = vmatprep.subr.mxu0 0.0
        %2775 = vmatpush1.msra.mxu0 0.0
        %2776 = vmatprep.subr.mxu0 0.0
        %2777 = vmatpush1.msra.mxu0 0.0
        %2778 = vmatprep.subr.mxu0 0.0
        %2779 = vmatpush1.msra.mxu0 0.0
        %2780 = vmatprep.subr.mxu0 0.0
        %2781 = vmatpush1.msra.mxu0 0.0
        %2782 = vmatprep.subr.mxu0 0.0
        %2783 = vmatpush1.msra.mxu0 0.0
        %2784 = vmatprep.subr.mxu0 0.0
        %2785 = vmatpush1.msra.mxu0 0.0
        %2786 = vmatprep.subr.mxu0 0.0
        %2787 = vmatpush1.msra.mxu0 0.0
        %2788 = vmatprep.mubr.f32.mxu0 0.0
        %2789 = vmatmul.mubr.f32.gmra.mrb[0].mxu0 %v2332
        %v2790 = vpop.f32.mrb[0].mxu0
        %v2791 = vadd.f32 %v2329, %v2790
        %v2792 = vpop.f32.mrb[0].mxu0
        %2793 = vdwg.mxu0
        %2796 = vrot.lane.b32.xlu0 %v2309, 32
        %v2797 = vpop.permute.xlu0 %2796
        %2798 = vrot.lane.b32.xlu0 %v2310, 32
        %v2799 = vpop.permute.xlu0 %2798
        %2802 = vmatprep.subr.mxu0 0.0
        %2803 = vmatpush1.msra.mxu0 %v2797
        %2804 = vmatprep.subr.mxu0 0.0
        %2805 = vmatpush1.msra.mxu0 %v2799
        %2806 = vmatprep.subr.mxu0 0.0
        %2807 = vmatpush1.msra.mxu0 0.0
        %2808 = vmatprep.subr.mxu0 0.0
        %2809 = vmatpush1.msra.mxu0 0.0
        %2810 = vmatprep.subr.mxu0 0.0
        %2811 = vmatpush1.msra.mxu0 0.0
        %2812 = vmatprep.subr.mxu0 0.0
        %2813 = vmatpush1.msra.mxu0 0.0
        %2814 = vmatprep.subr.mxu0 0.0
        %2815 = vmatpush1.msra.mxu0 0.0
        %2816 = vmatprep.subr.mxu0 0.0
        %2817 = vmatpush1.msra.mxu0 0.0
        %2818 = vmatprep.subr.mxu0 0.0
        %2819 = vmatpush1.msra.mxu0 0.0
        %2820 = vmatprep.subr.mxu0 0.0
        %2821 = vmatpush1.msra.mxu0 0.0
        %2822 = vmatprep.subr.mxu0 0.0
        %2823 = vmatpush1.msra.mxu0 0.0
        %2824 = vmatprep.subr.mxu0 0.0
        %2825 = vmatpush1.msra.mxu0 0.0
        %2826 = vmatprep.subr.mxu0 0.0
        %2827 = vmatpush1.msra.mxu0 0.0
        %2828 = vmatprep.subr.mxu0 0.0
        %2829 = vmatpush1.msra.mxu0 0.0
        %2830 = vmatprep.subr.mxu0 0.0
        %2831 = vmatpush1.msra.mxu0 0.0
        %2832 = vmatprep.subr.mxu0 0.0
        %2833 = vmatpush1.msra.mxu0 0.0
        %2834 = vmatprep.subr.mxu0 0.0
        %2835 = vmatpush1.msra.mxu0 0.0
        %2836 = vmatprep.subr.mxu0 0.0
        %2837 = vmatpush1.msra.mxu0 0.0
        %2838 = vmatprep.subr.mxu0 0.0
        %2839 = vmatpush1.msra.mxu0 0.0
        %2840 = vmatprep.subr.mxu0 0.0
        %2841 = vmatpush1.msra.mxu0 0.0
        %2842 = vmatprep.subr.mxu0 0.0
        %2843 = vmatpush1.msra.mxu0 0.0
        %2844 = vmatprep.subr.mxu0 0.0
        %2845 = vmatpush1.msra.mxu0 0.0
        %2846 = vmatprep.subr.mxu0 0.0
        %2847 = vmatpush1.msra.mxu0 0.0
        %2848 = vmatprep.subr.mxu0 0.0
        %2849 = vmatpush1.msra.mxu0 0.0
        %2850 = vmatprep.subr.mxu0 0.0
        %2851 = vmatpush1.msra.mxu0 0.0
        %2852 = vmatprep.subr.mxu0 0.0
        %2853 = vmatpush1.msra.mxu0 0.0
        %2854 = vmatprep.subr.mxu0 0.0
        %2855 = vmatpush1.msra.mxu0 0.0
        %2856 = vmatprep.subr.mxu0 0.0
        %2857 = vmatpush1.msra.mxu0 0.0
        %2858 = vmatprep.subr.mxu0 0.0
        %2859 = vmatpush1.msra.mxu0 0.0
        %2860 = vmatprep.subr.mxu0 0.0
        %2861 = vmatpush1.msra.mxu0 0.0
        %2862 = vmatprep.subr.mxu0 0.0
        %2863 = vmatpush1.msra.mxu0 0.0
        %2864 = vmatprep.subr.mxu0 0.0
        %2865 = vmatpush1.msra.mxu0 0.0
        %2866 = vmatprep.mubr.f32.mxu0 0.0
        %2867 = vmatmul.mubr.f32.gmra.mrb[0].mxu0 %v2332
        %v2868 = vpop.f32.mrb[0].mxu0
        %v2869 = vadd.f32 %v2329, %v2868
        %v2870 = vpop.f32.mrb[0].mxu0
        %2871 = vdwg.mxu0
        %2874 = vrot.lane.b32.xlu0 %v2311, 32
        %v2875 = vpop.permute.xlu0 %2874
        %2876 = vrot.lane.b32.xlu0 %v2312, 32
        %v2877 = vpop.permute.xlu0 %2876
        %2880 = vmatprep.subr.mxu0 0.0
        %2881 = vmatpush1.msra.mxu0 %v2875
        %2882 = vmatprep.subr.mxu0 0.0
        %2883 = vmatpush1.msra.mxu0 %v2877
        %2884 = vmatprep.subr.mxu0 0.0
        %2885 = vmatpush1.msra.mxu0 0.0
        %2886 = vmatprep.subr.mxu0 0.0
        %2887 = vmatpush1.msra.mxu0 0.0
        %2888 = vmatprep.subr.mxu0 0.0
        %2889 = vmatpush1.msra.mxu0 0.0
        %2890 = vmatprep.subr.mxu0 0.0
        %2891 = vmatpush1.msra.mxu0 0.0
        %2892 = vmatprep.subr.mxu0 0.0
        %2893 = vmatpush1.msra.mxu0 0.0
        %2894 = vmatprep.subr.mxu0 0.0
        %2895 = vmatpush1.msra.mxu0 0.0
        %2896 = vmatprep.subr.mxu0 0.0
        %2897 = vmatpush1.msra.mxu0 0.0
        %2898 = vmatprep.subr.mxu0 0.0
        %2899 = vmatpush1.msra.mxu0 0.0
        %2900 = vmatprep.subr.mxu0 0.0
        %2901 = vmatpush1.msra.mxu0 0.0
        %2902 = vmatprep.subr.mxu0 0.0
        %2903 = vmatpush1.msra.mxu0 0.0
        %2904 = vmatprep.subr.mxu0 0.0
        %2905 = vmatpush1.msra.mxu0 0.0
        %2906 = vmatprep.subr.mxu0 0.0
        %2907 = vmatpush1.msra.mxu0 0.0
        %2908 = vmatprep.subr.mxu0 0.0
        %2909 = vmatpush1.msra.mxu0 0.0
        %2910 = vmatprep.subr.mxu0 0.0
        %2911 = vmatpush1.msra.mxu0 0.0
        %2912 = vmatprep.subr.mxu0 0.0
        %2913 = vmatpush1.msra.mxu0 0.0
        %2914 = vmatprep.subr.mxu0 0.0
        %2915 = vmatpush1.msra.mxu0 0.0
        %2916 = vmatprep.subr.mxu0 0.0
        %2917 = vmatpush1.msra.mxu0 0.0
        %2918 = vmatprep.subr.mxu0 0.0
        %2919 = vmatpush1.msra.mxu0 0.0
        %2920 = vmatprep.subr.mxu0 0.0
        %2921 = vmatpush1.msra.mxu0 0.0
        %2922 = vmatprep.subr.mxu0 0.0
        %2923 = vmatpush1.msra.mxu0 0.0
        %2924 = vmatprep.subr.mxu0 0.0
        %2925 = vmatpush1.msra.mxu0 0.0
        %2926 = vmatprep.subr.mxu0 0.0
        %2927 = vmatpush1.msra.mxu0 0.0
        %2928 = vmatprep.subr.mxu0 0.0
        %2929 = vmatpush1.msra.mxu0 0.0
        %2930 = vmatprep.subr.mxu0 0.0
        %2931 = vmatpush1.msra.mxu0 0.0
        %2932 = vmatprep.subr.mxu0 0.0
        %2933 = vmatpush1.msra.mxu0 0.0
        %2934 = vmatprep.subr.mxu0 0.0
        %2935 = vmatpush1.msra.mxu0 0.0
        %2936 = vmatprep.subr.mxu0 0.0
        %2937 = vmatpush1.msra.mxu0 0.0
        %2938 = vmatprep.subr.mxu0 0.0
        %2939 = vmatpush1.msra.mxu0 0.0
        %2940 = vmatprep.subr.mxu0 0.0
        %2941 = vmatpush1.msra.mxu0 0.0
        %2942 = vmatprep.subr.mxu0 0.0
        %2943 = vmatpush1.msra.mxu0 0.0
        %2944 = vmatprep.mubr.f32.mxu0 0.0
        %2945 = vmatmul.mubr.f32.gmra.mrb[0].mxu0 %v2332
        %v2946 = vpop.f32.mrb[0].mxu0
        %v2947 = vadd.f32 %v2329, %v2946
        %v2948 = vpop.f32.mrb[0].mxu0
        %2949 = vdwg.mxu0
        %v2950 = vmax.f32 %v2401, 0.0
        %v2951 = vmax.f32 %v2479, 0.0
        %v2952 = vmax.f32 %v2557, 0.0
        %v2953 = vmax.f32 %v2635, 0.0
        %v2954 = vmax.f32 %v2713, 0.0
        %v2955 = vmax.f32 %v2791, 0.0
        %v2956 = vmax.f32 %v2869, 0.0
        %v2957 = vmax.f32 %v2947, 0.0
        %v2958 = vld [vmem:[%s10] sm:$0xff]
        %v2959 = vld [vmem:[%s10 + $0x8] sm:$0xff]
        %v2961 = vsel %vm891, %v2958, 0
        %v2964 = vsel %vm891, %v2959, 0
        %2966 = vmatprep.subr.mxu0 0.0
        %2967 = vmatpush1.msra.mxu0 %v2950
        %2968 = vmatprep.subr.mxu0 0.0
        %2969 = vmatpush1.msra.mxu0 0.0
        %2970 = vmatprep.subr.mxu0 0.0
        %2971 = vmatpush1.msra.mxu0 0.0
        %2972 = vmatprep.subr.mxu0 0.0
        %2973 = vmatpush1.msra.mxu0 0.0
        %2974 = vmatprep.subr.mxu0 0.0
        %2975 = vmatpush1.msra.mxu0 0.0
        %2976 = vmatprep.subr.mxu0 0.0
        %2977 = vmatpush1.msra.mxu0 0.0
        %2978 = vmatprep.subr.mxu0 0.0
        %2979 = vmatpush1.msra.mxu0 0.0
        %2980 = vmatprep.subr.mxu0 0.0
        %2981 = vmatpush1.msra.mxu0 0.0
        %2982 = vmatprep.subr.mxu0 0.0
        %2983 = vmatpush1.msra.mxu0 0.0
        %2984 = vmatprep.subr.mxu0 0.0
        %2985 = vmatpush1.msra.mxu0 0.0
        %2986 = vmatprep.subr.mxu0 0.0
        %2987 = vmatpush1.msra.mxu0 0.0
        %2988 = vmatprep.subr.mxu0 0.0
        %2989 = vmatpush1.msra.mxu0 0.0
        %2990 = vmatprep.subr.mxu0 0.0
        %2991 = vmatpush1.msra.mxu0 0.0
        %2992 = vmatprep.subr.mxu0 0.0
        %2993 = vmatpush1.msra.mxu0 0.0
        %2994 = vmatprep.subr.mxu0 0.0
        %2995 = vmatpush1.msra.mxu0 0.0
        %2996 = vmatprep.subr.mxu0 0.0
        %2997 = vmatpush1.msra.mxu0 0.0
        %2998 = vmatprep.subr.mxu0 0.0
        %2999 = vmatpush1.msra.mxu0 0.0
        %3000 = vmatprep.subr.mxu0 0.0
        %3001 = vmatpush1.msra.mxu0 0.0
        %3002 = vmatprep.subr.mxu0 0.0
        %3003 = vmatpush1.msra.mxu0 0.0
        %3004 = vmatprep.subr.mxu0 0.0
        %3005 = vmatpush1.msra.mxu0 0.0
        %3006 = vmatprep.subr.mxu0 0.0
        %3007 = vmatpush1.msra.mxu0 0.0
        %3008 = vmatprep.subr.mxu0 0.0
        %3009 = vmatpush1.msra.mxu0 0.0
        %3010 = vmatprep.subr.mxu0 0.0
        %3011 = vmatpush1.msra.mxu0 0.0
        %3012 = vmatprep.subr.mxu0 0.0
        %3013 = vmatpush1.msra.mxu0 0.0
        %3014 = vmatprep.subr.mxu0 0.0
        %3015 = vmatpush1.msra.mxu0 0.0
        %3016 = vmatprep.subr.mxu0 0.0
        %3017 = vmatpush1.msra.mxu0 0.0
        %3018 = vmatprep.subr.mxu0 0.0
        %3019 = vmatpush1.msra.mxu0 0.0
        %3020 = vmatprep.subr.mxu0 0.0
        %3021 = vmatpush1.msra.mxu0 0.0
        %3022 = vmatprep.subr.mxu0 0.0
        %3023 = vmatpush1.msra.mxu0 0.0
        %3024 = vmatprep.subr.mxu0 0.0
        %3025 = vmatpush1.msra.mxu0 0.0
        %3026 = vmatprep.subr.mxu0 0.0
        %3027 = vmatpush1.msra.mxu0 0.0
        %3028 = vmatprep.subr.mxu0 0.0
        %3029 = vmatpush1.msra.mxu0 0.0
        %3030 = vmatprep.mubr.f32.mxu0 0.0
        %3031 = vmatmul.mubr.f32.gmra.mrb[0].mxu0 %v2961
        %v3032 = vpop.f32.mrb[0].mxu0
        %v3033 = vadd.f32 0.0, %v3032
        %v3034 = vpop.f32.mrb[0].mxu0
        %3035 = vmatprep.mubr.f32.mxu0 0.0
        %3036 = vmatmul.mubr.f32.gmra.mrb[0].mxu0 %v2964
        %v3037 = vpop.f32.mrb[0].mxu0
        %v3038 = vadd.f32 0.0, %v3037
        %v3039 = vpop.f32.mrb[0].mxu0
        %3040 = vdwg.mxu0
        %3041 = vmatprep.subr.mxu0 0.0
        %3042 = vmatpush1.msra.mxu0 %v2951
        %3043 = vmatprep.subr.mxu0 0.0
        %3044 = vmatpush1.msra.mxu0 0.0
        %3045 = vmatprep.subr.mxu0 0.0
        %3046 = vmatpush1.msra.mxu0 0.0
        %3047 = vmatprep.subr.mxu0 0.0
        %3048 = vmatpush1.msra.mxu0 0.0
        %3049 = vmatprep.subr.mxu0 0.0
        %3050 = vmatpush1.msra.mxu0 0.0
        %3051 = vmatprep.subr.mxu0 0.0
        %3052 = vmatpush1.msra.mxu0 0.0
        %3053 = vmatprep.subr.mxu0 0.0
        %3054 = vmatpush1.msra.mxu0 0.0
        %3055 = vmatprep.subr.mxu0 0.0
        %3056 = vmatpush1.msra.mxu0 0.0
        %3057 = vmatprep.subr.mxu0 0.0
        %3058 = vmatpush1.msra.mxu0 0.0
        %3059 = vmatprep.subr.mxu0 0.0
        %3060 = vmatpush1.msra.mxu0 0.0
        %3061 = vmatprep.subr.mxu0 0.0
        %3062 = vmatpush1.msra.mxu0 0.0
        %3063 = vmatprep.subr.mxu0 0.0
        %3064 = vmatpush1.msra.mxu0 0.0
        %3065 = vmatprep.subr.mxu0 0.0
        %3066 = vmatpush1.msra.mxu0 0.0
        %3067 = vmatprep.subr.mxu0 0.0
        %3068 = vmatpush1.msra.mxu0 0.0
        %3069 = vmatprep.subr.mxu0 0.0
        %3070 = vmatpush1.msra.mxu0 0.0
        %3071 = vmatprep.subr.mxu0 0.0
        %3072 = vmatpush1.msra.mxu0 0.0
        %3073 = vmatprep.subr.mxu0 0.0
        %3074 = vmatpush1.msra.mxu0 0.0
        %3075 = vmatprep.subr.mxu0 0.0
        %3076 = vmatpush1.msra.mxu0 0.0
        %3077 = vmatprep.subr.mxu0 0.0
        %3078 = vmatpush1.msra.mxu0 0.0
        %3079 = vmatprep.subr.mxu0 0.0
        %3080 = vmatpush1.msra.mxu0 0.0
        %3081 = vmatprep.subr.mxu0 0.0
        %3082 = vmatpush1.msra.mxu0 0.0
        %3083 = vmatprep.subr.mxu0 0.0
        %3084 = vmatpush1.msra.mxu0 0.0
        %3085 = vmatprep.subr.mxu0 0.0
        %3086 = vmatpush1.msra.mxu0 0.0
        %3087 = vmatprep.subr.mxu0 0.0
        %3088 = vmatpush1.msra.mxu0 0.0
        %3089 = vmatprep.subr.mxu0 0.0
        %3090 = vmatpush1.msra.mxu0 0.0
        %3091 = vmatprep.subr.mxu0 0.0
        %3092 = vmatpush1.msra.mxu0 0.0
        %3093 = vmatprep.subr.mxu0 0.0
        %3094 = vmatpush1.msra.mxu0 0.0
        %3095 = vmatprep.subr.mxu0 0.0
        %3096 = vmatpush1.msra.mxu0 0.0
        %3097 = vmatprep.subr.mxu0 0.0
        %3098 = vmatpush1.msra.mxu0 0.0
        %3099 = vmatprep.subr.mxu0 0.0
        %3100 = vmatpush1.msra.mxu0 0.0
        %3101 = vmatprep.subr.mxu0 0.0
        %3102 = vmatpush1.msra.mxu0 0.0
        %3103 = vmatprep.subr.mxu0 0.0
        %3104 = vmatpush1.msra.mxu0 0.0
        %3105 = vmatprep.mubr.f32.mxu0 0.0
        %3106 = vmatmul.mubr.f32.gmra.mrb[0].mxu0 %v2961
        %v3107 = vpop.f32.mrb[0].mxu0
        %v3108 = vadd.f32 0.0, %v3107
        %v3109 = vpop.f32.mrb[0].mxu0
        %3110 = vmatprep.mubr.f32.mxu0 0.0
        %3111 = vmatmul.mubr.f32.gmra.mrb[0].mxu0 %v2964
        %v3112 = vpop.f32.mrb[0].mxu0
        %v3113 = vadd.f32 0.0, %v3112
        %v3114 = vpop.f32.mrb[0].mxu0
        %3115 = vdwg.mxu0
        %3116 = vmatprep.subr.mxu0 0.0
        %3117 = vmatpush1.msra.mxu0 %v2952
        %3118 = vmatprep.subr.mxu0 0.0
        %3119 = vmatpush1.msra.mxu0 0.0
        %3120 = vmatprep.subr.mxu0 0.0
        %3121 = vmatpush1.msra.mxu0 0.0
        %3122 = vmatprep.subr.mxu0 0.0
        %3123 = vmatpush1.msra.mxu0 0.0
        %3124 = vmatprep.subr.mxu0 0.0
        %3125 = vmatpush1.msra.mxu0 0.0
        %3126 = vmatprep.subr.mxu0 0.0
        %3127 = vmatpush1.msra.mxu0 0.0
        %3128 = vmatprep.subr.mxu0 0.0
        %3129 = vmatpush1.msra.mxu0 0.0
        %3130 = vmatprep.subr.mxu0 0.0
        %3131 = vmatpush1.msra.mxu0 0.0
        %3132 = vmatprep.subr.mxu0 0.0
        %3133 = vmatpush1.msra.mxu0 0.0
        %3134 = vmatprep.subr.mxu0 0.0
        %3135 = vmatpush1.msra.mxu0 0.0
        %3136 = vmatprep.subr.mxu0 0.0
        %3137 = vmatpush1.msra.mxu0 0.0
        %3138 = vmatprep.subr.mxu0 0.0
        %3139 = vmatpush1.msra.mxu0 0.0
        %3140 = vmatprep.subr.mxu0 0.0
        %3141 = vmatpush1.msra.mxu0 0.0
        %3142 = vmatprep.subr.mxu0 0.0
        %3143 = vmatpush1.msra.mxu0 0.0
        %3144 = vmatprep.subr.mxu0 0.0
        %3145 = vmatpush1.msra.mxu0 0.0
        %3146 = vmatprep.subr.mxu0 0.0
        %3147 = vmatpush1.msra.mxu0 0.0
        %3148 = vmatprep.subr.mxu0 0.0
        %3149 = vmatpush1.msra.mxu0 0.0
        %3150 = vmatprep.subr.mxu0 0.0
        %3151 = vmatpush1.msra.mxu0 0.0
        %3152 = vmatprep.subr.mxu0 0.0
        %3153 = vmatpush1.msra.mxu0 0.0
        %3154 = vmatprep.subr.mxu0 0.0
        %3155 = vmatpush1.msra.mxu0 0.0
        %3156 = vmatprep.subr.mxu0 0.0
        %3157 = vmatpush1.msra.mxu0 0.0
        %3158 = vmatprep.subr.mxu0 0.0
        %3159 = vmatpush1.msra.mxu0 0.0
        %3160 = vmatprep.subr.mxu0 0.0
        %3161 = vmatpush1.msra.mxu0 0.0
        %3162 = vmatprep.subr.mxu0 0.0
        %3163 = vmatpush1.msra.mxu0 0.0
        %3164 = vmatprep.subr.mxu0 0.0
        %3165 = vmatpush1.msra.mxu0 0.0
        %3166 = vmatprep.subr.mxu0 0.0
        %3167 = vmatpush1.msra.mxu0 0.0
        %3168 = vmatprep.subr.mxu0 0.0
        %3169 = vmatpush1.msra.mxu0 0.0
        %3170 = vmatprep.subr.mxu0 0.0
        %3171 = vmatpush1.msra.mxu0 0.0
        %3172 = vmatprep.subr.mxu0 0.0
        %3173 = vmatpush1.msra.mxu0 0.0
        %3174 = vmatprep.subr.mxu0 0.0
        %3175 = vmatpush1.msra.mxu0 0.0
        %3176 = vmatprep.subr.mxu0 0.0
        %3177 = vmatpush1.msra.mxu0 0.0
        %3178 = vmatprep.subr.mxu0 0.0
        %3179 = vmatpush1.msra.mxu0 0.0
        %3180 = vmatprep.mubr.f32.mxu0 0.0
        %3181 = vmatmul.mubr.f32.gmra.mrb[0].mxu0 %v2961
        %v3182 = vpop.f32.mrb[0].mxu0
        %v3183 = vadd.f32 0.0, %v3182
        %v3184 = vpop.f32.mrb[0].mxu0
        %3185 = vmatprep.mubr.f32.mxu0 0.0
        %3186 = vmatmul.mubr.f32.gmra.mrb[0].mxu0 %v2964
        %v3187 = vpop.f32.mrb[0].mxu0
        %v3188 = vadd.f32 0.0, %v3187
        %v3189 = vpop.f32.mrb[0].mxu0
        %3190 = vdwg.mxu0
        %3191 = vmatprep.subr.mxu0 0.0
        %3192 = vmatpush1.msra.mxu0 %v2953
        %3193 = vmatprep.subr.mxu0 0.0
        %3194 = vmatpush1.msra.mxu0 0.0
        %3195 = vmatprep.subr.mxu0 0.0
        %3196 = vmatpush1.msra.mxu0 0.0
        %3197 = vmatprep.subr.mxu0 0.0
        %3198 = vmatpush1.msra.mxu0 0.0
        %3199 = vmatprep.subr.mxu0 0.0
        %3200 = vmatpush1.msra.mxu0 0.0
        %3201 = vmatprep.subr.mxu0 0.0
        %3202 = vmatpush1.msra.mxu0 0.0
        %3203 = vmatprep.subr.mxu0 0.0
        %3204 = vmatpush1.msra.mxu0 0.0
        %3205 = vmatprep.subr.mxu0 0.0
        %3206 = vmatpush1.msra.mxu0 0.0
        %3207 = vmatprep.subr.mxu0 0.0
        %3208 = vmatpush1.msra.mxu0 0.0
        %3209 = vmatprep.subr.mxu0 0.0
        %3210 = vmatpush1.msra.mxu0 0.0
        %3211 = vmatprep.subr.mxu0 0.0
        %3212 = vmatpush1.msra.mxu0 0.0
        %3213 = vmatprep.subr.mxu0 0.0
        %3214 = vmatpush1.msra.mxu0 0.0
        %3215 = vmatprep.subr.mxu0 0.0
        %3216 = vmatpush1.msra.mxu0 0.0
        %3217 = vmatprep.subr.mxu0 0.0
        %3218 = vmatpush1.msra.mxu0 0.0
        %3219 = vmatprep.subr.mxu0 0.0
        %3220 = vmatpush1.msra.mxu0 0.0
        %3221 = vmatprep.subr.mxu0 0.0
        %3222 = vmatpush1.msra.mxu0 0.0
        %3223 = vmatprep.subr.mxu0 0.0
        %3224 = vmatpush1.msra.mxu0 0.0
        %3225 = vmatprep.subr.mxu0 0.0
        %3226 = vmatpush1.msra.mxu0 0.0
        %3227 = vmatprep.subr.mxu0 0.0
        %3228 = vmatpush1.msra.mxu0 0.0
        %3229 = vmatprep.subr.mxu0 0.0
        %3230 = vmatpush1.msra.mxu0 0.0
        %3231 = vmatprep.subr.mxu0 0.0
        %3232 = vmatpush1.msra.mxu0 0.0
        %3233 = vmatprep.subr.mxu0 0.0
        %3234 = vmatpush1.msra.mxu0 0.0
        %3235 = vmatprep.subr.mxu0 0.0
        %3236 = vmatpush1.msra.mxu0 0.0
        %3237 = vmatprep.subr.mxu0 0.0
        %3238 = vmatpush1.msra.mxu0 0.0
        %3239 = vmatprep.subr.mxu0 0.0
        %3240 = vmatpush1.msra.mxu0 0.0
        %3241 = vmatprep.subr.mxu0 0.0
        %3242 = vmatpush1.msra.mxu0 0.0
        %3243 = vmatprep.subr.mxu0 0.0
        %3244 = vmatpush1.msra.mxu0 0.0
        %3245 = vmatprep.subr.mxu0 0.0
        %3246 = vmatpush1.msra.mxu0 0.0
        %3247 = vmatprep.subr.mxu0 0.0
        %3248 = vmatpush1.msra.mxu0 0.0
        %3249 = vmatprep.subr.mxu0 0.0
        %3250 = vmatpush1.msra.mxu0 0.0
        %3251 = vmatprep.subr.mxu0 0.0
        %3252 = vmatpush1.msra.mxu0 0.0
        %3253 = vmatprep.subr.mxu0 0.0
        %3254 = vmatpush1.msra.mxu0 0.0
        %3255 = vmatprep.mubr.f32.mxu0 0.0
        %3256 = vmatmul.mubr.f32.gmra.mrb[0].mxu0 %v2961
        %v3257 = vpop.f32.mrb[0].mxu0
        %v3258 = vadd.f32 0.0, %v3257
        %v3259 = vpop.f32.mrb[0].mxu0
        %3260 = vmatprep.mubr.f32.mxu0 0.0
        %3261 = vmatmul.mubr.f32.gmra.mrb[0].mxu0 %v2964
        %v3262 = vpop.f32.mrb[0].mxu0
        %v3263 = vadd.f32 0.0, %v3262
        %v3264 = vpop.f32.mrb[0].mxu0
        %3265 = vdwg.mxu0
        %3266 = vmatprep.subr.mxu0 0.0
        %3267 = vmatpush1.msra.mxu0 %v2954
        %3268 = vmatprep.subr.mxu0 0.0
        %3269 = vmatpush1.msra.mxu0 0.0
        %3270 = vmatprep.subr.mxu0 0.0
        %3271 = vmatpush1.msra.mxu0 0.0
        %3272 = vmatprep.subr.mxu0 0.0
        %3273 = vmatpush1.msra.mxu0 0.0
        %3274 = vmatprep.subr.mxu0 0.0
        %3275 = vmatpush1.msra.mxu0 0.0
        %3276 = vmatprep.subr.mxu0 0.0
        %3277 = vmatpush1.msra.mxu0 0.0
        %3278 = vmatprep.subr.mxu0 0.0
        %3279 = vmatpush1.msra.mxu0 0.0
        %3280 = vmatprep.subr.mxu0 0.0
        %3281 = vmatpush1.msra.mxu0 0.0
        %3282 = vmatprep.subr.mxu0 0.0
        %3283 = vmatpush1.msra.mxu0 0.0
        %3284 = vmatprep.subr.mxu0 0.0
        %3285 = vmatpush1.msra.mxu0 0.0
        %3286 = vmatprep.subr.mxu0 0.0
        %3287 = vmatpush1.msra.mxu0 0.0
        %3288 = vmatprep.subr.mxu0 0.0
        %3289 = vmatpush1.msra.mxu0 0.0
        %3290 = vmatprep.subr.mxu0 0.0
        %3291 = vmatpush1.msra.mxu0 0.0
        %3292 = vmatprep.subr.mxu0 0.0
        %3293 = vmatpush1.msra.mxu0 0.0
        %3294 = vmatprep.subr.mxu0 0.0
        %3295 = vmatpush1.msra.mxu0 0.0
        %3296 = vmatprep.subr.mxu0 0.0
        %3297 = vmatpush1.msra.mxu0 0.0
        %3298 = vmatprep.subr.mxu0 0.0
        %3299 = vmatpush1.msra.mxu0 0.0
        %3300 = vmatprep.subr.mxu0 0.0
        %3301 = vmatpush1.msra.mxu0 0.0
        %3302 = vmatprep.subr.mxu0 0.0
        %3303 = vmatpush1.msra.mxu0 0.0
        %3304 = vmatprep.subr.mxu0 0.0
        %3305 = vmatpush1.msra.mxu0 0.0
        %3306 = vmatprep.subr.mxu0 0.0
        %3307 = vmatpush1.msra.mxu0 0.0
        %3308 = vmatprep.subr.mxu0 0.0
        %3309 = vmatpush1.msra.mxu0 0.0
        %3310 = vmatprep.subr.mxu0 0.0
        %3311 = vmatpush1.msra.mxu0 0.0
        %3312 = vmatprep.subr.mxu0 0.0
        %3313 = vmatpush1.msra.mxu0 0.0
        %3314 = vmatprep.subr.mxu0 0.0
        %3315 = vmatpush1.msra.mxu0 0.0
        %3316 = vmatprep.subr.mxu0 0.0
        %3317 = vmatpush1.msra.mxu0 0.0
        %3318 = vmatprep.subr.mxu0 0.0
        %3319 = vmatpush1.msra.mxu0 0.0
        %3320 = vmatprep.subr.mxu0 0.0
        %3321 = vmatpush1.msra.mxu0 0.0
        %3322 = vmatprep.subr.mxu0 0.0
        %3323 = vmatpush1.msra.mxu0 0.0
        %3324 = vmatprep.subr.mxu0 0.0
        %3325 = vmatpush1.msra.mxu0 0.0
        %3326 = vmatprep.subr.mxu0 0.0
        %3327 = vmatpush1.msra.mxu0 0.0
        %3328 = vmatprep.subr.mxu0 0.0
        %3329 = vmatpush1.msra.mxu0 0.0
        %3330 = vmatprep.mubr.f32.mxu0 0.0
        %3331 = vmatmul.mubr.f32.gmra.mrb[0].mxu0 %v2961
        %v3332 = vpop.f32.mrb[0].mxu0
        %v3333 = vadd.f32 0.0, %v3332
        %v3334 = vpop.f32.mrb[0].mxu0
        %3335 = vmatprep.mubr.f32.mxu0 0.0
        %3336 = vmatmul.mubr.f32.gmra.mrb[0].mxu0 %v2964
        %v3337 = vpop.f32.mrb[0].mxu0
        %v3338 = vadd.f32 0.0, %v3337
        %v3339 = vpop.f32.mrb[0].mxu0
        %3340 = vdwg.mxu0
        %3341 = vmatprep.subr.mxu0 0.0
        %3342 = vmatpush1.msra.mxu0 %v2955
        %3343 = vmatprep.subr.mxu0 0.0
        %3344 = vmatpush1.msra.mxu0 0.0
        %3345 = vmatprep.subr.mxu0 0.0
        %3346 = vmatpush1.msra.mxu0 0.0
        %3347 = vmatprep.subr.mxu0 0.0
        %3348 = vmatpush1.msra.mxu0 0.0
        %3349 = vmatprep.subr.mxu0 0.0
        %3350 = vmatpush1.msra.mxu0 0.0
        %3351 = vmatprep.subr.mxu0 0.0
        %3352 = vmatpush1.msra.mxu0 0.0
        %3353 = vmatprep.subr.mxu0 0.0
        %3354 = vmatpush1.msra.mxu0 0.0
        %3355 = vmatprep.subr.mxu0 0.0
        %3356 = vmatpush1.msra.mxu0 0.0
        %3357 = vmatprep.subr.mxu0 0.0
        %3358 = vmatpush1.msra.mxu0 0.0
        %3359 = vmatprep.subr.mxu0 0.0
        %3360 = vmatpush1.msra.mxu0 0.0
        %3361 = vmatprep.subr.mxu0 0.0
        %3362 = vmatpush1.msra.mxu0 0.0
        %3363 = vmatprep.subr.mxu0 0.0
        %3364 = vmatpush1.msra.mxu0 0.0
        %3365 = vmatprep.subr.mxu0 0.0
        %3366 = vmatpush1.msra.mxu0 0.0
        %3367 = vmatprep.subr.mxu0 0.0
        %3368 = vmatpush1.msra.mxu0 0.0
        %3369 = vmatprep.subr.mxu0 0.0
        %3370 = vmatpush1.msra.mxu0 0.0
        %3371 = vmatprep.subr.mxu0 0.0
        %3372 = vmatpush1.msra.mxu0 0.0
        %3373 = vmatprep.subr.mxu0 0.0
        %3374 = vmatpush1.msra.mxu0 0.0
        %3375 = vmatprep.subr.mxu0 0.0
        %3376 = vmatpush1.msra.mxu0 0.0
        %3377 = vmatprep.subr.mxu0 0.0
        %3378 = vmatpush1.msra.mxu0 0.0
        %3379 = vmatprep.subr.mxu0 0.0
        %3380 = vmatpush1.msra.mxu0 0.0
        %3381 = vmatprep.subr.mxu0 0.0
        %3382 = vmatpush1.msra.mxu0 0.0
        %3383 = vmatprep.subr.mxu0 0.0
        %3384 = vmatpush1.msra.mxu0 0.0
        %3385 = vmatprep.subr.mxu0 0.0
        %3386 = vmatpush1.msra.mxu0 0.0
        %3387 = vmatprep.subr.mxu0 0.0
        %3388 = vmatpush1.msra.mxu0 0.0
        %3389 = vmatprep.subr.mxu0 0.0
        %3390 = vmatpush1.msra.mxu0 0.0
        %3391 = vmatprep.subr.mxu0 0.0
        %3392 = vmatpush1.msra.mxu0 0.0
        %3393 = vmatprep.subr.mxu0 0.0
        %3394 = vmatpush1.msra.mxu0 0.0
        %3395 = vmatprep.subr.mxu0 0.0
        %3396 = vmatpush1.msra.mxu0 0.0
        %3397 = vmatprep.subr.mxu0 0.0
        %3398 = vmatpush1.msra.mxu0 0.0
        %3399 = vmatprep.subr.mxu0 0.0
        %3400 = vmatpush1.msra.mxu0 0.0
        %3401 = vmatprep.subr.mxu0 0.0
        %3402 = vmatpush1.msra.mxu0 0.0
        %3403 = vmatprep.subr.mxu0 0.0
        %3404 = vmatpush1.msra.mxu0 0.0
        %3405 = vmatprep.mubr.f32.mxu0 0.0
        %3406 = vmatmul.mubr.f32.gmra.mrb[0].mxu0 %v2961
        %v3407 = vpop.f32.mrb[0].mxu0
        %v3408 = vadd.f32 0.0, %v3407
        %v3409 = vpop.f32.mrb[0].mxu0
        %3410 = vmatprep.mubr.f32.mxu0 0.0
        %3411 = vmatmul.mubr.f32.gmra.mrb[0].mxu0 %v2964
        %v3412 = vpop.f32.mrb[0].mxu0
        %v3413 = vadd.f32 0.0, %v3412
        %v3414 = vpop.f32.mrb[0].mxu0
        %3415 = vdwg.mxu0
        %3416 = vmatprep.subr.mxu0 0.0
        %3417 = vmatpush1.msra.mxu0 %v2956
        %3418 = vmatprep.subr.mxu0 0.0
        %3419 = vmatpush1.msra.mxu0 0.0
        %3420 = vmatprep.subr.mxu0 0.0
        %3421 = vmatpush1.msra.mxu0 0.0
        %3422 = vmatprep.subr.mxu0 0.0
        %3423 = vmatpush1.msra.mxu0 0.0
        %3424 = vmatprep.subr.mxu0 0.0
        %3425 = vmatpush1.msra.mxu0 0.0
        %3426 = vmatprep.subr.mxu0 0.0
        %3427 = vmatpush1.msra.mxu0 0.0
        %3428 = vmatprep.subr.mxu0 0.0
        %3429 = vmatpush1.msra.mxu0 0.0
        %3430 = vmatprep.subr.mxu0 0.0
        %3431 = vmatpush1.msra.mxu0 0.0
        %3432 = vmatprep.subr.mxu0 0.0
        %3433 = vmatpush1.msra.mxu0 0.0
        %3434 = vmatprep.subr.mxu0 0.0
        %3435 = vmatpush1.msra.mxu0 0.0
        %3436 = vmatprep.subr.mxu0 0.0
        %3437 = vmatpush1.msra.mxu0 0.0
        %3438 = vmatprep.subr.mxu0 0.0
        %3439 = vmatpush1.msra.mxu0 0.0
        %3440 = vmatprep.subr.mxu0 0.0
        %3441 = vmatpush1.msra.mxu0 0.0
        %3442 = vmatprep.subr.mxu0 0.0
        %3443 = vmatpush1.msra.mxu0 0.0
        %3444 = vmatprep.subr.mxu0 0.0
        %3445 = vmatpush1.msra.mxu0 0.0
        %3446 = vmatprep.subr.mxu0 0.0
        %3447 = vmatpush1.msra.mxu0 0.0
        %3448 = vmatprep.subr.mxu0 0.0
        %3449 = vmatpush1.msra.mxu0 0.0
        %3450 = vmatprep.subr.mxu0 0.0
        %3451 = vmatpush1.msra.mxu0 0.0
        %3452 = vmatprep.subr.mxu0 0.0
        %3453 = vmatpush1.msra.mxu0 0.0
        %3454 = vmatprep.subr.mxu0 0.0
        %3455 = vmatpush1.msra.mxu0 0.0
        %3456 = vmatprep.subr.mxu0 0.0
        %3457 = vmatpush1.msra.mxu0 0.0
        %3458 = vmatprep.subr.mxu0 0.0
        %3459 = vmatpush1.msra.mxu0 0.0
        %3460 = vmatprep.subr.mxu0 0.0
        %3461 = vmatpush1.msra.mxu0 0.0
        %3462 = vmatprep.subr.mxu0 0.0
        %3463 = vmatpush1.msra.mxu0 0.0
        %3464 = vmatprep.subr.mxu0 0.0
        %3465 = vmatpush1.msra.mxu0 0.0
        %3466 = vmatprep.subr.mxu0 0.0
        %3467 = vmatpush1.msra.mxu0 0.0
        %3468 = vmatprep.subr.mxu0 0.0
        %3469 = vmatpush1.msra.mxu0 0.0
        %3470 = vmatprep.subr.mxu0 0.0
        %3471 = vmatpush1.msra.mxu0 0.0
        %3472 = vmatprep.subr.mxu0 0.0
        %3473 = vmatpush1.msra.mxu0 0.0
        %3474 = vmatprep.subr.mxu0 0.0
        %3475 = vmatpush1.msra.mxu0 0.0
        %3476 = vmatprep.subr.mxu0 0.0
        %3477 = vmatpush1.msra.mxu0 0.0
        %3478 = vmatprep.subr.mxu0 0.0
        %3479 = vmatpush1.msra.mxu0 0.0
        %3480 = vmatprep.mubr.f32.mxu0 0.0
        %3481 = vmatmul.mubr.f32.gmra.mrb[0].mxu0 %v2961
        %v3482 = vpop.f32.mrb[0].mxu0
        %v3483 = vadd.f32 0.0, %v3482
        %v3484 = vpop.f32.mrb[0].mxu0
        %3485 = vmatprep.mubr.f32.mxu0 0.0
        %3486 = vmatmul.mubr.f32.gmra.mrb[0].mxu0 %v2964
        %v3487 = vpop.f32.mrb[0].mxu0
        %v3488 = vadd.f32 0.0, %v3487
        %v3489 = vpop.f32.mrb[0].mxu0
        %3490 = vdwg.mxu0
        %3491 = vmatprep.subr.mxu0 0.0
        %3492 = vmatpush1.msra.mxu0 %v2957
        %3493 = vmatprep.subr.mxu0 0.0
        %3494 = vmatpush1.msra.mxu0 0.0
        %3495 = vmatprep.subr.mxu0 0.0
        %3496 = vmatpush1.msra.mxu0 0.0
        %3497 = vmatprep.subr.mxu0 0.0
        %3498 = vmatpush1.msra.mxu0 0.0
        %3499 = vmatprep.subr.mxu0 0.0
        %3500 = vmatpush1.msra.mxu0 0.0
        %3501 = vmatprep.subr.mxu0 0.0
        %3502 = vmatpush1.msra.mxu0 0.0
        %3503 = vmatprep.subr.mxu0 0.0
        %3504 = vmatpush1.msra.mxu0 0.0
        %3505 = vmatprep.subr.mxu0 0.0
        %3506 = vmatpush1.msra.mxu0 0.0
        %3507 = vmatprep.subr.mxu0 0.0
        %3508 = vmatpush1.msra.mxu0 0.0
        %3509 = vmatprep.subr.mxu0 0.0
        %3510 = vmatpush1.msra.mxu0 0.0
        %3511 = vmatprep.subr.mxu0 0.0
        %3512 = vmatpush1.msra.mxu0 0.0
        %3513 = vmatprep.subr.mxu0 0.0
        %3514 = vmatpush1.msra.mxu0 0.0
        %3515 = vmatprep.subr.mxu0 0.0
        %3516 = vmatpush1.msra.mxu0 0.0
        %3517 = vmatprep.subr.mxu0 0.0
        %3518 = vmatpush1.msra.mxu0 0.0
        %3519 = vmatprep.subr.mxu0 0.0
        %3520 = vmatpush1.msra.mxu0 0.0
        %3521 = vmatprep.subr.mxu0 0.0
        %3522 = vmatpush1.msra.mxu0 0.0
        %3523 = vmatprep.subr.mxu0 0.0
        %3524 = vmatpush1.msra.mxu0 0.0
        %3525 = vmatprep.subr.mxu0 0.0
        %3526 = vmatpush1.msra.mxu0 0.0
        %3527 = vmatprep.subr.mxu0 0.0
        %3528 = vmatpush1.msra.mxu0 0.0
        %3529 = vmatprep.subr.mxu0 0.0
        %3530 = vmatpush1.msra.mxu0 0.0
        %3531 = vmatprep.subr.mxu0 0.0
        %3532 = vmatpush1.msra.mxu0 0.0
        %3533 = vmatprep.subr.mxu0 0.0
        %3534 = vmatpush1.msra.mxu0 0.0
        %3535 = vmatprep.subr.mxu0 0.0
        %3536 = vmatpush1.msra.mxu0 0.0
        %3537 = vmatprep.subr.mxu0 0.0
        %3538 = vmatpush1.msra.mxu0 0.0
        %3539 = vmatprep.subr.mxu0 0.0
        %3540 = vmatpush1.msra.mxu0 0.0
        %3541 = vmatprep.subr.mxu0 0.0
        %3542 = vmatpush1.msra.mxu0 0.0
        %3543 = vmatprep.subr.mxu0 0.0
        %3544 = vmatpush1.msra.mxu0 0.0
        %3545 = vmatprep.subr.mxu0 0.0
        %3546 = vmatpush1.msra.mxu0 0.0
        %3547 = vmatprep.subr.mxu0 0.0
        %3548 = vmatpush1.msra.mxu0 0.0
        %3549 = vmatprep.subr.mxu0 0.0
        %3550 = vmatpush1.msra.mxu0 0.0
        %3551 = vmatprep.subr.mxu0 0.0
        %3552 = vmatpush1.msra.mxu0 0.0
        %3553 = vmatprep.subr.mxu0 0.0
        %3554 = vmatpush1.msra.mxu0 0.0
        %3555 = vmatprep.mubr.f32.mxu0 0.0
        %3556 = vmatmul.mubr.f32.gmra.mrb[0].mxu0 %v2961
        %v3557 = vpop.f32.mrb[0].mxu0
        %v3558 = vadd.f32 0.0, %v3557
        %v3559 = vpop.f32.mrb[0].mxu0
        %3560 = vmatprep.mubr.f32.mxu0 0.0
        %3561 = vmatmul.mubr.f32.gmra.mrb[0].mxu0 %v2964
        %v3562 = vpop.f32.mrb[0].mxu0
        %v3563 = vadd.f32 0.0, %v3562
        %v3564 = vpop.f32.mrb[0].mxu0
        %3565 = vdwg.mxu0
        %v3566 = vmul.f32 %v3033, 0.25
        %v3567 = vmul.f32 %v3038, 0.25
        %v3568 = vmul.f32 %v3108, 0.25
        %v3569 = vmul.f32 %v3113, 0.25
        %v3570 = vmul.f32 %v3183, 0.25
        %v3571 = vmul.f32 %v3188, 0.25
        %v3572 = vmul.f32 %v3258, 0.25
        %v3573 = vmul.f32 %v3263, 0.25
        %v3574 = vmul.f32 %v3333, 0.25
        %v3575 = vmul.f32 %v3338, 0.25
        %v3576 = vmul.f32 %v3408, 0.25
        %v3577 = vmul.f32 %v3413, 0.25
        %v3578 = vmul.f32 %v3483, 0.25
        %v3579 = vmul.f32 %v3488, 0.25
        %v3580 = vmul.f32 %v3033, 0.75
        %v3581 = vmul.f32 %v3038, 0.75
        %v3582 = vmul.f32 %v3108, 0.75
        %v3583 = vmul.f32 %v3113, 0.75
        %v3584 = vmul.f32 %v3183, 0.75
        %v3585 = vmul.f32 %v3188, 0.75
        %v3586 = vmul.f32 %v3258, 0.75
        %v3587 = vmul.f32 %v3263, 0.75
        %v3588 = vmul.f32 %v3333, 0.75
        %v3589 = vmul.f32 %v3338, 0.75
        %v3590 = vmul.f32 %v3408, 0.75
        %v3591 = vmul.f32 %v3413, 0.75
        %v3592 = vmul.f32 %v3483, 0.75
        %v3593 = vmul.f32 %v3488, 0.75
        %v3594 = vmul.f32 %v3558, 0.75
        %v3595 = vmul.f32 %v3563, 0.75
        %v3596 = vadd.f32 %v3566, %v3580
        %v3597 = vadd.f32 %v3567, %v3581
        %v3598 = vadd.f32 %v3566, %v3582
        %v3599 = vadd.f32 %v3567, %v3583
        %v3600 = vadd.f32 %v3568, %v3584
        %v3601 = vadd.f32 %v3569, %v3585
        %v3602 = vadd.f32 %v3570, %v3586
        %v3603 = vadd.f32 %v3571, %v3587
        %v3604 = vadd.f32 %v3572, %v3588
        %v3605 = vadd.f32 %v3573, %v3589
        %v3606 = vadd.f32 %v3574, %v3590
        %v3607 = vadd.f32 %v3575, %v3591
        %v3608 = vadd.f32 %v3576, %v3592
        %v3609 = vadd.f32 %v3577, %v3593
        %v3610 = vadd.f32 %v3578, %v3594
        %v3611 = vadd.f32 %v3579, %v3595
        %v3612 = vmul.f32 %v3558, 0.25
        %v3613 = vmul.f32 %v3563, 0.25
        %v3614 = vadd.f32 %v3580, %v3568
        %v3615 = vadd.f32 %v3581, %v3569
        %v3616 = vadd.f32 %v3582, %v3570
        %v3617 = vadd.f32 %v3583, %v3571
        %v3618 = vadd.f32 %v3584, %v3572
        %v3619 = vadd.f32 %v3585, %v3573
        %v3620 = vadd.f32 %v3586, %v3574
        %v3621 = vadd.f32 %v3587, %v3575
        %v3622 = vadd.f32 %v3588, %v3576
        %v3623 = vadd.f32 %v3589, %v3577
        %v3624 = vadd.f32 %v3590, %v3578
        %v3625 = vadd.f32 %v3591, %v3579
        %v3626 = vadd.f32 %v3592, %v3612
        %v3627 = vadd.f32 %v3593, %v3613
        %v3628 = vadd.f32 %v3594, %v3612
        %v3629 = vadd.f32 %v3595, %v3613
        %3662 = vrot.lane.b32.xlu0 %v1422, 32
        %v3663 = vpop.permute.xlu0 %3662
        %3664 = vrot.lane.b32.xlu0 %v1423, 32
        %v3665 = vpop.permute.xlu0 %3664
        %3666 = vrot.lane.b32.xlu0 %v1432, 32
        %v3667 = vpop.permute.xlu0 %3666
        %3668 = vrot.lane.b32.xlu0 %v1433, 32
        %v3669 = vpop.permute.xlu0 %3668
        %3670 = vrot.lane.b32.xlu0 %v1442, 32
        %v3671 = vpop.permute.xlu0 %3670
        %3672 = vrot.lane.b32.xlu0 %v1443, 32
        %v3673 = vpop.permute.xlu0 %3672
        %3674 = vrot.lane.b32.xlu0 %v1452, 32
        %v3675 = vpop.permute.xlu0 %3674
        %3676 = vrot.lane.b32.xlu0 %v1453, 32
        %v3677 = vpop.permute.xlu0 %3676
        %3678 = vrot.lane.b32.xlu0 %v1458, 32
        %v3679 = vpop.permute.xlu0 %3678
        %3680 = vrot.lane.b32.xlu0 %v1459, 32
        %v3681 = vpop.permute.xlu0 %3680
        %3682 = vrot.lane.b32.xlu0 %v1464, 32
        %v3683 = vpop.permute.xlu0 %3682
        %3684 = vrot.lane.b32.xlu0 %v1465, 32
        %v3685 = vpop.permute.xlu0 %3684
        %3686 = vrot.lane.b32.xlu0 %v1470, 32
        %v3687 = vpop.permute.xlu0 %3686
        %3688 = vrot.lane.b32.xlu0 %v1471, 32
        %v3689 = vpop.permute.xlu0 %3688
        %3690 = vrot.lane.b32.xlu0 %v1476, 32
        %v3691 = vpop.permute.xlu0 %3690
        %3692 = vrot.lane.b32.xlu0 %v1477, 32
        %v3693 = vpop.permute.xlu0 %3692
        %3694 = vrot.lane.b32.xlu0 %v1424, 32
        %v3695 = vpop.permute.xlu0 %3694
        %3696 = vrot.lane.b32.xlu0 %v1425, 32
        %v3697 = vpop.permute.xlu0 %3696
        %3698 = vrot.lane.b32.xlu0 %v1434, 32
        %v3699 = vpop.permute.xlu0 %3698
        %3700 = vrot.lane.b32.xlu0 %v1435, 32
        %v3701 = vpop.permute.xlu0 %3700
        %3702 = vrot.lane.b32.xlu0 %v1444, 32
        %v3703 = vpop.permute.xlu0 %3702
        %3704 = vrot.lane.b32.xlu0 %v1445, 32
        %v3705 = vpop.permute.xlu0 %3704
        %3706 = vrot.lane.b32.xlu0 %v1454, 32
        %v3707 = vpop.permute.xlu0 %3706
        %3708 = vrot.lane.b32.xlu0 %v1455, 32
        %v3709 = vpop.permute.xlu0 %3708
        %3710 = vrot.lane.b32.xlu0 %v1460, 32
        %v3711 = vpop.permute.xlu0 %3710
        %3712 = vrot.lane.b32.xlu0 %v1461, 32
        %v3713 = vpop.permute.xlu0 %3712
        %3714 = vrot.lane.b32.xlu0 %v1466, 32
        %v3715 = vpop.permute.xlu0 %3714
        %3716 = vrot.lane.b32.xlu0 %v1467, 32
        %v3717 = vpop.permute.xlu0 %3716
        %3718 = vrot.lane.b32.xlu0 %v1472, 32
        %v3719 = vpop.permute.xlu0 %3718
        %3720 = vrot.lane.b32.xlu0 %v1473, 32
        %v3721 = vpop.permute.xlu0 %3720
        %3722 = vrot.lane.b32.xlu0 %v1478, 32
        %v3723 = vpop.permute.xlu0 %3722
        %3724 = vrot.lane.b32.xlu0 %v1479, 32
        %v3725 = vpop.permute.xlu0 %3724
        %3790 = vrot.lane.b32.xlu0 %v2197, 64
        %v3791 = vpop.permute.xlu0 %3790
        %3792 = vrot.lane.b32.xlu0 %v2198, 64
        %v3793 = vpop.permute.xlu0 %3792
        %3794 = vrot.lane.b32.xlu0 %v2219, 64
        %v3795 = vpop.permute.xlu0 %3794
        %3796 = vrot.lane.b32.xlu0 %v2220, 64
        %v3797 = vpop.permute.xlu0 %3796
        %3798 = vrot.lane.b32.xlu0 %v2229, 64
        %v3799 = vpop.permute.xlu0 %3798
        %3800 = vrot.lane.b32.xlu0 %v2230, 64
        %v3801 = vpop.permute.xlu0 %3800
        %3802 = vrot.lane.b32.xlu0 %v2239, 64
        %v3803 = vpop.permute.xlu0 %3802
        %3804 = vrot.lane.b32.xlu0 %v2240, 64
        %v3805 = vpop.permute.xlu0 %3804
        %3806 = vrot.lane.b32.xlu0 %v2199, 64
        %v3807 = vpop.permute.xlu0 %3806
        %3808 = vrot.lane.b32.xlu0 %v2200, 64
        %v3809 = vpop.permute.xlu0 %3808
        %3810 = vrot.lane.b32.xlu0 %v2221, 64
        %v3811 = vpop.permute.xlu0 %3810
        %3812 = vrot.lane.b32.xlu0 %v2222, 64
        %v3813 = vpop.permute.xlu0 %3812
        %3814 = vrot.lane.b32.xlu0 %v2231, 64
        %v3815 = vpop.permute.xlu0 %3814
        %3816 = vrot.lane.b32.xlu0 %v2232, 64
        %v3817 = vpop.permute.xlu0 %3816
        %3818 = vrot.lane.b32.xlu0 %v2241, 64
        %v3819 = vpop.permute.xlu0 %3818
        %3820 = vrot.lane.b32.xlu0 %v2242, 64
        %v3821 = vpop.permute.xlu0 %3820
        %3822 = vrot.lane.b32.xlu0 %v2201, 64
        %v3823 = vpop.permute.xlu0 %3822
        %3824 = vrot.lane.b32.xlu0 %v2202, 64
        %v3825 = vpop.permute.xlu0 %3824
        %3826 = vrot.lane.b32.xlu0 %v2223, 64
        %v3827 = vpop.permute.xlu0 %3826
        %3828 = vrot.lane.b32.xlu0 %v2224, 64
        %v3829 = vpop.permute.xlu0 %3828
        %3830 = vrot.lane.b32.xlu0 %v2233, 64
        %v3831 = vpop.permute.xlu0 %3830
        %3832 = vrot.lane.b32.xlu0 %v2234, 64
        %v3833 = vpop.permute.xlu0 %3832
        %3834 = vrot.lane.b32.xlu0 %v2243, 64
        %v3835 = vpop.permute.xlu0 %3834
        %3836 = vrot.lane.b32.xlu0 %v2244, 64
        %v3837 = vpop.permute.xlu0 %3836
        %3838 = vrot.lane.b32.xlu0 %v2203, 64
        %v3839 = vpop.permute.xlu0 %3838
        %3840 = vrot.lane.b32.xlu0 %v2204, 64
        %v3841 = vpop.permute.xlu0 %3840
        %3842 = vrot.lane.b32.xlu0 %v2225, 64
        %v3843 = vpop.permute.xlu0 %3842
        %3844 = vrot.lane.b32.xlu0 %v2226, 64
        %v3845 = vpop.permute.xlu0 %3844
        %3846 = vrot.lane.b32.xlu0 %v2235, 64
        %v3847 = vpop.permute.xlu0 %3846
        %3848 = vrot.lane.b32.xlu0 %v2236, 64
        %v3849 = vpop.permute.xlu0 %3848
        %3850 = vrot.lane.b32.xlu0 %v2245, 64
        %v3851 = vpop.permute.xlu0 %3850
        %3852 = vrot.lane.b32.xlu0 %v2246, 64
        %v3853 = vpop.permute.xlu0 %3852
        %3918 = vrot.lane.b32.xlu0 %v3596, 96
        %v3919 = vpop.permute.xlu0 %3918
        %3920 = vrot.lane.b32.xlu0 %v3597, 96
        %v3921 = vpop.permute.xlu0 %3920
        %3922 = vrot.lane.b32.xlu0 %v3614, 96
        %v3923 = vpop.permute.xlu0 %3922
        %3924 = vrot.lane.b32.xlu0 %v3615, 96
        %v3925 = vpop.permute.xlu0 %3924
        %3926 = vrot.lane.b32.xlu0 %v3598, 96
        %v3927 = vpop.permute.xlu0 %3926
        %3928 = vrot.lane.b32.xlu0 %v3599, 96
        %v3929 = vpop.permute.xlu0 %3928
        %3930 = vrot.lane.b32.xlu0 %v3616, 96
        %v3931 = vpop.permute.xlu0 %3930
        %3932 = vrot.lane.b32.xlu0 %v3617, 96
        %v3933 = vpop.permute.xlu0 %3932
        %3934 = vrot.lane.b32.xlu0 %v3600, 96
        %v3935 = vpop.permute.xlu0 %3934
        %3936 = vrot.lane.b32.xlu0 %v3601, 96
        %v3937 = vpop.permute.xlu0 %3936
        %3938 = vrot.lane.b32.xlu0 %v3618, 96
        %v3939 = vpop.permute.xlu0 %3938
        %3940 = vrot.lane.b32.xlu0 %v3619, 96
        %v3941 = vpop.permute.xlu0 %3940
        %3942 = vrot.lane.b32.xlu0 %v3602, 96
        %v3943 = vpop.permute.xlu0 %3942
        %3944 = vrot.lane.b32.xlu0 %v3603, 96
        %v3945 = vpop.permute.xlu0 %3944
        %3946 = vrot.lane.b32.xlu0 %v3620, 96
        %v3947 = vpop.permute.xlu0 %3946
        %3948 = vrot.lane.b32.xlu0 %v3621, 96
        %v3949 = vpop.permute.xlu0 %3948
        %3950 = vrot.lane.b32.xlu0 %v3604, 96
        %v3951 = vpop.permute.xlu0 %3950
        %3952 = vrot.lane.b32.xlu0 %v3605, 96
        %v3953 = vpop.permute.xlu0 %3952
        %3954 = vrot.lane.b32.xlu0 %v3622, 96
        %v3955 = vpop.permute.xlu0 %3954
        %3956 = vrot.lane.b32.xlu0 %v3623, 96
        %v3957 = vpop.permute.xlu0 %3956
        %3958 = vrot.lane.b32.xlu0 %v3606, 96
        %v3959 = vpop.permute.xlu0 %3958
        %3960 = vrot.lane.b32.xlu0 %v3607, 96
        %v3961 = vpop.permute.xlu0 %3960
        %3962 = vrot.lane.b32.xlu0 %v3624, 96
        %v3963 = vpop.permute.xlu0 %3962
        %3964 = vrot.lane.b32.xlu0 %v3625, 96
        %v3965 = vpop.permute.xlu0 %3964
        %3966 = vrot.lane.b32.xlu0 %v3608, 96
        %v3967 = vpop.permute.xlu0 %3966
        %3968 = vrot.lane.b32.xlu0 %v3609, 96
        %v3969 = vpop.permute.xlu0 %3968
        %3970 = vrot.lane.b32.xlu0 %v3626, 96
        %v3971 = vpop.permute.xlu0 %3970
        %3972 = vrot.lane.b32.xlu0 %v3627, 96
        %v3973 = vpop.permute.xlu0 %3972
        %3974 = vrot.lane.b32.xlu0 %v3610, 96
        %v3975 = vpop.permute.xlu0 %3974
        %3976 = vrot.lane.b32.xlu0 %v3611, 96
        %v3977 = vpop.permute.xlu0 %3976
        %3978 = vrot.lane.b32.xlu0 %v3628, 96
        %v3979 = vpop.permute.xlu0 %3978
        %3980 = vrot.lane.b32.xlu0 %v3629, 96
        %v3981 = vpop.permute.xlu0 %3980
        %v4014 = vsel %vm740, %v977, %v3663
        %v4015 = vsel %vm740, %v978, %v3665
        %v4016 = vsel %vm740, %v983, %v3667
        %v4017 = vsel %vm740, %v984, %v3669
        %v4018 = vsel %vm740, %v989, %v3671
        %v4019 = vsel %vm740, %v990, %v3673
        %v4020 = vsel %vm740, %v995, %v3675
        %v4021 = vsel %vm740, %v996, %v3677
        %v4022 = vsel %vm740, %v1001, %v3679
        %v4023 = vsel %vm740, %v1002, %v3681
        %v4024 = vsel %vm740, %v1007, %v3683
        %v4025 = vsel %vm740, %v1008, %v3685
        %v4026 = vsel %vm740, %v1013, %v3687
        %v4027 = vsel %vm740, %v1014, %v3689
        %v4028 = vsel %vm740, %v1019, %v3691
        %v4029 = vsel %vm740, %v1020, %v3693
        %v4030 = vsel %vm740, %v1019, %v3695
        %v4031 = vsel %vm740, %v1020, %v3697
        %v4032 = vsel %vm740, %v1013, %v3699
        %v4033 = vsel %vm740, %v1014, %v3701
        %v4034 = vsel %vm740, %v1007, %v3703
        %v4035 = vsel %vm740, %v1008, %v3705
        %v4036 = vsel %vm740, %v1001, %v3707
        %v4037 = vsel %vm740, %v1002, %v3709
        %v4038 = vsel %vm740, %v995, %v3711
        %v4039 = vsel %vm740, %v996, %v3713
        %v4040 = vsel %vm740, %v989, %v3715
        %v4041 = vsel %vm740, %v990, %v3717
        %v4042 = vsel %vm740, %v983, %v3719
        %v4043 = vsel %vm740, %v984, %v3721
        %v4044 = vsel %vm740, %v977, %v3723
        %v4045 = vsel %vm740, %v978, %v3725
        %v4046 = vsel %vm530, %v4014, %v3791
        %v4047 = vsel %vm530, %v4015, %v3793
        %v4048 = vsel %vm530, %v4016, %v3795
        %v4049 = vsel %vm530, %v4017, %v3797
        %v4050 = vsel %vm530, %v4018, %v3799
        %v4051 = vsel %vm530, %v4019, %v3801
        %v4052 = vsel %vm530, %v4020, %v3803
        %v4053 = vsel %vm530, %v4021, %v3805
        %v4054 = vsel %vm530, %v4022, %v3807
        %v4055 = vsel %vm530, %v4023, %v3809
        %v4056 = vsel %vm530, %v4024, %v3811
        %v4057 = vsel %vm530, %v4025, %v3813
        %v4058 = vsel %vm530, %v4026, %v3815
        %v4059 = vsel %vm530, %v4027, %v3817
        %v4060 = vsel %vm530, %v4028, %v3819
        %v4061 = vsel %vm530, %v4029, %v3821
        %v4062 = vsel %vm530, %v4030, %v3823
        %v4063 = vsel %vm530, %v4031, %v3825
        %v4064 = vsel %vm530, %v4032, %v3827
        %v4065 = vsel %vm530, %v4033, %v3829
        %v4066 = vsel %vm530, %v4034, %v3831
        %v4067 = vsel %vm530, %v4035, %v3833
        %v4068 = vsel %vm530, %v4036, %v3835
        %v4069 = vsel %vm530, %v4037, %v3837
        %v4070 = vsel %vm530, %v4038, %v3839
        %v4071 = vsel %vm530, %v4039, %v3841
        %v4072 = vsel %vm530, %v4040, %v3843
        %v4073 = vsel %vm530, %v4041, %v3845
        %v4074 = vsel %vm530, %v4042, %v3847
        %v4075 = vsel %vm530, %v4043, %v3849
        %v4076 = vsel %vm530, %v4044, %v3851
        %v4077 = vsel %vm530, %v4045, %v3853
        %vm4078 = vcmask 785408
        %v4079 = vsel %vm4078, %v4046, %v3919
        %v4080 = vsel %vm4078, %v4047, %v3921
        %v4081 = vsel %vm4078, %v4048, %v3923
        %v4082 = vsel %vm4078, %v4049, %v3925
        %v4083 = vsel %vm4078, %v4050, %v3927
        %v4084 = vsel %vm4078, %v4051, %v3929
        %v4085 = vsel %vm4078, %v4052, %v3931
        %v4086 = vsel %vm4078, %v4053, %v3933
        %v4087 = vsel %vm4078, %v4054, %v3935
        %v4088 = vsel %vm4078, %v4055, %v3937
        %v4089 = vsel %vm4078, %v4056, %v3939
        %v4090 = vsel %vm4078, %v4057, %v3941
        %v4091 = vsel %vm4078, %v4058, %v3943
        %v4092 = vsel %vm4078, %v4059, %v3945
        %v4093 = vsel %vm4078, %v4060, %v3947
        %v4094 = vsel %vm4078, %v4061, %v3949
        %v4095 = vsel %vm4078, %v4062, %v3951
        %v4096 = vsel %vm4078, %v4063, %v3953
        %v4097 = vsel %vm4078, %v4064, %v3955
        %v4098 = vsel %vm4078, %v4065, %v3957
        %v4099 = vsel %vm4078, %v4066, %v3959
        %v4100 = vsel %vm4078, %v4067, %v3961
        %v4101 = vsel %vm4078, %v4068, %v3963
        %v4102 = vsel %vm4078, %v4069, %v3965
        %v4103 = vsel %vm4078, %v4070, %v3967
        %v4104 = vsel %vm4078, %v4071, %v3969
        %v4105 = vsel %vm4078, %v4072, %v3971
        %v4106 = vsel %vm4078, %v4073, %v3973
        %v4107 = vsel %vm4078, %v4074, %v3975
        %v4108 = vsel %vm4078, %v4075, %v3977
        %v4109 = vsel %vm4078, %v4076, %v3979
        %v4110 = vsel %vm4078, %v4077, %v3981
        %4111 = vst [vmem:[%s379] sm:$0xff] %v4079
        %4112 = vst [vmem:[%s379 + $0x8] sm:$0xff] %v4080
        %4113 = vst [vmem:[%s379 + $0x10] sm:$0xff] %v4081
        %4114 = vst [vmem:[%s379 + $0x18] sm:$0xff] %v4082
        %4115 = vst [vmem:[%s379 + $0x20] sm:$0xff] %v4083
        %4116 = vst [vmem:[%s379 + $0x28] sm:$0xff] %v4084
        %4117 = vst [vmem:[%s379 + $0x30] sm:$0xff] %v4085
        %4118 = vst [vmem:[%s379 + $0x38] sm:$0xff] %v4086
        %4119 = vst [vmem:[%s379 + $0x40] sm:$0xff] %v4087
        %4120 = vst [vmem:[%s379 + $0x48] sm:$0xff] %v4088
        %4121 = vst [vmem:[%s379 + $0x50] sm:$0xff] %v4089
        %4122 = vst [vmem:[%s379 + $0x58] sm:$0xff] %v4090
        %4123 = vst [vmem:[%s379 + $0x60] sm:$0xff] %v4091
        %4124 = vst [vmem:[%s379 + $0x68] sm:$0xff] %v4092
        %4125 = vst [vmem:[%s379 + $0x70] sm:$0xff] %v4093
        %4126 = vst [vmem:[%s379 + $0x78] sm:$0xff] %v4094
        %4127 = vst [vmem:[%s379 + $0x80] sm:$0xff] %v4095
        %4128 = vst [vmem:[%s379 + $0x88] sm:$0xff] %v4096
        %4129 = vst [vmem:[%s379 + $0x90] sm:$0xff] %v4097
        %4130 = vst [vmem:[%s379 + $0x98] sm:$0xff] %v4098
        %4131 = vst [vmem:[%s379 + $0xa0] sm:$0xff] %v4099
        %4132 = vst [vmem:[%s379 + $0xa8] sm:$0xff] %v4100
        %4133 = vst [vmem:[%s379 + $0xb0] sm:$0xff] %v4101
        %4134 = vst [vmem:[%s379 + $0xb8] sm:$0xff] %v4102
        %4135 = vst [vmem:[%s379 + $0xc0] sm:$0xff] %v4103
        %4136 = vst [vmem:[%s379 + $0xc8] sm:$0xff] %v4104
        %4137 = vst [vmem:[%s379 + $0xd0] sm:$0xff] %v4105
        %4138 = vst [vmem:[%s379 + $0xd8] sm:$0xff] %v4106
        %4139 = vst [vmem:[%s379 + $0xe0] sm:$0xff] %v4107
        %4140 = vst [vmem:[%s379 + $0xe8] sm:$0xff] %v4108
        %4141 = vst [vmem:[%s379 + $0xf0] sm:$0xff] %v4109
        %4142 = vst [vmem:[%s379 + $0xf8] sm:$0xff] %v4110
        %s4143 = sand.u32 %s269, 1
        %s4144 = scalar_lea.sflag [#allocation3], %s4143
        %s4145 = sand.u32 %s269, 1
        %s4146 = smul.addr %s4145, 256
        %s4147 = scalar_lea.vmem [#allocation2], %s4146
        // Predicated region
        $region65: #{tpu_custom_call.1} parent=63 // pred_check
          %p4148 = pneg %p279
        $region66: #{tpu_custom_call.1} parent=63 // pred_check_branch
          %4150 = sbr.rel (%p4148) target = $region68
        $region67: #{tpu_custom_call.1} parent=63 // pred_region
          %s4152 = ssub.s32 4096, 4096
          %4153 = vsyncadd %s4144, %s4152
          %s4154 = smul.addr %s25, 32
          %s4155 = smul.addr %s4154, 128
          %s4156 = scalar_lea.hbm %s11, %s4155
          %s4157 = sshll.u32 %s4147, 4
          %s4158 = int_to_ptr.vmem [resolvable:$true] %s4157
          %4163 = dma.vmem_to_hbm [thread:$0]  %s4158, 4096, %s4156, %s4144, 128, 128, 8
        $region68: #{tpu_custom_call.1} parent=63 // pred_fallthru
          _
      $region64: #{tpu_custom_call.1} parent=5 // pred_fallthru
        _
      %p4164 = scmp.le.s32.totalorder 2, %s20
      // Predicated region
      $region69: #{tpu_custom_call.1} parent=5 // pred_check
        %p4165 = pneg %p4164
      $region70: #{tpu_custom_call.1} parent=5 // pred_check_branch
        %4167 = sbr.rel (%p4165) target = $region72
      $region71: #{tpu_custom_call.1} parent=5 // pred_region
        %s4168 = ssub.s32 %s20, 2
        // Predicated region
        $region73: #{tpu_custom_call.1} parent=71 // pred_check
          %p4169 = pneg %p285
        $region74: #{tpu_custom_call.1} parent=71 // pred_check_branch
          %4171 = sbr.rel (%p4169) target = $region76
        $region75: #{tpu_custom_call.1} parent=71 // pred_region
          %s4172 = sand.u32 %s270, 1
          %s4173 = scalar_lea.sflag [#allocation3], %s4172
          %s4174 = sand.u32 %s270, 1
          %s4175 = smul.addr %s4174, 256
          %s4176 = scalar_lea.vmem [#allocation2], %s4175
          %4177 = dma.done %s4173, 4096
        $region76: #{tpu_custom_call.1} parent=71 // pred_fallthru
          _
      $region72: #{tpu_custom_call.1} parent=5 // pred_fallthru
        _
    $region6: #{tpu_custom_call.1} parent=1 // loop_footer
      %s24 = sadd.s32 1, %s20
    $region7: #{tpu_custom_call.1} parent=1 // loop_footer_branch
      %19 = sbr.rel target = $region3
    $region8: #{tpu_custom_call.1} parent=1 // loop_exit
      _
    %4178 = vsyncpa [#allocation3], 1
    %s4179 = scalar_lea.sflag [#allocation3], 1
    %4180 = vsyncpa %s4179, 1

</llo_original>
